<compile_context>
chip_gen: v7x
topology: tpu7x:2x2x1
jax: 0.10.0
libtpu: 0.0.40
codegen_flags: <defaults>
</compile_context>

<pallas_src>
import jax
import jax.numpy as jnp
from jax import lax
from jax.experimental import pallas as pl
from jax.experimental.pallas import tpu as pltpu

# ---------------- configuration (small, consistent with the module) ----------------
BATCH        = 2
SRC_LEN      = 8      # encoder sequence length
MAX_LENGTH   = 8      # decoder steps
HIDDEN_DIM   = 32
EMBED_DIM    = 16
INPUT_VOCAB  = 20
OUTPUT_VOCAB = 24
NUM_LAYERS   = 1      # => dropout_rate forced to 0 (as in the module)
START_TOKEN  = 1
LOGIT_PAD    = 128    # lane-dense padded logits width (>= OUTPUT_VOCAB)

F32  = jnp.float32
BF16 = jnp.bfloat16


# ---------------- single fused kernel: encoder GRU + greedy attention decoder ----------------
def seq2seq_kernel(tok_ref,                      # (B, S)      int32 source tokens
                   enc_table_ref,                # (Vi, 3H)    bf16  enc_embed @ W_ih + b_ih
                   enc_whh_ref,                  # (H, 3H)     bf16
                   enc_bhh_ref,                  # (1, 3H)     f32
                   u_cat_ref,                    # (H, H+3H)   bf16  [U_attn | W_ic]
                   vv_ref,                       # (1, H)      f32   V_attn row
                   w_hcat_ref,                   # (H, H+3H)   bf16  [W_attn | W_hh]
                   bhh_ref,                      # (1, 3H)     f32
                   dec_table_ref,                # (128, 3H)   bf16  relu(dec_embed) @ W_ie + b_i (padded rows = 0)
                   wout_ref,                     # (H, 128)    bf16  output proj, lane-padded
                   bout_ref,                     # (1, 128)    f32
                   logits_ref,                   # out (B, T, 128) f32
                   attn_ref):                    # out (B, T, S)   f32
    B, S = tok_ref.shape
    H = HIDDEN_DIM

    # ================= encoder (Embedding + 1-layer GRU) =================
    tok = tok_ref[...]                                                    # (B, S) int32
    src_iota = lax.broadcasted_iota(jnp.int32, (B, S, INPUT_VOCAB), 2)
    onehot_src = jnp.where(tok[:, :, None] == src_iota, 1.0, 0.0).astype(BF16)   # (B, S, Vi)
    # Hoisted, fused embedding + input projection for every (t, b): one matmul.
    gx_all = jnp.dot(onehot_src.reshape(B * S, INPUT_VOCAB), enc_table_ref[...],
                     preferred_element_type=F32).reshape(B, S, 3 * H)     # (B, S, 3H)

    enc_whh = enc_whh_ref[...]                                            # bf16
    enc_bhh = jnp.broadcast_to(enc_bhh_ref[...], (B, 3 * H))              # hoisted broadcast

    h = jnp.zeros((B, H), F32)
    hs = []
    for t in range(S):                                                    # fully unrolled
        gx = gx_all[:, t, :]                                              # (B, 3H)
        gh = jnp.dot(h.astype(BF16), enc_whh, preferred_element_type=F32) + enc_bhh
        r = jax.nn.sigmoid(gx[:, :H] + gh[:, :H])
        z = jax.nn.sigmoid(gx[:, H:2 * H] + gh[:, H:2 * H])
        n = jnp.tanh(gx[:, 2 * H:] + r * gh[:, 2 * H:])
        h = (1.0 - z) * n + z * h
        hs.append(h)

    keys = jnp.stack(hs, axis=1)                                          # (B, S, H), VMEM-resident

    # ================= decoder (greedy Bahdanau-attention GRU) =================
    # Hoisted loop-invariant key projections: [U_attn(keys) | keys @ W_ic] in one matmul.
    kcat = jnp.dot(keys.reshape(B * S, H).astype(BF16), u_cat_ref[...],
                   preferred_element_type=F32)                            # (B*S, H+3H)
    kp = kcat[:, :H].reshape(B, S, H)                                     # U_attn(keys)
    kc = kcat[:, H:].reshape(B, S, 3 * H)                                 # keys @ W_ic (context proj, hoisted)

    vvb   = jnp.broadcast_to(vv_ref[...].reshape(1, 1, H), (B, S, H))     # hoisted broadcasts
    bhh   = jnp.broadcast_to(bhh_ref[...], (B, 3 * H))
    boutb = jnp.broadcast_to(bout_ref[...], (B, LOGIT_PAD))
    w_hcat = w_hcat_ref[...]
    wout = wout_ref[...]
    dec_table = dec_table_ref[...]
    lane = lax.broadcasted_iota(jnp.int32, (B, LOGIT_PAD), 1)
    valid = lane < OUTPUT_VOCAB

    # Start-token path: fused (embed -> relu -> input proj) table row, broadcast over batch.
    gx_e = jnp.broadcast_to(dec_table[START_TOKEN:START_TOKEN + 1, :], (B, 3 * H)).astype(F32)

    logit_steps, attn_steps = [], []
    for _ in range(MAX_LENGTH):                                           # fully unrolled greedy decode
        # ---- merged shared-h projection: [W_attn(h) | W_hh h] in one 128-lane matmul ----
        hq = jnp.dot(h.astype(BF16), w_hcat, preferred_element_type=F32)  # (B, H+3H)
        qp = hq[:, :H]
        gh = hq[:, H:] + bhh

        # ---- additive (Bahdanau) attention ----
        energy = jnp.tanh(qp[:, None, :] + kp)                            # (B, S, H)
        score = jnp.sum(energy * vvb, axis=-1)                            # (B, S)
        m = jnp.max(score, axis=-1, keepdims=True)
        e = jnp.exp(score - m)
        w = e / jnp.sum(e, axis=-1, keepdims=True)                        # exact softmax (f32)

        # ---- GRU cell; context projection comes from the hoisted kc (no per-step matmul) ----
        gx = gx_e + jnp.sum(w[:, :, None] * kc, axis=1)                   # (B, 3H)
        r = jax.nn.sigmoid(gx[:, :H] + gh[:, :H])
        z = jax.nn.sigmoid(gx[:, H:2 * H] + gh[:, H:2 * H])
        n = jnp.tanh(gx[:, 2 * H:] + r * gh[:, 2 * H:])
        h = (1.0 - z) * n + z * h                                         # (B, H)

        # ---- output projection into a lane-dense 128-wide padded slab (dropout = identity) ----
        logits = jnp.dot(h.astype(BF16), wout, preferred_element_type=F32) + boutb   # (B, 128)
        logit_steps.append(logits)
        attn_steps.append(w)

        # ---- greedy argmax feedback (restricted to real vocab lanes) + table lookup ----
        masked = jnp.where(valid, logits, -1e30)
        mlog = jnp.max(masked, axis=-1, keepdims=True)
        idx = jnp.min(jnp.where(masked == mlog, lane, LOGIT_PAD), axis=-1, keepdims=True)   # (B, 1)
        onehot = jnp.where(lane == idx, 1.0, 0.0).astype(BF16)            # (B, 128)
        gx_e = jnp.dot(onehot, dec_table, preferred_element_type=F32)     # fused embed+relu+proj

    # Single lane-dense stores in consumer layout (B, T, ...).
    logits_ref[...] = jnp.stack(logit_steps, axis=1)                      # (B, T, 128)
    attn_ref[...] = jnp.stack(attn_steps, axis=1)                         # (B, T, S)


def run_seq2seq(input_tokens, p):
    B, S = input_tokens.shape
    args = (input_tokens, p["enc_table"], p["enc_whh"], p["enc_bhh"],
            p["u_cat"], p["vv"], p["w_hcat"], p["bhh"],
            p["dec_table"], p["wout_pad"], p["bout_pad"])
    vmem = lambda: pl.BlockSpec(memory_space=pltpu.MemorySpace.VMEM)
    return pl.pallas_call(
        seq2seq_kernel,
        out_shape=(jax.ShapeDtypeStruct((B, MAX_LENGTH, LOGIT_PAD), F32),
                   jax.ShapeDtypeStruct((B, MAX_LENGTH, S), F32)),
        in_specs=[vmem() for _ in args],
        out_specs=(vmem(), vmem()),
    )(*args)


# ---------------- parameter initialization (deterministic, synthetic) ----------------
def init_params(key):
    def nrm(k, shape, scale=0.1):
        return (scale * jax.random.normal(k, shape)).astype(F32)

    ks = jax.random.split(key, 16)
    H, E, Vi, Vo = HIDDEN_DIM, EMBED_DIM, INPUT_VOCAB, OUTPUT_VOCAB

    # ---- raw (PyTorch-equivalent) parameters; GRU gates packed [r|z|n], weights (in, out) ----
    enc_embed = nrm(ks[0], (Vi, E))
    enc_wih   = nrm(ks[1], (E, 3 * H))
    enc_whh   = nrm(ks[2], (H, 3 * H))
    enc_bih   = nrm(ks[3], (1, 3 * H))
    enc_bhh   = nrm(ks[4], (1, 3 * H))
    dec_embed = nrm(ks[5], (Vo, E))
    wq        = nrm(ks[6], (H, H))          # W_attn
    uk        = nrm(ks[7], (H, H))          # U_attn
    vv        = nrm(ks[8], (1, H))          # V_attn (row)
    wih_e     = nrm(ks[9], (E, 3 * H))      # decoder GRU input weights (embed part)
    wih_c     = nrm(ks[10], (H, 3 * H))     # decoder GRU input weights (context part)
    whh       = nrm(ks[11], (H, 3 * H))
    bih       = nrm(ks[12], (1, 3 * H))
    bhh       = nrm(ks[13], (1, 3 * H))
    wout      = nrm(ks[14], (H, Vo))
    bout      = nrm(ks[15], (1, Vo))

    # ---- one-time (init-only) exact algebraic fusions consumed by the kernel ----
    # Encoder: embedding + input projection + input bias folded into one table.
    enc_table = (enc_embed @ enc_wih + enc_bih).astype(BF16)                          # (Vi, 3H)
    # Decoder: embedding -> ReLU -> input projection (+ input bias) folded into one table,
    # padded to LOGIT_PAD rows (padded rows never selected by the masked argmax).
    dec_tab = jax.nn.relu(dec_embed) @ wih_e + bih                                    # (Vo, 3H)
    dec_table = jnp.zeros((LOGIT_PAD, 3 * H), F32).at[:Vo].set(dec_tab).astype(BF16)  # (128, 3H)
    # Merged shared-h projection [W_attn | W_hh] -> one lane-dense (H, 128) matmul per step.
    w_hcat = jnp.concatenate([wq, whh], axis=1).astype(BF16)                          # (H, 4H)
    # Merged loop-invariant key projections [U_attn | W_ic].
    u_cat = jnp.concatenate([uk, wih_c], axis=1).astype(BF16)                         # (H, 4H)
    # Lane-dense padded output projection (padded columns are zero; argmax masks them).
    wout_pad = jnp.zeros((H, LOGIT_PAD), F32).at[:, :Vo].set(wout).astype(BF16)
    bout_pad = jnp.zeros((1, LOGIT_PAD), F32).at[:, :Vo].set(bout)

    return {
        "enc_table": enc_table,
        "enc_whh":   enc_whh.astype(BF16),
        "enc_bhh":   enc_bhh,
        "u_cat":     u_cat,
        "vv":        vv,
        "w_hcat":    w_hcat,
        "bhh":       bhh,
        "dec_table": dec_table,
        "wout_pad":  wout_pad,
        "bout_pad":  bout_pad,
    }


# ---------------- full forward pass (Attention_Network.forward, greedy decode) ----------------
@jax.jit
def attention_network_forward(params, input_tokens):
    """input_tokens: (B, SRC_LEN) int32 source token indices.
    Returns (decoder_outputs (B, MAX_LENGTH, OUTPUT_VOCAB),
             attention_weights (B, MAX_LENGTH, SRC_LEN))."""
    logits_pad, attn = run_seq2seq(input_tokens, params)
    return logits_pad[:, :, :OUTPUT_VOCAB], attn


# ---------------- main ----------------
if __name__ == "__main__":
    key = jax.random.PRNGKey(0)
    pkey, dkey = jax.random.split(key)
    params = init_params(pkey)

    input_tokens = jax.random.randint(dkey, (BATCH, SRC_LEN), 0, INPUT_VOCAB, dtype=jnp.int32)

    dec_out, attn = attention_network_forward(params, input_tokens)
    dec_out = jax.block_until_ready(dec_out)
    attn = jax.block_until_ready(attn)

    assert dec_out.shape == (BATCH, MAX_LENGTH, OUTPUT_VOCAB)
    assert attn.shape == (BATCH, MAX_LENGTH, SRC_LEN)
    assert bool(jnp.all(jnp.isfinite(dec_out)))
    # attention weights must be a valid softmax over src_len (exact f32 division)
    assert jnp.allclose(jnp.sum(attn, axis=-1), 1.0, atol=1e-4)

    print("KERNEL_OK")
</pallas_src>

<mosaic_0001>
module attributes {stable_mosaic.version = 11 : i64} {
  func.func @seq2seq_kernel(%arg0: memref<2x8xi32, #tpu.memory_space<vmem>>, %arg1: memref<20x96xbf16, #tpu.memory_space<vmem>>, %arg2: memref<32x96xbf16, #tpu.memory_space<vmem>>, %arg3: memref<1x96xf32, #tpu.memory_space<vmem>>, %arg4: memref<32x128xbf16, #tpu.memory_space<vmem>>, %arg5: memref<1x32xf32, #tpu.memory_space<vmem>>, %arg6: memref<32x128xbf16, #tpu.memory_space<vmem>>, %arg7: memref<1x96xf32, #tpu.memory_space<vmem>>, %arg8: memref<128x96xbf16, #tpu.memory_space<vmem>>, %arg9: memref<32x128xbf16, #tpu.memory_space<vmem>>, %arg10: memref<1x128xf32, #tpu.memory_space<vmem>>, %arg11: memref<2x8x128xf32, #tpu.memory_space<vmem>>, %arg12: memref<2x8x8xf32, #tpu.memory_space<vmem>>) attributes {dimension_semantics = [], scalar_prefetch = 0 : i64, scratch_operands = 0 : i64, tpu.core_type = #tpu.core_type<tc>} {
    %c0 = arith.constant 0 : index
    %c0_0 = arith.constant 0 : index
    %0 = vector.load %arg0[%c0, %c0_0] : memref<2x8xi32, #tpu.memory_space<vmem>>, vector<2x8xi32>
    %1 = tpu.iota {dimensions = array<i32: 2>} : vector<2x8x20xi32>
    %2 = vector.shape_cast %0 : vector<2x8xi32> to vector<2x8x1xi32>
    %3 = vector.broadcast %2 : vector<2x8x1xi32> to vector<2x8x20xi32>
    %4 = arith.cmpi eq, %3, %1 : vector<2x8x20xi32>
    %cst = arith.constant 1.000000e+00 : f32
    %cst_1 = arith.constant 0.000000e+00 : f32
    %5 = vector.broadcast %cst : f32 to vector<2x8x20xf32>
    %6 = vector.broadcast %cst_1 : f32 to vector<2x8x20xf32>
    %7 = arith.select %4, %5, %6 : vector<2x8x20xi1>, vector<2x8x20xf32>
    %8 = arith.truncf %7 : vector<2x8x20xf32> to vector<2x8x20xbf16>
    %9 = vector.shape_cast %8 : vector<2x8x20xbf16> to vector<16x20xbf16>
    %c0_2 = arith.constant 0 : index
    %c0_3 = arith.constant 0 : index
    %10 = vector.load %arg1[%c0_2, %c0_3] : memref<20x96xbf16, #tpu.memory_space<vmem>>, vector<20x96xbf16>
    %cst_4 = arith.constant dense<0.000000e+00> : vector<16x96xf32>
    %11 = tpu.matmul %9, %10, %cst_4 {dimension_numbers = #tpu.dot_dimension_numbers<[1], [0], [0], [1], [0, 0, 1, 1], [], []>} : vector<16x20xbf16>, vector<20x96xbf16>, vector<16x96xf32> -> vector<16x96xf32>
    %12 = vector.shape_cast %11 : vector<16x96xf32> to vector<2x8x96xf32>
    %c0_5 = arith.constant 0 : index
    %c0_6 = arith.constant 0 : index
    %13 = vector.load %arg2[%c0_5, %c0_6] : memref<32x96xbf16, #tpu.memory_space<vmem>>, vector<32x96xbf16>
    %c0_7 = arith.constant 0 : index
    %c0_8 = arith.constant 0 : index
    %14 = vector.load %arg3[%c0_7, %c0_8] : memref<1x96xf32, #tpu.memory_space<vmem>>, vector<1x96xf32>
    %15 = vector.shape_cast %14 : vector<1x96xf32> to vector<1x96xf32>
    %16 = vector.broadcast %15 : vector<1x96xf32> to vector<2x96xf32>
    %cst_9 = arith.constant 0.000000e+00 : f32
    %17 = vector.broadcast %cst_9 : f32 to vector<2x32xf32>
    %18 = vector.extract_strided_slice %12 {offsets = [0, 0, 0], sizes = [2, 1, 96], strides = [1, 1, 1]} : vector<2x8x96xf32> to vector<2x1x96xf32>
    %19 = vector.shape_cast %18 : vector<2x1x96xf32> to vector<2x96xf32>
    %20 = arith.truncf %17 : vector<2x32xf32> to vector<2x32xbf16>
    %cst_10 = arith.constant dense<0.000000e+00> : vector<2x96xf32>
    %21 = tpu.matmul %20, %13, %cst_10 {dimension_numbers = #tpu.dot_dimension_numbers<[1], [0], [0], [1], [0, 0, 1, 1], [], []>} : vector<2x32xbf16>, vector<32x96xbf16>, vector<2x96xf32> -> vector<2x96xf32>
    %22 = arith.addf %21, %16 : vector<2x96xf32>
    %23 = vector.extract_strided_slice %19 {offsets = [0, 0], sizes = [2, 32], strides = [1, 1]} : vector<2x96xf32> to vector<2x32xf32>
    %24 = vector.extract_strided_slice %22 {offsets = [0, 0], sizes = [2, 32], strides = [1, 1]} : vector<2x96xf32> to vector<2x32xf32>
    %25 = arith.addf %23, %24 : vector<2x32xf32>
    %26 = arith.negf %25 : vector<2x32xf32>
    %27 = math.exp %26 : vector<2x32xf32>
    %cst_11 = arith.constant 1.000000e+00 : f32
    %28 = vector.broadcast %cst_11 : f32 to vector<2x32xf32>
    %29 = arith.addf %28, %27 : vector<2x32xf32>
    %30 = arith.divf %28, %29 : vector<2x32xf32>
    %31 = vector.extract_strided_slice %19 {offsets = [0, 32], sizes = [2, 32], strides = [1, 1]} : vector<2x96xf32> to vector<2x32xf32>
    %32 = vector.extract_strided_slice %22 {offsets = [0, 32], sizes = [2, 32], strides = [1, 1]} : vector<2x96xf32> to vector<2x32xf32>
    %33 = arith.addf %31, %32 : vector<2x32xf32>
    %34 = arith.negf %33 : vector<2x32xf32>
    %35 = math.exp %34 : vector<2x32xf32>
    %cst_12 = arith.constant 1.000000e+00 : f32
    %36 = vector.broadcast %cst_12 : f32 to vector<2x32xf32>
    %37 = arith.addf %36, %35 : vector<2x32xf32>
    %38 = arith.divf %36, %37 : vector<2x32xf32>
    %39 = vector.extract_strided_slice %19 {offsets = [0, 64], sizes = [2, 32], strides = [1, 1]} : vector<2x96xf32> to vector<2x32xf32>
    %40 = vector.extract_strided_slice %22 {offsets = [0, 64], sizes = [2, 32], strides = [1, 1]} : vector<2x96xf32> to vector<2x32xf32>
    %41 = arith.mulf %30, %40 : vector<2x32xf32>
    %42 = arith.addf %39, %41 : vector<2x32xf32>
    %43 = math.tanh %42 : vector<2x32xf32>
    %cst_13 = arith.constant 1.000000e+00 : f32
    %44 = vector.broadcast %cst_13 : f32 to vector<2x32xf32>
    %45 = arith.subf %44, %38 : vector<2x32xf32>
    %46 = arith.mulf %45, %43 : vector<2x32xf32>
    %47 = arith.mulf %38, %17 : vector<2x32xf32>
    %48 = arith.addf %46, %47 : vector<2x32xf32>
    %49 = vector.extract_strided_slice %12 {offsets = [0, 1, 0], sizes = [2, 1, 96], strides = [1, 1, 1]} : vector<2x8x96xf32> to vector<2x1x96xf32>
    %50 = vector.shape_cast %49 : vector<2x1x96xf32> to vector<2x96xf32>
    %51 = arith.truncf %48 : vector<2x32xf32> to vector<2x32xbf16>
    %cst_14 = arith.constant dense<0.000000e+00> : vector<2x96xf32>
    %52 = tpu.matmul %51, %13, %cst_14 {dimension_numbers = #tpu.dot_dimension_numbers<[1], [0], [0], [1], [0, 0, 1, 1], [], []>} : vector<2x32xbf16>, vector<32x96xbf16>, vector<2x96xf32> -> vector<2x96xf32>
    %53 = arith.addf %52, %16 : vector<2x96xf32>
    %54 = vector.extract_strided_slice %50 {offsets = [0, 0], sizes = [2, 32], strides = [1, 1]} : vector<2x96xf32> to vector<2x32xf32>
    %55 = vector.extract_strided_slice %53 {offsets = [0, 0], sizes = [2, 32], strides = [1, 1]} : vector<2x96xf32> to vector<2x32xf32>
    %56 = arith.addf %54, %55 : vector<2x32xf32>
    %57 = arith.negf %56 : vector<2x32xf32>
    %58 = math.exp %57 : vector<2x32xf32>
    %cst_15 = arith.constant 1.000000e+00 : f32
    %59 = vector.broadcast %cst_15 : f32 to vector<2x32xf32>
    %60 = arith.addf %59, %58 : vector<2x32xf32>
    %61 = arith.divf %59, %60 : vector<2x32xf32>
    %62 = vector.extract_strided_slice %50 {offsets = [0, 32], sizes = [2, 32], strides = [1, 1]} : vector<2x96xf32> to vector<2x32xf32>
    %63 = vector.extract_strided_slice %53 {offsets = [0, 32], sizes = [2, 32], strides = [1, 1]} : vector<2x96xf32> to vector<2x32xf32>
    %64 = arith.addf %62, %63 : vector<2x32xf32>
    %65 = arith.negf %64 : vector<2x32xf32>
    %66 = math.exp %65 : vector<2x32xf32>
    %cst_16 = arith.constant 1.000000e+00 : f32
    %67 = vector.broadcast %cst_16 : f32 to vector<2x32xf32>
    %68 = arith.addf %67, %66 : vector<2x32xf32>
    %69 = arith.divf %67, %68 : vector<2x32xf32>
    %70 = vector.extract_strided_slice %50 {offsets = [0, 64], sizes = [2, 32], strides = [1, 1]} : vector<2x96xf32> to vector<2x32xf32>
    %71 = vector.extract_strided_slice %53 {offsets = [0, 64], sizes = [2, 32], strides = [1, 1]} : vector<2x96xf32> to vector<2x32xf32>
    %72 = arith.mulf %61, %71 : vector<2x32xf32>
    %73 = arith.addf %70, %72 : vector<2x32xf32>
    %74 = math.tanh %73 : vector<2x32xf32>
    %cst_17 = arith.constant 1.000000e+00 : f32
    %75 = vector.broadcast %cst_17 : f32 to vector<2x32xf32>
    %76 = arith.subf %75, %69 : vector<2x32xf32>
    %77 = arith.mulf %76, %74 : vector<2x32xf32>
    %78 = arith.mulf %69, %48 : vector<2x32xf32>
    %79 = arith.addf %77, %78 : vector<2x32xf32>
    %80 = vector.extract_strided_slice %12 {offsets = [0, 2, 0], sizes = [2, 1, 96], strides = [1, 1, 1]} : vector<2x8x96xf32> to vector<2x1x96xf32>
    %81 = vector.shape_cast %80 : vector<2x1x96xf32> to vector<2x96xf32>
    %82 = arith.truncf %79 : vector<2x32xf32> to vector<2x32xbf16>
    %cst_18 = arith.constant dense<0.000000e+00> : vector<2x96xf32>
    %83 = tpu.matmul %82, %13, %cst_18 {dimension_numbers = #tpu.dot_dimension_numbers<[1], [0], [0], [1], [0, 0, 1, 1], [], []>} : vector<2x32xbf16>, vector<32x96xbf16>, vector<2x96xf32> -> vector<2x96xf32>
    %84 = arith.addf %83, %16 : vector<2x96xf32>
    %85 = vector.extract_strided_slice %81 {offsets = [0, 0], sizes = [2, 32], strides = [1, 1]} : vector<2x96xf32> to vector<2x32xf32>
    %86 = vector.extract_strided_slice %84 {offsets = [0, 0], sizes = [2, 32], strides = [1, 1]} : vector<2x96xf32> to vector<2x32xf32>
    %87 = arith.addf %85, %86 : vector<2x32xf32>
    %88 = arith.negf %87 : vector<2x32xf32>
    %89 = math.exp %88 : vector<2x32xf32>
    %cst_19 = arith.constant 1.000000e+00 : f32
    %90 = vector.broadcast %cst_19 : f32 to vector<2x32xf32>
    %91 = arith.addf %90, %89 : vector<2x32xf32>
    %92 = arith.divf %90, %91 : vector<2x32xf32>
    %93 = vector.extract_strided_slice %81 {offsets = [0, 32], sizes = [2, 32], strides = [1, 1]} : vector<2x96xf32> to vector<2x32xf32>
    %94 = vector.extract_strided_slice %84 {offsets = [0, 32], sizes = [2, 32], strides = [1, 1]} : vector<2x96xf32> to vector<2x32xf32>
    %95 = arith.addf %93, %94 : vector<2x32xf32>
    %96 = arith.negf %95 : vector<2x32xf32>
    %97 = math.exp %96 : vector<2x32xf32>
    %cst_20 = arith.constant 1.000000e+00 : f32
    %98 = vector.broadcast %cst_20 : f32 to vector<2x32xf32>
    %99 = arith.addf %98, %97 : vector<2x32xf32>
    %100 = arith.divf %98, %99 : vector<2x32xf32>
    %101 = vector.extract_strided_slice %81 {offsets = [0, 64], sizes = [2, 32], strides = [1, 1]} : vector<2x96xf32> to vector<2x32xf32>
    %102 = vector.extract_strided_slice %84 {offsets = [0, 64], sizes = [2, 32], strides = [1, 1]} : vector<2x96xf32> to vector<2x32xf32>
    %103 = arith.mulf %92, %102 : vector<2x32xf32>
    %104 = arith.addf %101, %103 : vector<2x32xf32>
    %105 = math.tanh %104 : vector<2x32xf32>
    %cst_21 = arith.constant 1.000000e+00 : f32
    %106 = vector.broadcast %cst_21 : f32 to vector<2x32xf32>
    %107 = arith.subf %106, %100 : vector<2x32xf32>
    %108 = arith.mulf %107, %105 : vector<2x32xf32>
    %109 = arith.mulf %100, %79 : vector<2x32xf32>
    %110 = arith.addf %108, %109 : vector<2x32xf32>
    %111 = vector.extract_strided_slice %12 {offsets = [0, 3, 0], sizes = [2, 1, 96], strides = [1, 1, 1]} : vector<2x8x96xf32> to vector<2x1x96xf32>
    %112 = vector.shape_cast %111 : vector<2x1x96xf32> to vector<2x96xf32>
    %113 = arith.truncf %110 : vector<2x32xf32> to vector<2x32xbf16>
    %cst_22 = arith.constant dense<0.000000e+00> : vector<2x96xf32>
    %114 = tpu.matmul %113, %13, %cst_22 {dimension_numbers = #tpu.dot_dimension_numbers<[1], [0], [0], [1], [0, 0, 1, 1], [], []>} : vector<2x32xbf16>, vector<32x96xbf16>, vector<2x96xf32> -> vector<2x96xf32>
    %115 = arith.addf %114, %16 : vector<2x96xf32>
    %116 = vector.extract_strided_slice %112 {offsets = [0, 0], sizes = [2, 32], strides = [1, 1]} : vector<2x96xf32> to vector<2x32xf32>
    %117 = vector.extract_strided_slice %115 {offsets = [0, 0], sizes = [2, 32], strides = [1, 1]} : vector<2x96xf32> to vector<2x32xf32>
    %118 = arith.addf %116, %117 : vector<2x32xf32>
    %119 = arith.negf %118 : vector<2x32xf32>
    %120 = math.exp %119 : vector<2x32xf32>
    %cst_23 = arith.constant 1.000000e+00 : f32
    %121 = vector.broadcast %cst_23 : f32 to vector<2x32xf32>
    %122 = arith.addf %121, %120 : vector<2x32xf32>
    %123 = arith.divf %121, %122 : vector<2x32xf32>
    %124 = vector.extract_strided_slice %112 {offsets = [0, 32], sizes = [2, 32], strides = [1, 1]} : vector<2x96xf32> to vector<2x32xf32>
    %125 = vector.extract_strided_slice %115 {offsets = [0, 32], sizes = [2, 32], strides = [1, 1]} : vector<2x96xf32> to vector<2x32xf32>
    %126 = arith.addf %124, %125 : vector<2x32xf32>
    %127 = arith.negf %126 : vector<2x32xf32>
    %128 = math.exp %127 : vector<2x32xf32>
    %cst_24 = arith.constant 1.000000e+00 : f32
    %129 = vector.broadcast %cst_24 : f32 to vector<2x32xf32>
    %130 = arith.addf %129, %128 : vector<2x32xf32>
    %131 = arith.divf %129, %130 : vector<2x32xf32>
    %132 = vector.extract_strided_slice %112 {offsets = [0, 64], sizes = [2, 32], strides = [1, 1]} : vector<2x96xf32> to vector<2x32xf32>
    %133 = vector.extract_strided_slice %115 {offsets = [0, 64], sizes = [2, 32], strides = [1, 1]} : vector<2x96xf32> to vector<2x32xf32>
    %134 = arith.mulf %123, %133 : vector<2x32xf32>
    %135 = arith.addf %132, %134 : vector<2x32xf32>
    %136 = math.tanh %135 : vector<2x32xf32>
    %cst_25 = arith.constant 1.000000e+00 : f32
    %137 = vector.broadcast %cst_25 : f32 to vector<2x32xf32>
    %138 = arith.subf %137, %131 : vector<2x32xf32>
    %139 = arith.mulf %138, %136 : vector<2x32xf32>
    %140 = arith.mulf %131, %110 : vector<2x32xf32>
    %141 = arith.addf %139, %140 : vector<2x32xf32>
    %142 = vector.extract_strided_slice %12 {offsets = [0, 4, 0], sizes = [2, 1, 96], strides = [1, 1, 1]} : vector<2x8x96xf32> to vector<2x1x96xf32>
    %143 = vector.shape_cast %142 : vector<2x1x96xf32> to vector<2x96xf32>
    %144 = arith.truncf %141 : vector<2x32xf32> to vector<2x32xbf16>
    %cst_26 = arith.constant dense<0.000000e+00> : vector<2x96xf32>
    %145 = tpu.matmul %144, %13, %cst_26 {dimension_numbers = #tpu.dot_dimension_numbers<[1], [0], [0], [1], [0, 0, 1, 1], [], []>} : vector<2x32xbf16>, vector<32x96xbf16>, vector<2x96xf32> -> vector<2x96xf32>
    %146 = arith.addf %145, %16 : vector<2x96xf32>
    %147 = vector.extract_strided_slice %143 {offsets = [0, 0], sizes = [2, 32], strides = [1, 1]} : vector<2x96xf32> to vector<2x32xf32>
    %148 = vector.extract_strided_slice %146 {offsets = [0, 0], sizes = [2, 32], strides = [1, 1]} : vector<2x96xf32> to vector<2x32xf32>
    %149 = arith.addf %147, %148 : vector<2x32xf32>
    %150 = arith.negf %149 : vector<2x32xf32>
    %151 = math.exp %150 : vector<2x32xf32>
    %cst_27 = arith.constant 1.000000e+00 : f32
    %152 = vector.broadcast %cst_27 : f32 to vector<2x32xf32>
    %153 = arith.addf %152, %151 : vector<2x32xf32>
    %154 = arith.divf %152, %153 : vector<2x32xf32>
    %155 = vector.extract_strided_slice %143 {offsets = [0, 32], sizes = [2, 32], strides = [1, 1]} : vector<2x96xf32> to vector<2x32xf32>
    %156 = vector.extract_strided_slice %146 {offsets = [0, 32], sizes = [2, 32], strides = [1, 1]} : vector<2x96xf32> to vector<2x32xf32>
    %157 = arith.addf %155, %156 : vector<2x32xf32>
    %158 = arith.negf %157 : vector<2x32xf32>
    %159 = math.exp %158 : vector<2x32xf32>
    %cst_28 = arith.constant 1.000000e+00 : f32
    %160 = vector.broadcast %cst_28 : f32 to vector<2x32xf32>
    %161 = arith.addf %160, %159 : vector<2x32xf32>
    %162 = arith.divf %160, %161 : vector<2x32xf32>
    %163 = vector.extract_strided_slice %143 {offsets = [0, 64], sizes = [2, 32], strides = [1, 1]} : vector<2x96xf32> to vector<2x32xf32>
    %164 = vector.extract_strided_slice %146 {offsets = [0, 64], sizes = [2, 32], strides = [1, 1]} : vector<2x96xf32> to vector<2x32xf32>
    %165 = arith.mulf %154, %164 : vector<2x32xf32>
    %166 = arith.addf %163, %165 : vector<2x32xf32>
    %167 = math.tanh %166 : vector<2x32xf32>
    %cst_29 = arith.constant 1.000000e+00 : f32
    %168 = vector.broadcast %cst_29 : f32 to vector<2x32xf32>
    %169 = arith.subf %168, %162 : vector<2x32xf32>
    %170 = arith.mulf %169, %167 : vector<2x32xf32>
    %171 = arith.mulf %162, %141 : vector<2x32xf32>
    %172 = arith.addf %170, %171 : vector<2x32xf32>
    %173 = vector.extract_strided_slice %12 {offsets = [0, 5, 0], sizes = [2, 1, 96], strides = [1, 1, 1]} : vector<2x8x96xf32> to vector<2x1x96xf32>
    %174 = vector.shape_cast %173 : vector<2x1x96xf32> to vector<2x96xf32>
    %175 = arith.truncf %172 : vector<2x32xf32> to vector<2x32xbf16>
    %cst_30 = arith.constant dense<0.000000e+00> : vector<2x96xf32>
    %176 = tpu.matmul %175, %13, %cst_30 {dimension_numbers = #tpu.dot_dimension_numbers<[1], [0], [0], [1], [0, 0, 1, 1], [], []>} : vector<2x32xbf16>, vector<32x96xbf16>, vector<2x96xf32> -> vector<2x96xf32>
    %177 = arith.addf %176, %16 : vector<2x96xf32>
    %178 = vector.extract_strided_slice %174 {offsets = [0, 0], sizes = [2, 32], strides = [1, 1]} : vector<2x96xf32> to vector<2x32xf32>
    %179 = vector.extract_strided_slice %177 {offsets = [0, 0], sizes = [2, 32], strides = [1, 1]} : vector<2x96xf32> to vector<2x32xf32>
    %180 = arith.addf %178, %179 : vector<2x32xf32>
    %181 = arith.negf %180 : vector<2x32xf32>
    %182 = math.exp %181 : vector<2x32xf32>
    %cst_31 = arith.constant 1.000000e+00 : f32
    %183 = vector.broadcast %cst_31 : f32 to vector<2x32xf32>
    %184 = arith.addf %183, %182 : vector<2x32xf32>
    %185 = arith.divf %183, %184 : vector<2x32xf32>
    %186 = vector.extract_strided_slice %174 {offsets = [0, 32], sizes = [2, 32], strides = [1, 1]} : vector<2x96xf32> to vector<2x32xf32>
    %187 = vector.extract_strided_slice %177 {offsets = [0, 32], sizes = [2, 32], strides = [1, 1]} : vector<2x96xf32> to vector<2x32xf32>
    %188 = arith.addf %186, %187 : vector<2x32xf32>
    %189 = arith.negf %188 : vector<2x32xf32>
    %190 = math.exp %189 : vector<2x32xf32>
    %cst_32 = arith.constant 1.000000e+00 : f32
    %191 = vector.broadcast %cst_32 : f32 to vector<2x32xf32>
    %192 = arith.addf %191, %190 : vector<2x32xf32>
    %193 = arith.divf %191, %192 : vector<2x32xf32>
    %194 = vector.extract_strided_slice %174 {offsets = [0, 64], sizes = [2, 32], strides = [1, 1]} : vector<2x96xf32> to vector<2x32xf32>
    %195 = vector.extract_strided_slice %177 {offsets = [0, 64], sizes = [2, 32], strides = [1, 1]} : vector<2x96xf32> to vector<2x32xf32>
    %196 = arith.mulf %185, %195 : vector<2x32xf32>
    %197 = arith.addf %194, %196 : vector<2x32xf32>
    %198 = math.tanh %197 : vector<2x32xf32>
    %cst_33 = arith.constant 1.000000e+00 : f32
    %199 = vector.broadcast %cst_33 : f32 to vector<2x32xf32>
    %200 = arith.subf %199, %193 : vector<2x32xf32>
    %201 = arith.mulf %200, %198 : vector<2x32xf32>
    %202 = arith.mulf %193, %172 : vector<2x32xf32>
    %203 = arith.addf %201, %202 : vector<2x32xf32>
    %204 = vector.extract_strided_slice %12 {offsets = [0, 6, 0], sizes = [2, 1, 96], strides = [1, 1, 1]} : vector<2x8x96xf32> to vector<2x1x96xf32>
    %205 = vector.shape_cast %204 : vector<2x1x96xf32> to vector<2x96xf32>
    %206 = arith.truncf %203 : vector<2x32xf32> to vector<2x32xbf16>
    %cst_34 = arith.constant dense<0.000000e+00> : vector<2x96xf32>
    %207 = tpu.matmul %206, %13, %cst_34 {dimension_numbers = #tpu.dot_dimension_numbers<[1], [0], [0], [1], [0, 0, 1, 1], [], []>} : vector<2x32xbf16>, vector<32x96xbf16>, vector<2x96xf32> -> vector<2x96xf32>
    %208 = arith.addf %207, %16 : vector<2x96xf32>
    %209 = vector.extract_strided_slice %205 {offsets = [0, 0], sizes = [2, 32], strides = [1, 1]} : vector<2x96xf32> to vector<2x32xf32>
    %210 = vector.extract_strided_slice %208 {offsets = [0, 0], sizes = [2, 32], strides = [1, 1]} : vector<2x96xf32> to vector<2x32xf32>
    %211 = arith.addf %209, %210 : vector<2x32xf32>
    %212 = arith.negf %211 : vector<2x32xf32>
    %213 = math.exp %212 : vector<2x32xf32>
    %cst_35 = arith.constant 1.000000e+00 : f32
    %214 = vector.broadcast %cst_35 : f32 to vector<2x32xf32>
    %215 = arith.addf %214, %213 : vector<2x32xf32>
    %216 = arith.divf %214, %215 : vector<2x32xf32>
    %217 = vector.extract_strided_slice %205 {offsets = [0, 32], sizes = [2, 32], strides = [1, 1]} : vector<2x96xf32> to vector<2x32xf32>
    %218 = vector.extract_strided_slice %208 {offsets = [0, 32], sizes = [2, 32], strides = [1, 1]} : vector<2x96xf32> to vector<2x32xf32>
    %219 = arith.addf %217, %218 : vector<2x32xf32>
    %220 = arith.negf %219 : vector<2x32xf32>
    %221 = math.exp %220 : vector<2x32xf32>
    %cst_36 = arith.constant 1.000000e+00 : f32
    %222 = vector.broadcast %cst_36 : f32 to vector<2x32xf32>
    %223 = arith.addf %222, %221 : vector<2x32xf32>
    %224 = arith.divf %222, %223 : vector<2x32xf32>
    %225 = vector.extract_strided_slice %205 {offsets = [0, 64], sizes = [2, 32], strides = [1, 1]} : vector<2x96xf32> to vector<2x32xf32>
    %226 = vector.extract_strided_slice %208 {offsets = [0, 64], sizes = [2, 32], strides = [1, 1]} : vector<2x96xf32> to vector<2x32xf32>
    %227 = arith.mulf %216, %226 : vector<2x32xf32>
    %228 = arith.addf %225, %227 : vector<2x32xf32>
    %229 = math.tanh %228 : vector<2x32xf32>
    %cst_37 = arith.constant 1.000000e+00 : f32
    %230 = vector.broadcast %cst_37 : f32 to vector<2x32xf32>
    %231 = arith.subf %230, %224 : vector<2x32xf32>
    %232 = arith.mulf %231, %229 : vector<2x32xf32>
    %233 = arith.mulf %224, %203 : vector<2x32xf32>
    %234 = arith.addf %232, %233 : vector<2x32xf32>
    %235 = vector.extract_strided_slice %12 {offsets = [0, 7, 0], sizes = [2, 1, 96], strides = [1, 1, 1]} : vector<2x8x96xf32> to vector<2x1x96xf32>
    %236 = vector.shape_cast %235 : vector<2x1x96xf32> to vector<2x96xf32>
    %237 = arith.truncf %234 : vector<2x32xf32> to vector<2x32xbf16>
    %cst_38 = arith.constant dense<0.000000e+00> : vector<2x96xf32>
    %238 = tpu.matmul %237, %13, %cst_38 {dimension_numbers = #tpu.dot_dimension_numbers<[1], [0], [0], [1], [0, 0, 1, 1], [], []>} : vector<2x32xbf16>, vector<32x96xbf16>, vector<2x96xf32> -> vector<2x96xf32>
    %239 = arith.addf %238, %16 : vector<2x96xf32>
    %240 = vector.extract_strided_slice %236 {offsets = [0, 0], sizes = [2, 32], strides = [1, 1]} : vector<2x96xf32> to vector<2x32xf32>
    %241 = vector.extract_strided_slice %239 {offsets = [0, 0], sizes = [2, 32], strides = [1, 1]} : vector<2x96xf32> to vector<2x32xf32>
    %242 = arith.addf %240, %241 : vector<2x32xf32>
    %243 = arith.negf %242 : vector<2x32xf32>
    %244 = math.exp %243 : vector<2x32xf32>
    %cst_39 = arith.constant 1.000000e+00 : f32
    %245 = vector.broadcast %cst_39 : f32 to vector<2x32xf32>
    %246 = arith.addf %245, %244 : vector<2x32xf32>
    %247 = arith.divf %245, %246 : vector<2x32xf32>
    %248 = vector.extract_strided_slice %236 {offsets = [0, 32], sizes = [2, 32], strides = [1, 1]} : vector<2x96xf32> to vector<2x32xf32>
    %249 = vector.extract_strided_slice %239 {offsets = [0, 32], sizes = [2, 32], strides = [1, 1]} : vector<2x96xf32> to vector<2x32xf32>
    %250 = arith.addf %248, %249 : vector<2x32xf32>
    %251 = arith.negf %250 : vector<2x32xf32>
    %252 = math.exp %251 : vector<2x32xf32>
    %cst_40 = arith.constant 1.000000e+00 : f32
    %253 = vector.broadcast %cst_40 : f32 to vector<2x32xf32>
    %254 = arith.addf %253, %252 : vector<2x32xf32>
    %255 = arith.divf %253, %254 : vector<2x32xf32>
    %256 = vector.extract_strided_slice %236 {offsets = [0, 64], sizes = [2, 32], strides = [1, 1]} : vector<2x96xf32> to vector<2x32xf32>
    %257 = vector.extract_strided_slice %239 {offsets = [0, 64], sizes = [2, 32], strides = [1, 1]} : vector<2x96xf32> to vector<2x32xf32>
    %258 = arith.mulf %247, %257 : vector<2x32xf32>
    %259 = arith.addf %256, %258 : vector<2x32xf32>
    %260 = math.tanh %259 : vector<2x32xf32>
    %cst_41 = arith.constant 1.000000e+00 : f32
    %261 = vector.broadcast %cst_41 : f32 to vector<2x32xf32>
    %262 = arith.subf %261, %255 : vector<2x32xf32>
    %263 = arith.mulf %262, %260 : vector<2x32xf32>
    %264 = arith.mulf %255, %234 : vector<2x32xf32>
    %265 = arith.addf %263, %264 : vector<2x32xf32>
    %266 = vector.shape_cast %48 : vector<2x32xf32> to vector<2x1x32xf32>
    %267 = vector.shape_cast %79 : vector<2x32xf32> to vector<2x1x32xf32>
    %268 = vector.shape_cast %110 : vector<2x32xf32> to vector<2x1x32xf32>
    %269 = vector.shape_cast %141 : vector<2x32xf32> to vector<2x1x32xf32>
    %270 = vector.shape_cast %172 : vector<2x32xf32> to vector<2x1x32xf32>
    %271 = vector.shape_cast %203 : vector<2x32xf32> to vector<2x1x32xf32>
    %272 = vector.shape_cast %234 : vector<2x32xf32> to vector<2x1x32xf32>
    %273 = vector.shape_cast %265 : vector<2x32xf32> to vector<2x1x32xf32>
    %274 = tpu.concatenate %266, %267, %268, %269, %270, %271, %272, %273 in 1 : vector<2x1x32xf32>, vector<2x1x32xf32>, vector<2x1x32xf32>, vector<2x1x32xf32>, vector<2x1x32xf32>, vector<2x1x32xf32>, vector<2x1x32xf32>, vector<2x1x32xf32> -> vector<2x8x32xf32>
    %275 = vector.shape_cast %274 : vector<2x8x32xf32> to vector<16x32xf32>
    %276 = arith.truncf %275 : vector<16x32xf32> to vector<16x32xbf16>
    %c0_42 = arith.constant 0 : index
    %c0_43 = arith.constant 0 : index
    %277 = vector.load %arg4[%c0_42, %c0_43] : memref<32x128xbf16, #tpu.memory_space<vmem>>, vector<32x128xbf16>
    %cst_44 = arith.constant dense<0.000000e+00> : vector<16x128xf32>
    %278 = tpu.matmul %276, %277, %cst_44 {dimension_numbers = #tpu.dot_dimension_numbers<[1], [0], [0], [1], [0, 0, 1, 1], [], []>} : vector<16x32xbf16>, vector<32x128xbf16>, vector<16x128xf32> -> vector<16x128xf32>
    %279 = vector.extract_strided_slice %278 {offsets = [0, 0], sizes = [16, 32], strides = [1, 1]} : vector<16x128xf32> to vector<16x32xf32>
    %280 = vector.shape_cast %279 : vector<16x32xf32> to vector<2x8x32xf32>
    %281 = vector.extract_strided_slice %278 {offsets = [0, 32], sizes = [16, 96], strides = [1, 1]} : vector<16x128xf32> to vector<16x96xf32>
    %282 = vector.shape_cast %281 : vector<16x96xf32> to vector<2x8x96xf32>
    %c0_45 = arith.constant 0 : index
    %c0_46 = arith.constant 0 : index
    %283 = vector.load %arg5[%c0_45, %c0_46] : memref<1x32xf32, #tpu.memory_space<vmem>>, vector<1x32xf32>
    %284 = vector.shape_cast %283 : vector<1x32xf32> to vector<1x1x32xf32>
    %285 = vector.shape_cast %284 : vector<1x1x32xf32> to vector<1x1x32xf32>
    %286 = vector.broadcast %285 : vector<1x1x32xf32> to vector<2x8x32xf32>
    %c0_47 = arith.constant 0 : index
    %c0_48 = arith.constant 0 : index
    %287 = vector.load %arg7[%c0_47, %c0_48] : memref<1x96xf32, #tpu.memory_space<vmem>>, vector<1x96xf32>
    %288 = vector.shape_cast %287 : vector<1x96xf32> to vector<1x96xf32>
    %289 = vector.broadcast %288 : vector<1x96xf32> to vector<2x96xf32>
    %c0_49 = arith.constant 0 : index
    %c0_50 = arith.constant 0 : index
    %290 = vector.load %arg10[%c0_49, %c0_50] : memref<1x128xf32, #tpu.memory_space<vmem>>, vector<1x128xf32>
    %291 = vector.shape_cast %290 : vector<1x128xf32> to vector<1x128xf32>
    %292 = vector.broadcast %291 : vector<1x128xf32> to vector<2x128xf32>
    %c0_51 = arith.constant 0 : index
    %c0_52 = arith.constant 0 : index
    %293 = vector.load %arg6[%c0_51, %c0_52] : memref<32x128xbf16, #tpu.memory_space<vmem>>, vector<32x128xbf16>
    %c0_53 = arith.constant 0 : index
    %c0_54 = arith.constant 0 : index
    %294 = vector.load %arg9[%c0_53, %c0_54] : memref<32x128xbf16, #tpu.memory_space<vmem>>, vector<32x128xbf16>
    %c0_55 = arith.constant 0 : index
    %c0_56 = arith.constant 0 : index
    %295 = vector.load %arg8[%c0_55, %c0_56] : memref<128x96xbf16, #tpu.memory_space<vmem>>, vector<128x96xbf16>
    %296 = tpu.iota {dimensions = array<i32: 1>} : vector<2x128xi32>
    %c24_i32 = arith.constant 24 : i32
    %297 = vector.broadcast %c24_i32 : i32 to vector<2x128xi32>
    %298 = arith.cmpi slt, %296, %297 : vector<2x128xi32>
    %299 = vector.extract_strided_slice %295 {offsets = [1, 0], sizes = [1, 96], strides = [1, 1]} : vector<128x96xbf16> to vector<1x96xbf16>
    %300 = vector.shape_cast %299 : vector<1x96xbf16> to vector<1x96xbf16>
    %301 = vector.broadcast %300 : vector<1x96xbf16> to vector<2x96xbf16>
    %302 = arith.extf %301 : vector<2x96xbf16> to vector<2x96xf32>
    %303 = arith.truncf %265 : vector<2x32xf32> to vector<2x32xbf16>
    %cst_57 = arith.constant dense<0.000000e+00> : vector<2x128xf32>
    %304 = tpu.matmul %303, %293, %cst_57 {dimension_numbers = #tpu.dot_dimension_numbers<[1], [0], [0], [1], [0, 0, 1, 1], [], []>} : vector<2x32xbf16>, vector<32x128xbf16>, vector<2x128xf32> -> vector<2x128xf32>
    %305 = vector.extract_strided_slice %304 {offsets = [0, 0], sizes = [2, 32], strides = [1, 1]} : vector<2x128xf32> to vector<2x32xf32>
    %306 = vector.extract_strided_slice %304 {offsets = [0, 32], sizes = [2, 96], strides = [1, 1]} : vector<2x128xf32> to vector<2x96xf32>
    %307 = arith.addf %306, %289 : vector<2x96xf32>
    %308 = vector.shape_cast %305 : vector<2x32xf32> to vector<2x1x32xf32>
    %309 = vector.broadcast %308 : vector<2x1x32xf32> to vector<2x8x32xf32>
    %310 = arith.addf %309, %280 : vector<2x8x32xf32>
    %311 = math.tanh %310 : vector<2x8x32xf32>
    %312 = arith.mulf %311, %286 : vector<2x8x32xf32>
    %cst_58 = arith.constant dense<0.000000e+00> : vector<2x8xf32>
    %313 = vector.multi_reduction <add>, %312, %cst_58 [2] : vector<2x8x32xf32> to vector<2x8xf32>
    %cst_59 = arith.constant dense<0xFF800000> : vector<2xf32>
    %314 = vector.multi_reduction <maximumf>, %313, %cst_59 [1] : vector<2x8xf32> to vector<2xf32>
    %315 = vector.shape_cast %314 : vector<2xf32> to vector<2x1xf32>
    %316 = vector.broadcast %315 : vector<2x1xf32> to vector<2x8xf32>
    %317 = arith.subf %313, %316 : vector<2x8xf32>
    %318 = math.exp %317 : vector<2x8xf32>
    %cst_60 = arith.constant dense<0.000000e+00> : vector<2xf32>
    %319 = vector.multi_reduction <add>, %318, %cst_60 [1] : vector<2x8xf32> to vector<2xf32>
    %320 = vector.shape_cast %319 : vector<2xf32> to vector<2x1xf32>
    %321 = vector.broadcast %320 : vector<2x1xf32> to vector<2x8xf32>
    %322 = arith.divf %318, %321 : vector<2x8xf32>
    %323 = vector.shape_cast %322 : vector<2x8xf32> to vector<2x8x1xf32>
    %324 = vector.broadcast %323 : vector<2x8x1xf32> to vector<2x8x96xf32>
    %325 = arith.mulf %324, %282 : vector<2x8x96xf32>
    %cst_61 = arith.constant dense<0.000000e+00> : vector<2x96xf32>
    %326 = vector.multi_reduction <add>, %325, %cst_61 [1] : vector<2x8x96xf32> to vector<2x96xf32>
    %327 = arith.addf %302, %326 : vector<2x96xf32>
    %328 = vector.extract_strided_slice %327 {offsets = [0, 0], sizes = [2, 32], strides = [1, 1]} : vector<2x96xf32> to vector<2x32xf32>
    %329 = vector.extract_strided_slice %307 {offsets = [0, 0], sizes = [2, 32], strides = [1, 1]} : vector<2x96xf32> to vector<2x32xf32>
    %330 = arith.addf %328, %329 : vector<2x32xf32>
    %331 = arith.negf %330 : vector<2x32xf32>
    %332 = math.exp %331 : vector<2x32xf32>
    %cst_62 = arith.constant 1.000000e+00 : f32
    %333 = vector.broadcast %cst_62 : f32 to vector<2x32xf32>
    %334 = arith.addf %333, %332 : vector<2x32xf32>
    %335 = arith.divf %333, %334 : vector<2x32xf32>
    %336 = vector.extract_strided_slice %327 {offsets = [0, 32], sizes = [2, 32], strides = [1, 1]} : vector<2x96xf32> to vector<2x32xf32>
    %337 = vector.extract_strided_slice %307 {offsets = [0, 32], sizes = [2, 32], strides = [1, 1]} : vector<2x96xf32> to vector<2x32xf32>
    %338 = arith.addf %336, %337 : vector<2x32xf32>
    %339 = arith.negf %338 : vector<2x32xf32>
    %340 = math.exp %339 : vector<2x32xf32>
    %cst_63 = arith.constant 1.000000e+00 : f32
    %341 = vector.broadcast %cst_63 : f32 to vector<2x32xf32>
    %342 = arith.addf %341, %340 : vector<2x32xf32>
    %343 = arith.divf %341, %342 : vector<2x32xf32>
    %344 = vector.extract_strided_slice %327 {offsets = [0, 64], sizes = [2, 32], strides = [1, 1]} : vector<2x96xf32> to vector<2x32xf32>
    %345 = vector.extract_strided_slice %307 {offsets = [0, 64], sizes = [2, 32], strides = [1, 1]} : vector<2x96xf32> to vector<2x32xf32>
    %346 = arith.mulf %335, %345 : vector<2x32xf32>
    %347 = arith.addf %344, %346 : vector<2x32xf32>
    %348 = math.tanh %347 : vector<2x32xf32>
    %cst_64 = arith.constant 1.000000e+00 : f32
    %349 = vector.broadcast %cst_64 : f32 to vector<2x32xf32>
    %350 = arith.subf %349, %343 : vector<2x32xf32>
    %351 = arith.mulf %350, %348 : vector<2x32xf32>
    %352 = arith.mulf %343, %265 : vector<2x32xf32>
    %353 = arith.addf %351, %352 : vector<2x32xf32>
    %354 = arith.truncf %353 : vector<2x32xf32> to vector<2x32xbf16>
    %cst_65 = arith.constant dense<0.000000e+00> : vector<2x128xf32>
    %355 = tpu.matmul %354, %294, %cst_65 {dimension_numbers = #tpu.dot_dimension_numbers<[1], [0], [0], [1], [0, 0, 1, 1], [], []>} : vector<2x32xbf16>, vector<32x128xbf16>, vector<2x128xf32> -> vector<2x128xf32>
    %356 = arith.addf %355, %292 : vector<2x128xf32>
    %cst_66 = arith.constant -1.000000e+30 : f32
    %357 = vector.broadcast %cst_66 : f32 to vector<2x128xf32>
    %358 = arith.select %298, %356, %357 : vector<2x128xi1>, vector<2x128xf32>
    %cst_67 = arith.constant dense<0xFF800000> : vector<2xf32>
    %359 = vector.multi_reduction <maximumf>, %358, %cst_67 [1] : vector<2x128xf32> to vector<2xf32>
    %360 = vector.shape_cast %359 : vector<2xf32> to vector<2x1xf32>
    %361 = vector.broadcast %360 : vector<2x1xf32> to vector<2x128xf32>
    %362 = arith.cmpf oeq, %358, %361 : vector<2x128xf32>
    %c128_i32 = arith.constant 128 : i32
    %363 = vector.broadcast %c128_i32 : i32 to vector<2x128xi32>
    %364 = arith.select %362, %296, %363 : vector<2x128xi1>, vector<2x128xi32>
    %cst_68 = arith.constant dense<2147483647> : vector<2xi32>
    %365 = vector.multi_reduction <minsi>, %364, %cst_68 [1] : vector<2x128xi32> to vector<2xi32>
    %366 = vector.shape_cast %365 : vector<2xi32> to vector<2x1xi32>
    %367 = vector.broadcast %366 : vector<2x1xi32> to vector<2x128xi32>
    %368 = arith.cmpi eq, %296, %367 : vector<2x128xi32>
    %cst_69 = arith.constant 1.000000e+00 : f32
    %cst_70 = arith.constant 0.000000e+00 : f32
    %369 = vector.broadcast %cst_69 : f32 to vector<2x128xf32>
    %370 = vector.broadcast %cst_70 : f32 to vector<2x128xf32>
    %371 = arith.select %368, %369, %370 : vector<2x128xi1>, vector<2x128xf32>
    %372 = arith.truncf %371 : vector<2x128xf32> to vector<2x128xbf16>
    %cst_71 = arith.constant dense<0.000000e+00> : vector<2x96xf32>
    %373 = tpu.matmul %372, %295, %cst_71 {dimension_numbers = #tpu.dot_dimension_numbers<[1], [0], [0], [1], [0, 0, 1, 1], [], []>} : vector<2x128xbf16>, vector<128x96xbf16>, vector<2x96xf32> -> vector<2x96xf32>
    %374 = arith.truncf %353 : vector<2x32xf32> to vector<2x32xbf16>
    %cst_72 = arith.constant dense<0.000000e+00> : vector<2x128xf32>
    %375 = tpu.matmul %374, %293, %cst_72 {dimension_numbers = #tpu.dot_dimension_numbers<[1], [0], [0], [1], [0, 0, 1, 1], [], []>} : vector<2x32xbf16>, vector<32x128xbf16>, vector<2x128xf32> -> vector<2x128xf32>
    %376 = vector.extract_strided_slice %375 {offsets = [0, 0], sizes = [2, 32], strides = [1, 1]} : vector<2x128xf32> to vector<2x32xf32>
    %377 = vector.extract_strided_slice %375 {offsets = [0, 32], sizes = [2, 96], strides = [1, 1]} : vector<2x128xf32> to vector<2x96xf32>
    %378 = arith.addf %377, %289 : vector<2x96xf32>
    %379 = vector.shape_cast %376 : vector<2x32xf32> to vector<2x1x32xf32>
    %380 = vector.broadcast %379 : vector<2x1x32xf32> to vector<2x8x32xf32>
    %381 = arith.addf %380, %280 : vector<2x8x32xf32>
    %382 = math.tanh %381 : vector<2x8x32xf32>
    %383 = arith.mulf %382, %286 : vector<2x8x32xf32>
    %cst_73 = arith.constant dense<0.000000e+00> : vector<2x8xf32>
    %384 = vector.multi_reduction <add>, %383, %cst_73 [2] : vector<2x8x32xf32> to vector<2x8xf32>
    %cst_74 = arith.constant dense<0xFF800000> : vector<2xf32>
    %385 = vector.multi_reduction <maximumf>, %384, %cst_74 [1] : vector<2x8xf32> to vector<2xf32>
    %386 = vector.shape_cast %385 : vector<2xf32> to vector<2x1xf32>
    %387 = vector.broadcast %386 : vector<2x1xf32> to vector<2x8xf32>
    %388 = arith.subf %384, %387 : vector<2x8xf32>
    %389 = math.exp %388 : vector<2x8xf32>
    %cst_75 = arith.constant dense<0.000000e+00> : vector<2xf32>
    %390 = vector.multi_reduction <add>, %389, %cst_75 [1] : vector<2x8xf32> to vector<2xf32>
    %391 = vector.shape_cast %390 : vector<2xf32> to vector<2x1xf32>
    %392 = vector.broadcast %391 : vector<2x1xf32> to vector<2x8xf32>
    %393 = arith.divf %389, %392 : vector<2x8xf32>
    %394 = vector.shape_cast %393 : vector<2x8xf32> to vector<2x8x1xf32>
    %395 = vector.broadcast %394 : vector<2x8x1xf32> to vector<2x8x96xf32>
    %396 = arith.mulf %395, %282 : vector<2x8x96xf32>
    %cst_76 = arith.constant dense<0.000000e+00> : vector<2x96xf32>
    %397 = vector.multi_reduction <add>, %396, %cst_76 [1] : vector<2x8x96xf32> to vector<2x96xf32>
    %398 = arith.addf %373, %397 : vector<2x96xf32>
    %399 = vector.extract_strided_slice %398 {offsets = [0, 0], sizes = [2, 32], strides = [1, 1]} : vector<2x96xf32> to vector<2x32xf32>
    %400 = vector.extract_strided_slice %378 {offsets = [0, 0], sizes = [2, 32], strides = [1, 1]} : vector<2x96xf32> to vector<2x32xf32>
    %401 = arith.addf %399, %400 : vector<2x32xf32>
    %402 = arith.negf %401 : vector<2x32xf32>
    %403 = math.exp %402 : vector<2x32xf32>
    %cst_77 = arith.constant 1.000000e+00 : f32
    %404 = vector.broadcast %cst_77 : f32 to vector<2x32xf32>
    %405 = arith.addf %404, %403 : vector<2x32xf32>
    %406 = arith.divf %404, %405 : vector<2x32xf32>
    %407 = vector.extract_strided_slice %398 {offsets = [0, 32], sizes = [2, 32], strides = [1, 1]} : vector<2x96xf32> to vector<2x32xf32>
    %408 = vector.extract_strided_slice %378 {offsets = [0, 32], sizes = [2, 32], strides = [1, 1]} : vector<2x96xf32> to vector<2x32xf32>
    %409 = arith.addf %407, %408 : vector<2x32xf32>
    %410 = arith.negf %409 : vector<2x32xf32>
    %411 = math.exp %410 : vector<2x32xf32>
    %cst_78 = arith.constant 1.000000e+00 : f32
    %412 = vector.broadcast %cst_78 : f32 to vector<2x32xf32>
    %413 = arith.addf %412, %411 : vector<2x32xf32>
    %414 = arith.divf %412, %413 : vector<2x32xf32>
    %415 = vector.extract_strided_slice %398 {offsets = [0, 64], sizes = [2, 32], strides = [1, 1]} : vector<2x96xf32> to vector<2x32xf32>
    %416 = vector.extract_strided_slice %378 {offsets = [0, 64], sizes = [2, 32], strides = [1, 1]} : vector<2x96xf32> to vector<2x32xf32>
    %417 = arith.mulf %406, %416 : vector<2x32xf32>
    %418 = arith.addf %415, %417 : vector<2x32xf32>
    %419 = math.tanh %418 : vector<2x32xf32>
    %cst_79 = arith.constant 1.000000e+00 : f32
    %420 = vector.broadcast %cst_79 : f32 to vector<2x32xf32>
    %421 = arith.subf %420, %414 : vector<2x32xf32>
    %422 = arith.mulf %421, %419 : vector<2x32xf32>
    %423 = arith.mulf %414, %353 : vector<2x32xf32>
    %424 = arith.addf %422, %423 : vector<2x32xf32>
    %425 = arith.truncf %424 : vector<2x32xf32> to vector<2x32xbf16>
    %cst_80 = arith.constant dense<0.000000e+00> : vector<2x128xf32>
    %426 = tpu.matmul %425, %294, %cst_80 {dimension_numbers = #tpu.dot_dimension_numbers<[1], [0], [0], [1], [0, 0, 1, 1], [], []>} : vector<2x32xbf16>, vector<32x128xbf16>, vector<2x128xf32> -> vector<2x128xf32>
    %427 = arith.addf %426, %292 : vector<2x128xf32>
    %cst_81 = arith.constant -1.000000e+30 : f32
    %428 = vector.broadcast %cst_81 : f32 to vector<2x128xf32>
    %429 = arith.select %298, %427, %428 : vector<2x128xi1>, vector<2x128xf32>
    %cst_82 = arith.constant dense<0xFF800000> : vector<2xf32>
    %430 = vector.multi_reduction <maximumf>, %429, %cst_82 [1] : vector<2x128xf32> to vector<2xf32>
    %431 = vector.shape_cast %430 : vector<2xf32> to vector<2x1xf32>
    %432 = vector.broadcast %431 : vector<2x1xf32> to vector<2x128xf32>
    %433 = arith.cmpf oeq, %429, %432 : vector<2x128xf32>
    %c128_i32_83 = arith.constant 128 : i32
    %434 = vector.broadcast %c128_i32_83 : i32 to vector<2x128xi32>
    %435 = arith.select %433, %296, %434 : vector<2x128xi1>, vector<2x128xi32>
    %cst_84 = arith.constant dense<2147483647> : vector<2xi32>
    %436 = vector.multi_reduction <minsi>, %435, %cst_84 [1] : vector<2x128xi32> to vector<2xi32>
    %437 = vector.shape_cast %436 : vector<2xi32> to vector<2x1xi32>
    %438 = vector.broadcast %437 : vector<2x1xi32> to vector<2x128xi32>
    %439 = arith.cmpi eq, %296, %438 : vector<2x128xi32>
    %cst_85 = arith.constant 1.000000e+00 : f32
    %cst_86 = arith.constant 0.000000e+00 : f32
    %440 = vector.broadcast %cst_85 : f32 to vector<2x128xf32>
    %441 = vector.broadcast %cst_86 : f32 to vector<2x128xf32>
    %442 = arith.select %439, %440, %441 : vector<2x128xi1>, vector<2x128xf32>
    %443 = arith.truncf %442 : vector<2x128xf32> to vector<2x128xbf16>
    %cst_87 = arith.constant dense<0.000000e+00> : vector<2x96xf32>
    %444 = tpu.matmul %443, %295, %cst_87 {dimension_numbers = #tpu.dot_dimension_numbers<[1], [0], [0], [1], [0, 0, 1, 1], [], []>} : vector<2x128xbf16>, vector<128x96xbf16>, vector<2x96xf32> -> vector<2x96xf32>
    %445 = arith.truncf %424 : vector<2x32xf32> to vector<2x32xbf16>
    %cst_88 = arith.constant dense<0.000000e+00> : vector<2x128xf32>
    %446 = tpu.matmul %445, %293, %cst_88 {dimension_numbers = #tpu.dot_dimension_numbers<[1], [0], [0], [1], [0, 0, 1, 1], [], []>} : vector<2x32xbf16>, vector<32x128xbf16>, vector<2x128xf32> -> vector<2x128xf32>
    %447 = vector.extract_strided_slice %446 {offsets = [0, 0], sizes = [2, 32], strides = [1, 1]} : vector<2x128xf32> to vector<2x32xf32>
    %448 = vector.extract_strided_slice %446 {offsets = [0, 32], sizes = [2, 96], strides = [1, 1]} : vector<2x128xf32> to vector<2x96xf32>
    %449 = arith.addf %448, %289 : vector<2x96xf32>
    %450 = vector.shape_cast %447 : vector<2x32xf32> to vector<2x1x32xf32>
    %451 = vector.broadcast %450 : vector<2x1x32xf32> to vector<2x8x32xf32>
    %452 = arith.addf %451, %280 : vector<2x8x32xf32>
    %453 = math.tanh %452 : vector<2x8x32xf32>
    %454 = arith.mulf %453, %286 : vector<2x8x32xf32>
    %cst_89 = arith.constant dense<0.000000e+00> : vector<2x8xf32>
    %455 = vector.multi_reduction <add>, %454, %cst_89 [2] : vector<2x8x32xf32> to vector<2x8xf32>
    %cst_90 = arith.constant dense<0xFF800000> : vector<2xf32>
    %456 = vector.multi_reduction <maximumf>, %455, %cst_90 [1] : vector<2x8xf32> to vector<2xf32>
    %457 = vector.shape_cast %456 : vector<2xf32> to vector<2x1xf32>
    %458 = vector.broadcast %457 : vector<2x1xf32> to vector<2x8xf32>
    %459 = arith.subf %455, %458 : vector<2x8xf32>
    %460 = math.exp %459 : vector<2x8xf32>
    %cst_91 = arith.constant dense<0.000000e+00> : vector<2xf32>
    %461 = vector.multi_reduction <add>, %460, %cst_91 [1] : vector<2x8xf32> to vector<2xf32>
    %462 = vector.shape_cast %461 : vector<2xf32> to vector<2x1xf32>
    %463 = vector.broadcast %462 : vector<2x1xf32> to vector<2x8xf32>
    %464 = arith.divf %460, %463 : vector<2x8xf32>
    %465 = vector.shape_cast %464 : vector<2x8xf32> to vector<2x8x1xf32>
    %466 = vector.broadcast %465 : vector<2x8x1xf32> to vector<2x8x96xf32>
    %467 = arith.mulf %466, %282 : vector<2x8x96xf32>
    %cst_92 = arith.constant dense<0.000000e+00> : vector<2x96xf32>
    %468 = vector.multi_reduction <add>, %467, %cst_92 [1] : vector<2x8x96xf32> to vector<2x96xf32>
    %469 = arith.addf %444, %468 : vector<2x96xf32>
    %470 = vector.extract_strided_slice %469 {offsets = [0, 0], sizes = [2, 32], strides = [1, 1]} : vector<2x96xf32> to vector<2x32xf32>
    %471 = vector.extract_strided_slice %449 {offsets = [0, 0], sizes = [2, 32], strides = [1, 1]} : vector<2x96xf32> to vector<2x32xf32>
    %472 = arith.addf %470, %471 : vector<2x32xf32>
    %473 = arith.negf %472 : vector<2x32xf32>
    %474 = math.exp %473 : vector<2x32xf32>
    %cst_93 = arith.constant 1.000000e+00 : f32
    %475 = vector.broadcast %cst_93 : f32 to vector<2x32xf32>
    %476 = arith.addf %475, %474 : vector<2x32xf32>
    %477 = arith.divf %475, %476 : vector<2x32xf32>
    %478 = vector.extract_strided_slice %469 {offsets = [0, 32], sizes = [2, 32], strides = [1, 1]} : vector<2x96xf32> to vector<2x32xf32>
    %479 = vector.extract_strided_slice %449 {offsets = [0, 32], sizes = [2, 32], strides = [1, 1]} : vector<2x96xf32> to vector<2x32xf32>
    %480 = arith.addf %478, %479 : vector<2x32xf32>
    %481 = arith.negf %480 : vector<2x32xf32>
    %482 = math.exp %481 : vector<2x32xf32>
    %cst_94 = arith.constant 1.000000e+00 : f32
    %483 = vector.broadcast %cst_94 : f32 to vector<2x32xf32>
    %484 = arith.addf %483, %482 : vector<2x32xf32>
    %485 = arith.divf %483, %484 : vector<2x32xf32>
    %486 = vector.extract_strided_slice %469 {offsets = [0, 64], sizes = [2, 32], strides = [1, 1]} : vector<2x96xf32> to vector<2x32xf32>
    %487 = vector.extract_strided_slice %449 {offsets = [0, 64], sizes = [2, 32], strides = [1, 1]} : vector<2x96xf32> to vector<2x32xf32>
    %488 = arith.mulf %477, %487 : vector<2x32xf32>
    %489 = arith.addf %486, %488 : vector<2x32xf32>
    %490 = math.tanh %489 : vector<2x32xf32>
    %cst_95 = arith.constant 1.000000e+00 : f32
    %491 = vector.broadcast %cst_95 : f32 to vector<2x32xf32>
    %492 = arith.subf %491, %485 : vector<2x32xf32>
    %493 = arith.mulf %492, %490 : vector<2x32xf32>
    %494 = arith.mulf %485, %424 : vector<2x32xf32>
    %495 = arith.addf %493, %494 : vector<2x32xf32>
    %496 = arith.truncf %495 : vector<2x32xf32> to vector<2x32xbf16>
    %cst_96 = arith.constant dense<0.000000e+00> : vector<2x128xf32>
    %497 = tpu.matmul %496, %294, %cst_96 {dimension_numbers = #tpu.dot_dimension_numbers<[1], [0], [0], [1], [0, 0, 1, 1], [], []>} : vector<2x32xbf16>, vector<32x128xbf16>, vector<2x128xf32> -> vector<2x128xf32>
    %498 = arith.addf %497, %292 : vector<2x128xf32>
    %cst_97 = arith.constant -1.000000e+30 : f32
    %499 = vector.broadcast %cst_97 : f32 to vector<2x128xf32>
    %500 = arith.select %298, %498, %499 : vector<2x128xi1>, vector<2x128xf32>
    %cst_98 = arith.constant dense<0xFF800000> : vector<2xf32>
    %501 = vector.multi_reduction <maximumf>, %500, %cst_98 [1] : vector<2x128xf32> to vector<2xf32>
    %502 = vector.shape_cast %501 : vector<2xf32> to vector<2x1xf32>
    %503 = vector.broadcast %502 : vector<2x1xf32> to vector<2x128xf32>
    %504 = arith.cmpf oeq, %500, %503 : vector<2x128xf32>
    %c128_i32_99 = arith.constant 128 : i32
    %505 = vector.broadcast %c128_i32_99 : i32 to vector<2x128xi32>
    %506 = arith.select %504, %296, %505 : vector<2x128xi1>, vector<2x128xi32>
    %cst_100 = arith.constant dense<2147483647> : vector<2xi32>
    %507 = vector.multi_reduction <minsi>, %506, %cst_100 [1] : vector<2x128xi32> to vector<2xi32>
    %508 = vector.shape_cast %507 : vector<2xi32> to vector<2x1xi32>
    %509 = vector.broadcast %508 : vector<2x1xi32> to vector<2x128xi32>
    %510 = arith.cmpi eq, %296, %509 : vector<2x128xi32>
    %cst_101 = arith.constant 1.000000e+00 : f32
    %cst_102 = arith.constant 0.000000e+00 : f32
    %511 = vector.broadcast %cst_101 : f32 to vector<2x128xf32>
    %512 = vector.broadcast %cst_102 : f32 to vector<2x128xf32>
    %513 = arith.select %510, %511, %512 : vector<2x128xi1>, vector<2x128xf32>
    %514 = arith.truncf %513 : vector<2x128xf32> to vector<2x128xbf16>
    %cst_103 = arith.constant dense<0.000000e+00> : vector<2x96xf32>
    %515 = tpu.matmul %514, %295, %cst_103 {dimension_numbers = #tpu.dot_dimension_numbers<[1], [0], [0], [1], [0, 0, 1, 1], [], []>} : vector<2x128xbf16>, vector<128x96xbf16>, vector<2x96xf32> -> vector<2x96xf32>
    %516 = arith.truncf %495 : vector<2x32xf32> to vector<2x32xbf16>
    %cst_104 = arith.constant dense<0.000000e+00> : vector<2x128xf32>
    %517 = tpu.matmul %516, %293, %cst_104 {dimension_numbers = #tpu.dot_dimension_numbers<[1], [0], [0], [1], [0, 0, 1, 1], [], []>} : vector<2x32xbf16>, vector<32x128xbf16>, vector<2x128xf32> -> vector<2x128xf32>
    %518 = vector.extract_strided_slice %517 {offsets = [0, 0], sizes = [2, 32], strides = [1, 1]} : vector<2x128xf32> to vector<2x32xf32>
    %519 = vector.extract_strided_slice %517 {offsets = [0, 32], sizes = [2, 96], strides = [1, 1]} : vector<2x128xf32> to vector<2x96xf32>
    %520 = arith.addf %519, %289 : vector<2x96xf32>
    %521 = vector.shape_cast %518 : vector<2x32xf32> to vector<2x1x32xf32>
    %522 = vector.broadcast %521 : vector<2x1x32xf32> to vector<2x8x32xf32>
    %523 = arith.addf %522, %280 : vector<2x8x32xf32>
    %524 = math.tanh %523 : vector<2x8x32xf32>
    %525 = arith.mulf %524, %286 : vector<2x8x32xf32>
    %cst_105 = arith.constant dense<0.000000e+00> : vector<2x8xf32>
    %526 = vector.multi_reduction <add>, %525, %cst_105 [2] : vector<2x8x32xf32> to vector<2x8xf32>
    %cst_106 = arith.constant dense<0xFF800000> : vector<2xf32>
    %527 = vector.multi_reduction <maximumf>, %526, %cst_106 [1] : vector<2x8xf32> to vector<2xf32>
    %528 = vector.shape_cast %527 : vector<2xf32> to vector<2x1xf32>
    %529 = vector.broadcast %528 : vector<2x1xf32> to vector<2x8xf32>
    %530 = arith.subf %526, %529 : vector<2x8xf32>
    %531 = math.exp %530 : vector<2x8xf32>
    %cst_107 = arith.constant dense<0.000000e+00> : vector<2xf32>
    %532 = vector.multi_reduction <add>, %531, %cst_107 [1] : vector<2x8xf32> to vector<2xf32>
    %533 = vector.shape_cast %532 : vector<2xf32> to vector<2x1xf32>
    %534 = vector.broadcast %533 : vector<2x1xf32> to vector<2x8xf32>
    %535 = arith.divf %531, %534 : vector<2x8xf32>
    %536 = vector.shape_cast %535 : vector<2x8xf32> to vector<2x8x1xf32>
    %537 = vector.broadcast %536 : vector<2x8x1xf32> to vector<2x8x96xf32>
    %538 = arith.mulf %537, %282 : vector<2x8x96xf32>
    %cst_108 = arith.constant dense<0.000000e+00> : vector<2x96xf32>
    %539 = vector.multi_reduction <add>, %538, %cst_108 [1] : vector<2x8x96xf32> to vector<2x96xf32>
    %540 = arith.addf %515, %539 : vector<2x96xf32>
    %541 = vector.extract_strided_slice %540 {offsets = [0, 0], sizes = [2, 32], strides = [1, 1]} : vector<2x96xf32> to vector<2x32xf32>
    %542 = vector.extract_strided_slice %520 {offsets = [0, 0], sizes = [2, 32], strides = [1, 1]} : vector<2x96xf32> to vector<2x32xf32>
    %543 = arith.addf %541, %542 : vector<2x32xf32>
    %544 = arith.negf %543 : vector<2x32xf32>
    %545 = math.exp %544 : vector<2x32xf32>
    %cst_109 = arith.constant 1.000000e+00 : f32
    %546 = vector.broadcast %cst_109 : f32 to vector<2x32xf32>
    %547 = arith.addf %546, %545 : vector<2x32xf32>
    %548 = arith.divf %546, %547 : vector<2x32xf32>
    %549 = vector.extract_strided_slice %540 {offsets = [0, 32], sizes = [2, 32], strides = [1, 1]} : vector<2x96xf32> to vector<2x32xf32>
    %550 = vector.extract_strided_slice %520 {offsets = [0, 32], sizes = [2, 32], strides = [1, 1]} : vector<2x96xf32> to vector<2x32xf32>
    %551 = arith.addf %549, %550 : vector<2x32xf32>
    %552 = arith.negf %551 : vector<2x32xf32>
    %553 = math.exp %552 : vector<2x32xf32>
    %cst_110 = arith.constant 1.000000e+00 : f32
    %554 = vector.broadcast %cst_110 : f32 to vector<2x32xf32>
    %555 = arith.addf %554, %553 : vector<2x32xf32>
    %556 = arith.divf %554, %555 : vector<2x32xf32>
    %557 = vector.extract_strided_slice %540 {offsets = [0, 64], sizes = [2, 32], strides = [1, 1]} : vector<2x96xf32> to vector<2x32xf32>
    %558 = vector.extract_strided_slice %520 {offsets = [0, 64], sizes = [2, 32], strides = [1, 1]} : vector<2x96xf32> to vector<2x32xf32>
    %559 = arith.mulf %548, %558 : vector<2x32xf32>
    %560 = arith.addf %557, %559 : vector<2x32xf32>
    %561 = math.tanh %560 : vector<2x32xf32>
    %cst_111 = arith.constant 1.000000e+00 : f32
    %562 = vector.broadcast %cst_111 : f32 to vector<2x32xf32>
    %563 = arith.subf %562, %556 : vector<2x32xf32>
    %564 = arith.mulf %563, %561 : vector<2x32xf32>
    %565 = arith.mulf %556, %495 : vector<2x32xf32>
    %566 = arith.addf %564, %565 : vector<2x32xf32>
    %567 = arith.truncf %566 : vector<2x32xf32> to vector<2x32xbf16>
    %cst_112 = arith.constant dense<0.000000e+00> : vector<2x128xf32>
    %568 = tpu.matmul %567, %294, %cst_112 {dimension_numbers = #tpu.dot_dimension_numbers<[1], [0], [0], [1], [0, 0, 1, 1], [], []>} : vector<2x32xbf16>, vector<32x128xbf16>, vector<2x128xf32> -> vector<2x128xf32>
    %569 = arith.addf %568, %292 : vector<2x128xf32>
    %cst_113 = arith.constant -1.000000e+30 : f32
    %570 = vector.broadcast %cst_113 : f32 to vector<2x128xf32>
    %571 = arith.select %298, %569, %570 : vector<2x128xi1>, vector<2x128xf32>
    %cst_114 = arith.constant dense<0xFF800000> : vector<2xf32>
    %572 = vector.multi_reduction <maximumf>, %571, %cst_114 [1] : vector<2x128xf32> to vector<2xf32>
    %573 = vector.shape_cast %572 : vector<2xf32> to vector<2x1xf32>
    %574 = vector.broadcast %573 : vector<2x1xf32> to vector<2x128xf32>
    %575 = arith.cmpf oeq, %571, %574 : vector<2x128xf32>
    %c128_i32_115 = arith.constant 128 : i32
    %576 = vector.broadcast %c128_i32_115 : i32 to vector<2x128xi32>
    %577 = arith.select %575, %296, %576 : vector<2x128xi1>, vector<2x128xi32>
    %cst_116 = arith.constant dense<2147483647> : vector<2xi32>
    %578 = vector.multi_reduction <minsi>, %577, %cst_116 [1] : vector<2x128xi32> to vector<2xi32>
    %579 = vector.shape_cast %578 : vector<2xi32> to vector<2x1xi32>
    %580 = vector.broadcast %579 : vector<2x1xi32> to vector<2x128xi32>
    %581 = arith.cmpi eq, %296, %580 : vector<2x128xi32>
    %cst_117 = arith.constant 1.000000e+00 : f32
    %cst_118 = arith.constant 0.000000e+00 : f32
    %582 = vector.broadcast %cst_117 : f32 to vector<2x128xf32>
    %583 = vector.broadcast %cst_118 : f32 to vector<2x128xf32>
    %584 = arith.select %581, %582, %583 : vector<2x128xi1>, vector<2x128xf32>
    %585 = arith.truncf %584 : vector<2x128xf32> to vector<2x128xbf16>
    %cst_119 = arith.constant dense<0.000000e+00> : vector<2x96xf32>
    %586 = tpu.matmul %585, %295, %cst_119 {dimension_numbers = #tpu.dot_dimension_numbers<[1], [0], [0], [1], [0, 0, 1, 1], [], []>} : vector<2x128xbf16>, vector<128x96xbf16>, vector<2x96xf32> -> vector<2x96xf32>
    %587 = arith.truncf %566 : vector<2x32xf32> to vector<2x32xbf16>
    %cst_120 = arith.constant dense<0.000000e+00> : vector<2x128xf32>
    %588 = tpu.matmul %587, %293, %cst_120 {dimension_numbers = #tpu.dot_dimension_numbers<[1], [0], [0], [1], [0, 0, 1, 1], [], []>} : vector<2x32xbf16>, vector<32x128xbf16>, vector<2x128xf32> -> vector<2x128xf32>
    %589 = vector.extract_strided_slice %588 {offsets = [0, 0], sizes = [2, 32], strides = [1, 1]} : vector<2x128xf32> to vector<2x32xf32>
    %590 = vector.extract_strided_slice %588 {offsets = [0, 32], sizes = [2, 96], strides = [1, 1]} : vector<2x128xf32> to vector<2x96xf32>
    %591 = arith.addf %590, %289 : vector<2x96xf32>
    %592 = vector.shape_cast %589 : vector<2x32xf32> to vector<2x1x32xf32>
    %593 = vector.broadcast %592 : vector<2x1x32xf32> to vector<2x8x32xf32>
    %594 = arith.addf %593, %280 : vector<2x8x32xf32>
    %595 = math.tanh %594 : vector<2x8x32xf32>
    %596 = arith.mulf %595, %286 : vector<2x8x32xf32>
    %cst_121 = arith.constant dense<0.000000e+00> : vector<2x8xf32>
    %597 = vector.multi_reduction <add>, %596, %cst_121 [2] : vector<2x8x32xf32> to vector<2x8xf32>
    %cst_122 = arith.constant dense<0xFF800000> : vector<2xf32>
    %598 = vector.multi_reduction <maximumf>, %597, %cst_122 [1] : vector<2x8xf32> to vector<2xf32>
    %599 = vector.shape_cast %598 : vector<2xf32> to vector<2x1xf32>
    %600 = vector.broadcast %599 : vector<2x1xf32> to vector<2x8xf32>
    %601 = arith.subf %597, %600 : vector<2x8xf32>
    %602 = math.exp %601 : vector<2x8xf32>
    %cst_123 = arith.constant dense<0.000000e+00> : vector<2xf32>
    %603 = vector.multi_reduction <add>, %602, %cst_123 [1] : vector<2x8xf32> to vector<2xf32>
    %604 = vector.shape_cast %603 : vector<2xf32> to vector<2x1xf32>
    %605 = vector.broadcast %604 : vector<2x1xf32> to vector<2x8xf32>
    %606 = arith.divf %602, %605 : vector<2x8xf32>
    %607 = vector.shape_cast %606 : vector<2x8xf32> to vector<2x8x1xf32>
    %608 = vector.broadcast %607 : vector<2x8x1xf32> to vector<2x8x96xf32>
    %609 = arith.mulf %608, %282 : vector<2x8x96xf32>
    %cst_124 = arith.constant dense<0.000000e+00> : vector<2x96xf32>
    %610 = vector.multi_reduction <add>, %609, %cst_124 [1] : vector<2x8x96xf32> to vector<2x96xf32>
    %611 = arith.addf %586, %610 : vector<2x96xf32>
    %612 = vector.extract_strided_slice %611 {offsets = [0, 0], sizes = [2, 32], strides = [1, 1]} : vector<2x96xf32> to vector<2x32xf32>
    %613 = vector.extract_strided_slice %591 {offsets = [0, 0], sizes = [2, 32], strides = [1, 1]} : vector<2x96xf32> to vector<2x32xf32>
    %614 = arith.addf %612, %613 : vector<2x32xf32>
    %615 = arith.negf %614 : vector<2x32xf32>
    %616 = math.exp %615 : vector<2x32xf32>
    %cst_125 = arith.constant 1.000000e+00 : f32
    %617 = vector.broadcast %cst_125 : f32 to vector<2x32xf32>
    %618 = arith.addf %617, %616 : vector<2x32xf32>
    %619 = arith.divf %617, %618 : vector<2x32xf32>
    %620 = vector.extract_strided_slice %611 {offsets = [0, 32], sizes = [2, 32], strides = [1, 1]} : vector<2x96xf32> to vector<2x32xf32>
    %621 = vector.extract_strided_slice %591 {offsets = [0, 32], sizes = [2, 32], strides = [1, 1]} : vector<2x96xf32> to vector<2x32xf32>
    %622 = arith.addf %620, %621 : vector<2x32xf32>
    %623 = arith.negf %622 : vector<2x32xf32>
    %624 = math.exp %623 : vector<2x32xf32>
    %cst_126 = arith.constant 1.000000e+00 : f32
    %625 = vector.broadcast %cst_126 : f32 to vector<2x32xf32>
    %626 = arith.addf %625, %624 : vector<2x32xf32>
    %627 = arith.divf %625, %626 : vector<2x32xf32>
    %628 = vector.extract_strided_slice %611 {offsets = [0, 64], sizes = [2, 32], strides = [1, 1]} : vector<2x96xf32> to vector<2x32xf32>
    %629 = vector.extract_strided_slice %591 {offsets = [0, 64], sizes = [2, 32], strides = [1, 1]} : vector<2x96xf32> to vector<2x32xf32>
    %630 = arith.mulf %619, %629 : vector<2x32xf32>
    %631 = arith.addf %628, %630 : vector<2x32xf32>
    %632 = math.tanh %631 : vector<2x32xf32>
    %cst_127 = arith.constant 1.000000e+00 : f32
    %633 = vector.broadcast %cst_127 : f32 to vector<2x32xf32>
    %634 = arith.subf %633, %627 : vector<2x32xf32>
    %635 = arith.mulf %634, %632 : vector<2x32xf32>
    %636 = arith.mulf %627, %566 : vector<2x32xf32>
    %637 = arith.addf %635, %636 : vector<2x32xf32>
    %638 = arith.truncf %637 : vector<2x32xf32> to vector<2x32xbf16>
    %cst_128 = arith.constant dense<0.000000e+00> : vector<2x128xf32>
    %639 = tpu.matmul %638, %294, %cst_128 {dimension_numbers = #tpu.dot_dimension_numbers<[1], [0], [0], [1], [0, 0, 1, 1], [], []>} : vector<2x32xbf16>, vector<32x128xbf16>, vector<2x128xf32> -> vector<2x128xf32>
    %640 = arith.addf %639, %292 : vector<2x128xf32>
    %cst_129 = arith.constant -1.000000e+30 : f32
    %641 = vector.broadcast %cst_129 : f32 to vector<2x128xf32>
    %642 = arith.select %298, %640, %641 : vector<2x128xi1>, vector<2x128xf32>
    %cst_130 = arith.constant dense<0xFF800000> : vector<2xf32>
    %643 = vector.multi_reduction <maximumf>, %642, %cst_130 [1] : vector<2x128xf32> to vector<2xf32>
    %644 = vector.shape_cast %643 : vector<2xf32> to vector<2x1xf32>
    %645 = vector.broadcast %644 : vector<2x1xf32> to vector<2x128xf32>
    %646 = arith.cmpf oeq, %642, %645 : vector<2x128xf32>
    %c128_i32_131 = arith.constant 128 : i32
    %647 = vector.broadcast %c128_i32_131 : i32 to vector<2x128xi32>
    %648 = arith.select %646, %296, %647 : vector<2x128xi1>, vector<2x128xi32>
    %cst_132 = arith.constant dense<2147483647> : vector<2xi32>
    %649 = vector.multi_reduction <minsi>, %648, %cst_132 [1] : vector<2x128xi32> to vector<2xi32>
    %650 = vector.shape_cast %649 : vector<2xi32> to vector<2x1xi32>
    %651 = vector.broadcast %650 : vector<2x1xi32> to vector<2x128xi32>
    %652 = arith.cmpi eq, %296, %651 : vector<2x128xi32>
    %cst_133 = arith.constant 1.000000e+00 : f32
    %cst_134 = arith.constant 0.000000e+00 : f32
    %653 = vector.broadcast %cst_133 : f32 to vector<2x128xf32>
    %654 = vector.broadcast %cst_134 : f32 to vector<2x128xf32>
    %655 = arith.select %652, %653, %654 : vector<2x128xi1>, vector<2x128xf32>
    %656 = arith.truncf %655 : vector<2x128xf32> to vector<2x128xbf16>
    %cst_135 = arith.constant dense<0.000000e+00> : vector<2x96xf32>
    %657 = tpu.matmul %656, %295, %cst_135 {dimension_numbers = #tpu.dot_dimension_numbers<[1], [0], [0], [1], [0, 0, 1, 1], [], []>} : vector<2x128xbf16>, vector<128x96xbf16>, vector<2x96xf32> -> vector<2x96xf32>
    %658 = arith.truncf %637 : vector<2x32xf32> to vector<2x32xbf16>
    %cst_136 = arith.constant dense<0.000000e+00> : vector<2x128xf32>
    %659 = tpu.matmul %658, %293, %cst_136 {dimension_numbers = #tpu.dot_dimension_numbers<[1], [0], [0], [1], [0, 0, 1, 1], [], []>} : vector<2x32xbf16>, vector<32x128xbf16>, vector<2x128xf32> -> vector<2x128xf32>
    %660 = vector.extract_strided_slice %659 {offsets = [0, 0], sizes = [2, 32], strides = [1, 1]} : vector<2x128xf32> to vector<2x32xf32>
    %661 = vector.extract_strided_slice %659 {offsets = [0, 32], sizes = [2, 96], strides = [1, 1]} : vector<2x128xf32> to vector<2x96xf32>
    %662 = arith.addf %661, %289 : vector<2x96xf32>
    %663 = vector.shape_cast %660 : vector<2x32xf32> to vector<2x1x32xf32>
    %664 = vector.broadcast %663 : vector<2x1x32xf32> to vector<2x8x32xf32>
    %665 = arith.addf %664, %280 : vector<2x8x32xf32>
    %666 = math.tanh %665 : vector<2x8x32xf32>
    %667 = arith.mulf %666, %286 : vector<2x8x32xf32>
    %cst_137 = arith.constant dense<0.000000e+00> : vector<2x8xf32>
    %668 = vector.multi_reduction <add>, %667, %cst_137 [2] : vector<2x8x32xf32> to vector<2x8xf32>
    %cst_138 = arith.constant dense<0xFF800000> : vector<2xf32>
    %669 = vector.multi_reduction <maximumf>, %668, %cst_138 [1] : vector<2x8xf32> to vector<2xf32>
    %670 = vector.shape_cast %669 : vector<2xf32> to vector<2x1xf32>
    %671 = vector.broadcast %670 : vector<2x1xf32> to vector<2x8xf32>
    %672 = arith.subf %668, %671 : vector<2x8xf32>
    %673 = math.exp %672 : vector<2x8xf32>
    %cst_139 = arith.constant dense<0.000000e+00> : vector<2xf32>
    %674 = vector.multi_reduction <add>, %673, %cst_139 [1] : vector<2x8xf32> to vector<2xf32>
    %675 = vector.shape_cast %674 : vector<2xf32> to vector<2x1xf32>
    %676 = vector.broadcast %675 : vector<2x1xf32> to vector<2x8xf32>
    %677 = arith.divf %673, %676 : vector<2x8xf32>
    %678 = vector.shape_cast %677 : vector<2x8xf32> to vector<2x8x1xf32>
    %679 = vector.broadcast %678 : vector<2x8x1xf32> to vector<2x8x96xf32>
    %680 = arith.mulf %679, %282 : vector<2x8x96xf32>
    %cst_140 = arith.constant dense<0.000000e+00> : vector<2x96xf32>
    %681 = vector.multi_reduction <add>, %680, %cst_140 [1] : vector<2x8x96xf32> to vector<2x96xf32>
    %682 = arith.addf %657, %681 : vector<2x96xf32>
    %683 = vector.extract_strided_slice %682 {offsets = [0, 0], sizes = [2, 32], strides = [1, 1]} : vector<2x96xf32> to vector<2x32xf32>
    %684 = vector.extract_strided_slice %662 {offsets = [0, 0], sizes = [2, 32], strides = [1, 1]} : vector<2x96xf32> to vector<2x32xf32>
    %685 = arith.addf %683, %684 : vector<2x32xf32>
    %686 = arith.negf %685 : vector<2x32xf32>
    %687 = math.exp %686 : vector<2x32xf32>
    %cst_141 = arith.constant 1.000000e+00 : f32
    %688 = vector.broadcast %cst_141 : f32 to vector<2x32xf32>
    %689 = arith.addf %688, %687 : vector<2x32xf32>
    %690 = arith.divf %688, %689 : vector<2x32xf32>
    %691 = vector.extract_strided_slice %682 {offsets = [0, 32], sizes = [2, 32], strides = [1, 1]} : vector<2x96xf32> to vector<2x32xf32>
    %692 = vector.extract_strided_slice %662 {offsets = [0, 32], sizes = [2, 32], strides = [1, 1]} : vector<2x96xf32> to vector<2x32xf32>
    %693 = arith.addf %691, %692 : vector<2x32xf32>
    %694 = arith.negf %693 : vector<2x32xf32>
    %695 = math.exp %694 : vector<2x32xf32>
    %cst_142 = arith.constant 1.000000e+00 : f32
    %696 = vector.broadcast %cst_142 : f32 to vector<2x32xf32>
    %697 = arith.addf %696, %695 : vector<2x32xf32>
    %698 = arith.divf %696, %697 : vector<2x32xf32>
    %699 = vector.extract_strided_slice %682 {offsets = [0, 64], sizes = [2, 32], strides = [1, 1]} : vector<2x96xf32> to vector<2x32xf32>
    %700 = vector.extract_strided_slice %662 {offsets = [0, 64], sizes = [2, 32], strides = [1, 1]} : vector<2x96xf32> to vector<2x32xf32>
    %701 = arith.mulf %690, %700 : vector<2x32xf32>
    %702 = arith.addf %699, %701 : vector<2x32xf32>
    %703 = math.tanh %702 : vector<2x32xf32>
    %cst_143 = arith.constant 1.000000e+00 : f32
    %704 = vector.broadcast %cst_143 : f32 to vector<2x32xf32>
    %705 = arith.subf %704, %698 : vector<2x32xf32>
    %706 = arith.mulf %705, %703 : vector<2x32xf32>
    %707 = arith.mulf %698, %637 : vector<2x32xf32>
    %708 = arith.addf %706, %707 : vector<2x32xf32>
    %709 = arith.truncf %708 : vector<2x32xf32> to vector<2x32xbf16>
    %cst_144 = arith.constant dense<0.000000e+00> : vector<2x128xf32>
    %710 = tpu.matmul %709, %294, %cst_144 {dimension_numbers = #tpu.dot_dimension_numbers<[1], [0], [0], [1], [0, 0, 1, 1], [], []>} : vector<2x32xbf16>, vector<32x128xbf16>, vector<2x128xf32> -> vector<2x128xf32>
    %711 = arith.addf %710, %292 : vector<2x128xf32>
    %cst_145 = arith.constant -1.000000e+30 : f32
    %712 = vector.broadcast %cst_145 : f32 to vector<2x128xf32>
    %713 = arith.select %298, %711, %712 : vector<2x128xi1>, vector<2x128xf32>
    %cst_146 = arith.constant dense<0xFF800000> : vector<2xf32>
    %714 = vector.multi_reduction <maximumf>, %713, %cst_146 [1] : vector<2x128xf32> to vector<2xf32>
    %715 = vector.shape_cast %714 : vector<2xf32> to vector<2x1xf32>
    %716 = vector.broadcast %715 : vector<2x1xf32> to vector<2x128xf32>
    %717 = arith.cmpf oeq, %713, %716 : vector<2x128xf32>
    %c128_i32_147 = arith.constant 128 : i32
    %718 = vector.broadcast %c128_i32_147 : i32 to vector<2x128xi32>
    %719 = arith.select %717, %296, %718 : vector<2x128xi1>, vector<2x128xi32>
    %cst_148 = arith.constant dense<2147483647> : vector<2xi32>
    %720 = vector.multi_reduction <minsi>, %719, %cst_148 [1] : vector<2x128xi32> to vector<2xi32>
    %721 = vector.shape_cast %720 : vector<2xi32> to vector<2x1xi32>
    %722 = vector.broadcast %721 : vector<2x1xi32> to vector<2x128xi32>
    %723 = arith.cmpi eq, %296, %722 : vector<2x128xi32>
    %cst_149 = arith.constant 1.000000e+00 : f32
    %cst_150 = arith.constant 0.000000e+00 : f32
    %724 = vector.broadcast %cst_149 : f32 to vector<2x128xf32>
    %725 = vector.broadcast %cst_150 : f32 to vector<2x128xf32>
    %726 = arith.select %723, %724, %725 : vector<2x128xi1>, vector<2x128xf32>
    %727 = arith.truncf %726 : vector<2x128xf32> to vector<2x128xbf16>
    %cst_151 = arith.constant dense<0.000000e+00> : vector<2x96xf32>
    %728 = tpu.matmul %727, %295, %cst_151 {dimension_numbers = #tpu.dot_dimension_numbers<[1], [0], [0], [1], [0, 0, 1, 1], [], []>} : vector<2x128xbf16>, vector<128x96xbf16>, vector<2x96xf32> -> vector<2x96xf32>
    %729 = arith.truncf %708 : vector<2x32xf32> to vector<2x32xbf16>
    %cst_152 = arith.constant dense<0.000000e+00> : vector<2x128xf32>
    %730 = tpu.matmul %729, %293, %cst_152 {dimension_numbers = #tpu.dot_dimension_numbers<[1], [0], [0], [1], [0, 0, 1, 1], [], []>} : vector<2x32xbf16>, vector<32x128xbf16>, vector<2x128xf32> -> vector<2x128xf32>
    %731 = vector.extract_strided_slice %730 {offsets = [0, 0], sizes = [2, 32], strides = [1, 1]} : vector<2x128xf32> to vector<2x32xf32>
    %732 = vector.extract_strided_slice %730 {offsets = [0, 32], sizes = [2, 96], strides = [1, 1]} : vector<2x128xf32> to vector<2x96xf32>
    %733 = arith.addf %732, %289 : vector<2x96xf32>
    %734 = vector.shape_cast %731 : vector<2x32xf32> to vector<2x1x32xf32>
    %735 = vector.broadcast %734 : vector<2x1x32xf32> to vector<2x8x32xf32>
    %736 = arith.addf %735, %280 : vector<2x8x32xf32>
    %737 = math.tanh %736 : vector<2x8x32xf32>
    %738 = arith.mulf %737, %286 : vector<2x8x32xf32>
    %cst_153 = arith.constant dense<0.000000e+00> : vector<2x8xf32>
    %739 = vector.multi_reduction <add>, %738, %cst_153 [2] : vector<2x8x32xf32> to vector<2x8xf32>
    %cst_154 = arith.constant dense<0xFF800000> : vector<2xf32>
    %740 = vector.multi_reduction <maximumf>, %739, %cst_154 [1] : vector<2x8xf32> to vector<2xf32>
    %741 = vector.shape_cast %740 : vector<2xf32> to vector<2x1xf32>
    %742 = vector.broadcast %741 : vector<2x1xf32> to vector<2x8xf32>
    %743 = arith.subf %739, %742 : vector<2x8xf32>
    %744 = math.exp %743 : vector<2x8xf32>
    %cst_155 = arith.constant dense<0.000000e+00> : vector<2xf32>
    %745 = vector.multi_reduction <add>, %744, %cst_155 [1] : vector<2x8xf32> to vector<2xf32>
    %746 = vector.shape_cast %745 : vector<2xf32> to vector<2x1xf32>
    %747 = vector.broadcast %746 : vector<2x1xf32> to vector<2x8xf32>
    %748 = arith.divf %744, %747 : vector<2x8xf32>
    %749 = vector.shape_cast %748 : vector<2x8xf32> to vector<2x8x1xf32>
    %750 = vector.broadcast %749 : vector<2x8x1xf32> to vector<2x8x96xf32>
    %751 = arith.mulf %750, %282 : vector<2x8x96xf32>
    %cst_156 = arith.constant dense<0.000000e+00> : vector<2x96xf32>
    %752 = vector.multi_reduction <add>, %751, %cst_156 [1] : vector<2x8x96xf32> to vector<2x96xf32>
    %753 = arith.addf %728, %752 : vector<2x96xf32>
    %754 = vector.extract_strided_slice %753 {offsets = [0, 0], sizes = [2, 32], strides = [1, 1]} : vector<2x96xf32> to vector<2x32xf32>
    %755 = vector.extract_strided_slice %733 {offsets = [0, 0], sizes = [2, 32], strides = [1, 1]} : vector<2x96xf32> to vector<2x32xf32>
    %756 = arith.addf %754, %755 : vector<2x32xf32>
    %757 = arith.negf %756 : vector<2x32xf32>
    %758 = math.exp %757 : vector<2x32xf32>
    %cst_157 = arith.constant 1.000000e+00 : f32
    %759 = vector.broadcast %cst_157 : f32 to vector<2x32xf32>
    %760 = arith.addf %759, %758 : vector<2x32xf32>
    %761 = arith.divf %759, %760 : vector<2x32xf32>
    %762 = vector.extract_strided_slice %753 {offsets = [0, 32], sizes = [2, 32], strides = [1, 1]} : vector<2x96xf32> to vector<2x32xf32>
    %763 = vector.extract_strided_slice %733 {offsets = [0, 32], sizes = [2, 32], strides = [1, 1]} : vector<2x96xf32> to vector<2x32xf32>
    %764 = arith.addf %762, %763 : vector<2x32xf32>
    %765 = arith.negf %764 : vector<2x32xf32>
    %766 = math.exp %765 : vector<2x32xf32>
    %cst_158 = arith.constant 1.000000e+00 : f32
    %767 = vector.broadcast %cst_158 : f32 to vector<2x32xf32>
    %768 = arith.addf %767, %766 : vector<2x32xf32>
    %769 = arith.divf %767, %768 : vector<2x32xf32>
    %770 = vector.extract_strided_slice %753 {offsets = [0, 64], sizes = [2, 32], strides = [1, 1]} : vector<2x96xf32> to vector<2x32xf32>
    %771 = vector.extract_strided_slice %733 {offsets = [0, 64], sizes = [2, 32], strides = [1, 1]} : vector<2x96xf32> to vector<2x32xf32>
    %772 = arith.mulf %761, %771 : vector<2x32xf32>
    %773 = arith.addf %770, %772 : vector<2x32xf32>
    %774 = math.tanh %773 : vector<2x32xf32>
    %cst_159 = arith.constant 1.000000e+00 : f32
    %775 = vector.broadcast %cst_159 : f32 to vector<2x32xf32>
    %776 = arith.subf %775, %769 : vector<2x32xf32>
    %777 = arith.mulf %776, %774 : vector<2x32xf32>
    %778 = arith.mulf %769, %708 : vector<2x32xf32>
    %779 = arith.addf %777, %778 : vector<2x32xf32>
    %780 = arith.truncf %779 : vector<2x32xf32> to vector<2x32xbf16>
    %cst_160 = arith.constant dense<0.000000e+00> : vector<2x128xf32>
    %781 = tpu.matmul %780, %294, %cst_160 {dimension_numbers = #tpu.dot_dimension_numbers<[1], [0], [0], [1], [0, 0, 1, 1], [], []>} : vector<2x32xbf16>, vector<32x128xbf16>, vector<2x128xf32> -> vector<2x128xf32>
    %782 = arith.addf %781, %292 : vector<2x128xf32>
    %cst_161 = arith.constant -1.000000e+30 : f32
    %783 = vector.broadcast %cst_161 : f32 to vector<2x128xf32>
    %784 = arith.select %298, %782, %783 : vector<2x128xi1>, vector<2x128xf32>
    %cst_162 = arith.constant dense<0xFF800000> : vector<2xf32>
    %785 = vector.multi_reduction <maximumf>, %784, %cst_162 [1] : vector<2x128xf32> to vector<2xf32>
    %786 = vector.shape_cast %785 : vector<2xf32> to vector<2x1xf32>
    %787 = vector.broadcast %786 : vector<2x1xf32> to vector<2x128xf32>
    %788 = arith.cmpf oeq, %784, %787 : vector<2x128xf32>
    %c128_i32_163 = arith.constant 128 : i32
    %789 = vector.broadcast %c128_i32_163 : i32 to vector<2x128xi32>
    %790 = arith.select %788, %296, %789 : vector<2x128xi1>, vector<2x128xi32>
    %cst_164 = arith.constant dense<2147483647> : vector<2xi32>
    %791 = vector.multi_reduction <minsi>, %790, %cst_164 [1] : vector<2x128xi32> to vector<2xi32>
    %792 = vector.shape_cast %791 : vector<2xi32> to vector<2x1xi32>
    %793 = vector.broadcast %792 : vector<2x1xi32> to vector<2x128xi32>
    %794 = arith.cmpi eq, %296, %793 : vector<2x128xi32>
    %cst_165 = arith.constant 1.000000e+00 : f32
    %cst_166 = arith.constant 0.000000e+00 : f32
    %795 = vector.broadcast %cst_165 : f32 to vector<2x128xf32>
    %796 = vector.broadcast %cst_166 : f32 to vector<2x128xf32>
    %797 = arith.select %794, %795, %796 : vector<2x128xi1>, vector<2x128xf32>
    %798 = arith.truncf %797 : vector<2x128xf32> to vector<2x128xbf16>
    %cst_167 = arith.constant dense<0.000000e+00> : vector<2x96xf32>
    %799 = tpu.matmul %798, %295, %cst_167 {dimension_numbers = #tpu.dot_dimension_numbers<[1], [0], [0], [1], [0, 0, 1, 1], [], []>} : vector<2x128xbf16>, vector<128x96xbf16>, vector<2x96xf32> -> vector<2x96xf32>
    %800 = arith.truncf %779 : vector<2x32xf32> to vector<2x32xbf16>
    %cst_168 = arith.constant dense<0.000000e+00> : vector<2x128xf32>
    %801 = tpu.matmul %800, %293, %cst_168 {dimension_numbers = #tpu.dot_dimension_numbers<[1], [0], [0], [1], [0, 0, 1, 1], [], []>} : vector<2x32xbf16>, vector<32x128xbf16>, vector<2x128xf32> -> vector<2x128xf32>
    %802 = vector.extract_strided_slice %801 {offsets = [0, 0], sizes = [2, 32], strides = [1, 1]} : vector<2x128xf32> to vector<2x32xf32>
    %803 = vector.extract_strided_slice %801 {offsets = [0, 32], sizes = [2, 96], strides = [1, 1]} : vector<2x128xf32> to vector<2x96xf32>
    %804 = arith.addf %803, %289 : vector<2x96xf32>
    %805 = vector.shape_cast %802 : vector<2x32xf32> to vector<2x1x32xf32>
    %806 = vector.broadcast %805 : vector<2x1x32xf32> to vector<2x8x32xf32>
    %807 = arith.addf %806, %280 : vector<2x8x32xf32>
    %808 = math.tanh %807 : vector<2x8x32xf32>
    %809 = arith.mulf %808, %286 : vector<2x8x32xf32>
    %cst_169 = arith.constant dense<0.000000e+00> : vector<2x8xf32>
    %810 = vector.multi_reduction <add>, %809, %cst_169 [2] : vector<2x8x32xf32> to vector<2x8xf32>
    %cst_170 = arith.constant dense<0xFF800000> : vector<2xf32>
    %811 = vector.multi_reduction <maximumf>, %810, %cst_170 [1] : vector<2x8xf32> to vector<2xf32>
    %812 = vector.shape_cast %811 : vector<2xf32> to vector<2x1xf32>
    %813 = vector.broadcast %812 : vector<2x1xf32> to vector<2x8xf32>
    %814 = arith.subf %810, %813 : vector<2x8xf32>
    %815 = math.exp %814 : vector<2x8xf32>
    %cst_171 = arith.constant dense<0.000000e+00> : vector<2xf32>
    %816 = vector.multi_reduction <add>, %815, %cst_171 [1] : vector<2x8xf32> to vector<2xf32>
    %817 = vector.shape_cast %816 : vector<2xf32> to vector<2x1xf32>
    %818 = vector.broadcast %817 : vector<2x1xf32> to vector<2x8xf32>
    %819 = arith.divf %815, %818 : vector<2x8xf32>
    %820 = vector.shape_cast %819 : vector<2x8xf32> to vector<2x8x1xf32>
    %821 = vector.broadcast %820 : vector<2x8x1xf32> to vector<2x8x96xf32>
    %822 = arith.mulf %821, %282 : vector<2x8x96xf32>
    %cst_172 = arith.constant dense<0.000000e+00> : vector<2x96xf32>
    %823 = vector.multi_reduction <add>, %822, %cst_172 [1] : vector<2x8x96xf32> to vector<2x96xf32>
    %824 = arith.addf %799, %823 : vector<2x96xf32>
    %825 = vector.extract_strided_slice %824 {offsets = [0, 0], sizes = [2, 32], strides = [1, 1]} : vector<2x96xf32> to vector<2x32xf32>
    %826 = vector.extract_strided_slice %804 {offsets = [0, 0], sizes = [2, 32], strides = [1, 1]} : vector<2x96xf32> to vector<2x32xf32>
    %827 = arith.addf %825, %826 : vector<2x32xf32>
    %828 = arith.negf %827 : vector<2x32xf32>
    %829 = math.exp %828 : vector<2x32xf32>
    %cst_173 = arith.constant 1.000000e+00 : f32
    %830 = vector.broadcast %cst_173 : f32 to vector<2x32xf32>
    %831 = arith.addf %830, %829 : vector<2x32xf32>
    %832 = arith.divf %830, %831 : vector<2x32xf32>
    %833 = vector.extract_strided_slice %824 {offsets = [0, 32], sizes = [2, 32], strides = [1, 1]} : vector<2x96xf32> to vector<2x32xf32>
    %834 = vector.extract_strided_slice %804 {offsets = [0, 32], sizes = [2, 32], strides = [1, 1]} : vector<2x96xf32> to vector<2x32xf32>
    %835 = arith.addf %833, %834 : vector<2x32xf32>
    %836 = arith.negf %835 : vector<2x32xf32>
    %837 = math.exp %836 : vector<2x32xf32>
    %cst_174 = arith.constant 1.000000e+00 : f32
    %838 = vector.broadcast %cst_174 : f32 to vector<2x32xf32>
    %839 = arith.addf %838, %837 : vector<2x32xf32>
    %840 = arith.divf %838, %839 : vector<2x32xf32>
    %841 = vector.extract_strided_slice %824 {offsets = [0, 64], sizes = [2, 32], strides = [1, 1]} : vector<2x96xf32> to vector<2x32xf32>
    %842 = vector.extract_strided_slice %804 {offsets = [0, 64], sizes = [2, 32], strides = [1, 1]} : vector<2x96xf32> to vector<2x32xf32>
    %843 = arith.mulf %832, %842 : vector<2x32xf32>
    %844 = arith.addf %841, %843 : vector<2x32xf32>
    %845 = math.tanh %844 : vector<2x32xf32>
    %cst_175 = arith.constant 1.000000e+00 : f32
    %846 = vector.broadcast %cst_175 : f32 to vector<2x32xf32>
    %847 = arith.subf %846, %840 : vector<2x32xf32>
    %848 = arith.mulf %847, %845 : vector<2x32xf32>
    %849 = arith.mulf %840, %779 : vector<2x32xf32>
    %850 = arith.addf %848, %849 : vector<2x32xf32>
    %851 = arith.truncf %850 : vector<2x32xf32> to vector<2x32xbf16>
    %cst_176 = arith.constant dense<0.000000e+00> : vector<2x128xf32>
    %852 = tpu.matmul %851, %294, %cst_176 {dimension_numbers = #tpu.dot_dimension_numbers<[1], [0], [0], [1], [0, 0, 1, 1], [], []>} : vector<2x32xbf16>, vector<32x128xbf16>, vector<2x128xf32> -> vector<2x128xf32>
    %853 = arith.addf %852, %292 : vector<2x128xf32>
    %854 = vector.shape_cast %356 : vector<2x128xf32> to vector<2x1x128xf32>
    %855 = vector.shape_cast %427 : vector<2x128xf32> to vector<2x1x128xf32>
    %856 = vector.shape_cast %498 : vector<2x128xf32> to vector<2x1x128xf32>
    %857 = vector.shape_cast %569 : vector<2x128xf32> to vector<2x1x128xf32>
    %858 = vector.shape_cast %640 : vector<2x128xf32> to vector<2x1x128xf32>
    %859 = vector.shape_cast %711 : vector<2x128xf32> to vector<2x1x128xf32>
    %860 = vector.shape_cast %782 : vector<2x128xf32> to vector<2x1x128xf32>
    %861 = vector.shape_cast %853 : vector<2x128xf32> to vector<2x1x128xf32>
    %862 = tpu.concatenate %854, %855, %856, %857, %858, %859, %860, %861 in 1 : vector<2x1x128xf32>, vector<2x1x128xf32>, vector<2x1x128xf32>, vector<2x1x128xf32>, vector<2x1x128xf32>, vector<2x1x128xf32>, vector<2x1x128xf32>, vector<2x1x128xf32> -> vector<2x8x128xf32>
    %c0_177 = arith.constant 0 : index
    %c0_178 = arith.constant 0 : index
    %c0_179 = arith.constant 0 : index
    %863 = vector.load %arg11[%c0_177, %c0_178, %c0_179] : memref<2x8x128xf32, #tpu.memory_space<vmem>>, vector<2x8x128xf32>
    tpu.vector_store %arg11[%c0_177, %c0_178, %c0_179], %862 {strides = array<i32>} : memref<2x8x128xf32, #tpu.memory_space<vmem>>, vector<2x8x128xf32>,
    %864 = vector.shape_cast %322 : vector<2x8xf32> to vector<2x1x8xf32>
    %865 = vector.shape_cast %393 : vector<2x8xf32> to vector<2x1x8xf32>
    %866 = vector.shape_cast %464 : vector<2x8xf32> to vector<2x1x8xf32>
    %867 = vector.shape_cast %535 : vector<2x8xf32> to vector<2x1x8xf32>
    %868 = vector.shape_cast %606 : vector<2x8xf32> to vector<2x1x8xf32>
    %869 = vector.shape_cast %677 : vector<2x8xf32> to vector<2x1x8xf32>
    %870 = vector.shape_cast %748 : vector<2x8xf32> to vector<2x1x8xf32>
    %871 = vector.shape_cast %819 : vector<2x8xf32> to vector<2x1x8xf32>
    %872 = tpu.concatenate %864, %865, %866, %867, %868, %869, %870, %871 in 1 : vector<2x1x8xf32>, vector<2x1x8xf32>, vector<2x1x8xf32>, vector<2x1x8xf32>, vector<2x1x8xf32>, vector<2x1x8xf32>, vector<2x1x8xf32>, vector<2x1x8xf32> -> vector<2x8x8xf32>
    %c0_180 = arith.constant 0 : index
    %c0_181 = arith.constant 0 : index
    %c0_182 = arith.constant 0 : index
    %873 = vector.load %arg12[%c0_180, %c0_181, %c0_182] : memref<2x8x8xf32, #tpu.memory_space<vmem>>, vector<2x8x8xf32>
    tpu.vector_store %arg12[%c0_180, %c0_181, %c0_182], %872 {strides = array<i32>} : memref<2x8x8xf32, #tpu.memory_space<vmem>>, vector<2x8x8xf32>,
    return
  }
}

</mosaic_0001>

<llo_original>
// kernel: attention_network_forward.1
$region0: #{attention_network_forward.1}
  #allocation0 [shape = 'u32[]', space=smem, size = 0x4, offset = 0x4, fixed_abs, tag = 'smem constant byte address 0x4 - core index']
  #allocation1 [shape = 'u32[144,128]{1,0:T(1,128)}', space=vmem, size = 0x12000, scoped, tag = 'internal scratch']
  %s0 = inlined_call_operand.vmem [shape: s32[2,8], index: 0, kind: input, shape index: {}]
  %s1 = inlined_call_operand.vmem [shape: bf16[20,96], index: 1, kind: input, shape index: {}]
  %s2 = inlined_call_operand.vmem [shape: bf16[32,96], index: 2, kind: input, shape index: {}]
  %s3 = inlined_call_operand.vmem [shape: f32[1,96], index: 3, kind: input, shape index: {}]
  %s4 = inlined_call_operand.vmem [shape: bf16[32,128], index: 4, kind: input, shape index: {}]
  %s5 = inlined_call_operand.vmem [shape: f32[1,32], index: 5, kind: input, shape index: {}]
  %s6 = inlined_call_operand.vmem [shape: bf16[32,128], index: 6, kind: input, shape index: {}]
  %s7 = inlined_call_operand.vmem [shape: f32[1,96], index: 7, kind: input, shape index: {}]
  %s8 = inlined_call_operand.vmem [shape: bf16[128,96], index: 8, kind: input, shape index: {}]
  %s9 = inlined_call_operand.vmem [shape: bf16[32,128], index: 9, kind: input, shape index: {}]
  %s10 = inlined_call_operand.vmem [shape: f32[1,128], index: 10, kind: input, shape index: {}]
  %s11 = inlined_call_operand.hbm [shape: f32[2,8,128], index: 11, kind: output, shape index: {0}]
  %s12 = inlined_call_operand.hbm [shape: f32[2,8,8], index: 12, kind: output, shape index: {1}]
  %13 = xla_tuple %s11, %s12
  %s14 = sld [smem:[#allocation0]]
  $region62: #{attention_network_forward.1} parent=0
    _
  %s16 = ssub.s32 1, %s14
  %s17 = scalar_select 0, %s16, %s14
  $region1: #{attention_network_forward.1} parent=0
    #allocation2 [shape = 'u8[8192]{0}', space=vmem, size = 0x2000, scoped, tag = 'output window, operand 0, single buffered']
    #allocation3 [shape = 's32[1]{0}', space=sflag, size = 0x4, scoped, tag = 'scoped memory for attention_network_forward.1']
    #allocation4 [shape = 'u8[8192]{0}', space=vmem, size = 0x2000, scoped, tag = 'output window, operand 1, single buffered']
    #allocation5 [shape = 's32[1]{0}', space=sflag, size = 0x4, scoped, tag = 'scoped memory for attention_network_forward.1']
    %18 = vsyncpa [#allocation3], 0
    %19 = vsyncpa [#allocation5], 0
    // Predicated region
    $region2: #{attention_network_forward.1} parent=1 // pred_check
      _
    $region3: #{attention_network_forward.1} parent=1 // pred_check_branch
      %21 = sbr.rel (0) target = $region5
    $region4: #{attention_network_forward.1} parent=1 // pred_region
      _
    $region5: #{attention_network_forward.1} parent=1 // pred_fallthru
      _
    // Predicated region
    $region6: #{attention_network_forward.1} parent=1 // pred_check
      _
    $region7: #{attention_network_forward.1} parent=1 // pred_check_branch
      %23 = sbr.rel (0) target = $region9
    $region8: #{attention_network_forward.1} parent=1 // pred_region
      _
    $region9: #{attention_network_forward.1} parent=1 // pred_fallthru
      _
    // Predicated region
    $region10: #{attention_network_forward.1} parent=1 // pred_check
      _
    $region11: #{attention_network_forward.1} parent=1 // pred_check_branch
      %25 = sbr.rel (0) target = $region13
    $region12: #{attention_network_forward.1} parent=1 // pred_region
      _
    $region13: #{attention_network_forward.1} parent=1 // pred_fallthru
      _
    // Predicated region
    $region14: #{attention_network_forward.1} parent=1 // pred_check
      _
    $region15: #{attention_network_forward.1} parent=1 // pred_check_branch
      %27 = sbr.rel (0) target = $region17
    $region16: #{attention_network_forward.1} parent=1 // pred_region
      _
    $region17: #{attention_network_forward.1} parent=1 // pred_fallthru
      _
    // Predicated region
    $region18: #{attention_network_forward.1} parent=1 // pred_check
      _
    $region19: #{attention_network_forward.1} parent=1 // pred_check_branch
      %29 = sbr.rel (0) target = $region21
    $region20: #{attention_network_forward.1} parent=1 // pred_region
      _
    $region21: #{attention_network_forward.1} parent=1 // pred_fallthru
      _
    // Predicated region
    $region22: #{attention_network_forward.1} parent=1 // pred_check
      _
    $region23: #{attention_network_forward.1} parent=1 // pred_check_branch
      %31 = sbr.rel (0) target = $region25
    $region24: #{attention_network_forward.1} parent=1 // pred_region
      _
    $region25: #{attention_network_forward.1} parent=1 // pred_fallthru
      _
    // Predicated region
    $region26: #{attention_network_forward.1} parent=1 // pred_check
      _
    $region27: #{attention_network_forward.1} parent=1 // pred_check_branch
      %33 = sbr.rel (0) target = $region29
    $region28: #{attention_network_forward.1} parent=1 // pred_region
      _
    $region29: #{attention_network_forward.1} parent=1 // pred_fallthru
      _
    // Predicated region
    $region30: #{attention_network_forward.1} parent=1 // pred_check
      _
    $region31: #{attention_network_forward.1} parent=1 // pred_check_branch
      %35 = sbr.rel (0) target = $region33
    $region32: #{attention_network_forward.1} parent=1 // pred_region
      _
    $region33: #{attention_network_forward.1} parent=1 // pred_fallthru
      _
    // Predicated region
    $region34: #{attention_network_forward.1} parent=1 // pred_check
      _
    $region35: #{attention_network_forward.1} parent=1 // pred_check_branch
      %37 = sbr.rel (0) target = $region37
    $region36: #{attention_network_forward.1} parent=1 // pred_region
      _
    $region37: #{attention_network_forward.1} parent=1 // pred_fallthru
      _
    // Predicated region
    $region38: #{attention_network_forward.1} parent=1 // pred_check
      _
    $region39: #{attention_network_forward.1} parent=1 // pred_check_branch
      %39 = sbr.rel (0) target = $region41
    $region40: #{attention_network_forward.1} parent=1 // pred_region
      _
    $region41: #{attention_network_forward.1} parent=1 // pred_fallthru
      _
    // Predicated region
    $region42: #{attention_network_forward.1} parent=1 // pred_check
      _
    $region43: #{attention_network_forward.1} parent=1 // pred_check_branch
      %41 = sbr.rel (0) target = $region45
    $region44: #{attention_network_forward.1} parent=1 // pred_region
      _
    $region45: #{attention_network_forward.1} parent=1 // pred_fallthru
      _
    %v43 = vld [vmem:[%s0] sm:$0x3]
    %v44 = vlaneseq
    %v45 = vand.u32 %v44, 127
    %v46 = vlaneseq
    %v47 = vshrl.u32 %v46, 7
    %v48 = vsub.s32 0, %v47
    %v49 = vrot.slane %v43, %v48
    %51 = vbcast.lane.b32.xlu0 %v49, 256
    %v52 = vpop.permute.xlu0 %51
    %v53 = vlaneseq
    %v54 = vshrl.u32 %v53, 7
    %v55 = vsub.s32 1, %v54
    %v56 = vrot.slane %v43, %v55
    %58 = vbcast.lane.b32.xlu0 %v56, 256
    %v59 = vpop.permute.xlu0 %58
    %vm60 = vcmp.eq.s32.totalorder %v52, %v45
    %vm61 = vcmp.eq.s32.totalorder %v59, %v45
    %v62 = vsel %vm60, 1.0, 0.0
    %v63 = vsel %vm61, 1.0, 0.0
    %v64 = vpack.c.bf16 %v62, %v62
    %v65 = vpack.c.bf16 %v63, %v63
    %v66 = vld [vmem:[%s1] sm:$0xf]
    %v67 = vld [vmem:[%s1 + $0x4] sm:$0xf]
    %v68 = vld [vmem:[%s1 + $0x8] sm:$0x3]
    %v71 = vunpack.c.l.b16 %v64
    %v72 = vunpack.c.l.b16 %v65
    %v73 = vpack.c.b16 %v72, %v71
    %v77 = vunpack.c.l.b16 %v66
    %v78 = vunpack.c.l.b16 %v67
    %v79 = vunpack.c.l.b16 %v68
    %v80 = vpack.c.b16 %v78, %v77
    %v81 = vpack.c.b16 %v79, %v79
    %vm83 = vcmask 162816
    %v85 = vsel %vm83, %v73, 0
    %vm87 = vcmask 1041408
    %v89 = vsel %vm87, %v81, 0
    %91 = vmatprep.subr.bf16.mxu0 0
    %92 = vmatpush1.bf16.msra.mxu0 %v80
    %93 = vmatprep.subr.bf16.mxu0 0
    %94 = vmatpush1.bf16.msra.mxu0 %v89
    %95 = vmatprep.subr.bf16.mxu0 0
    %96 = vmatpush1.bf16.msra.mxu0 0
    %97 = vmatprep.subr.bf16.mxu0 0
    %98 = vmatpush1.bf16.msra.mxu0 0
    %99 = vmatprep.subr.bf16.mxu0 0
    %100 = vmatpush1.bf16.msra.mxu0 0
    %101 = vmatprep.subr.bf16.mxu0 0
    %102 = vmatpush1.bf16.msra.mxu0 0
    %103 = vmatprep.subr.bf16.mxu0 0
    %104 = vmatpush1.bf16.msra.mxu0 0
    %105 = vmatprep.subr.bf16.mxu0 0
    %106 = vmatpush1.bf16.msra.mxu0 0
    %107 = vmatprep.subr.bf16.mxu0 0
    %108 = vmatpush1.bf16.msra.mxu0 0
    %109 = vmatprep.subr.bf16.mxu0 0
    %110 = vmatpush1.bf16.msra.mxu0 0
    %111 = vmatprep.subr.bf16.mxu0 0
    %112 = vmatpush1.bf16.msra.mxu0 0
    %113 = vmatprep.subr.bf16.mxu0 0
    %114 = vmatpush1.bf16.msra.mxu0 0
    %115 = vmatprep.subr.bf16.mxu0 0
    %116 = vmatpush1.bf16.msra.mxu0 0
    %117 = vmatprep.subr.bf16.mxu0 0
    %118 = vmatpush1.bf16.msra.mxu0 0
    %119 = vmatprep.subr.bf16.mxu0 0
    %120 = vmatpush1.bf16.msra.mxu0 0
    %121 = vmatprep.subr.bf16.mxu0 0
    %122 = vmatpush1.bf16.msra.mxu0 0
    %123 = vmatprep.mubr.bf16.mxu0 0
    %124 = vmatmul.mubr.bf16.gmra.mrb[0].mxu0 %v85
    %v125 = vpop.f32.mrb[0].mxu0
    %v126 = vadd.f32 0.0, %v125
    %v127 = vpop.f32.mrb[0].mxu0
    %v128 = vpop.f32.mrb[0].mxu0
    %v129 = vadd.f32 0.0, %v128
    %v130 = vpop.f32.mrb[0].mxu0
    %131 = vdwg.mxu0
    %v132 = vld [vmem:[%s2] sm:$0xf]
    %v133 = vld [vmem:[%s2 + $0x4] sm:$0xf]
    %v134 = vld [vmem:[%s2 + $0x8] sm:$0xf]
    %v135 = vld [vmem:[%s2 + $0xc] sm:$0xf]
    %v136 = vld [vmem:[%s3] sm:$0x1]
    %v138 = vlaneseq
    %v139 = vshrl.u32 %v138, 7
    %v140 = vsub.s32 0, %v139
    %v141 = vrot.slane %v136, %v140
    %v147 = vunpack.c.l.b16 %v132
    %v148 = vunpack.c.l.b16 %v133
    %v149 = vunpack.c.l.b16 %v134
    %v150 = vunpack.c.l.b16 %v135
    %v151 = vpack.c.b16 %v148, %v147
    %v152 = vpack.c.b16 %v150, %v149
    %vm155 = vcmask 261120
    %v157 = vsel %vm155, 0, 0
    %159 = vmatprep.subr.bf16.mxu0 0
    %160 = vmatpush1.bf16.msra.mxu0 %v151
    %161 = vmatprep.subr.bf16.mxu0 0
    %162 = vmatpush1.bf16.msra.mxu0 %v152
    %163 = vmatprep.subr.bf16.mxu0 0
    %164 = vmatpush1.bf16.msra.mxu0 0
    %165 = vmatprep.subr.bf16.mxu0 0
    %166 = vmatpush1.bf16.msra.mxu0 0
    %167 = vmatprep.subr.bf16.mxu0 0
    %168 = vmatpush1.bf16.msra.mxu0 0
    %169 = vmatprep.subr.bf16.mxu0 0
    %170 = vmatpush1.bf16.msra.mxu0 0
    %171 = vmatprep.subr.bf16.mxu0 0
    %172 = vmatpush1.bf16.msra.mxu0 0
    %173 = vmatprep.subr.bf16.mxu0 0
    %174 = vmatpush1.bf16.msra.mxu0 0
    %175 = vmatprep.subr.bf16.mxu0 0
    %176 = vmatpush1.bf16.msra.mxu0 0
    %177 = vmatprep.subr.bf16.mxu0 0
    %178 = vmatpush1.bf16.msra.mxu0 0
    %179 = vmatprep.subr.bf16.mxu0 0
    %180 = vmatpush1.bf16.msra.mxu0 0
    %181 = vmatprep.subr.bf16.mxu0 0
    %182 = vmatpush1.bf16.msra.mxu0 0
    %183 = vmatprep.subr.bf16.mxu0 0
    %184 = vmatpush1.bf16.msra.mxu0 0
    %185 = vmatprep.subr.bf16.mxu0 0
    %186 = vmatpush1.bf16.msra.mxu0 0
    %187 = vmatprep.subr.bf16.mxu0 0
    %188 = vmatpush1.bf16.msra.mxu0 0
    %189 = vmatprep.subr.bf16.mxu0 0
    %190 = vmatpush1.bf16.msra.mxu0 0
    %191 = vmatprep.mubr.bf16.mxu0 0
    %192 = vmatmul.mubr.bf16.gmra.mrb[0].mxu0 %v157
    %v193 = vpop.f32.mrb[0].mxu0
    %v194 = vadd.f32 %v141, %v193
    %v195 = vpop.f32.mrb[0].mxu0
    %v196 = vpop.f32.mrb[0].mxu0
    %v197 = vpop.f32.mrb[0].mxu0
    %198 = vdwg.mxu0
    %v200 = vrot.slane %v194, 1
    %v203 = vadd.f32 %v126, %v194
    %v204 = vadd.f32 %v129, %v200
    %v205 = vxor.u32 %v203, 2147483648
    %v206 = vxor.u32 %v204, 2147483648
    %v207 = vmul.f32 %v205, 1.442695
    %v208 = vpow.pop %v207
    %v209 = vmul.f32 %v206, 1.442695
    %v210 = vpow.pop %v209
    %v211 = vadd.f32 %v208, 1.0
    %v212 = vadd.f32 %v210, 1.0
    %v213 = vrcp.pop %v211
    %v214 = vmul.f32 1.0, %v213
    %v215 = vrcp.pop %v212
    %v216 = vmul.f32 1.0, %v215
    %217 = vrot.lane.b32.xlu0 %v194, 64
    %v218 = vpop.permute.xlu0 %217
    %219 = vrot.lane.b32.xlu0 %v200, 64
    %v220 = vpop.permute.xlu0 %219
    %v223 = vmul.f32 %v214, %v218
    %v224 = vmul.f32 %v216, %v220
    %227 = vrot.lane.b32.xlu0 %v223, 64
    %v228 = vpop.permute.xlu0 %227
    %229 = vrot.lane.b32.xlu0 %v224, 64
    %v230 = vpop.permute.xlu0 %229
    %v233 = vadd.f32 %v126, %v228
    %v234 = vadd.f32 %v129, %v230
    %v235 = vtanh.pop %v233
    %v236 = vtanh.pop %v234
    %v237 = vsub.f32 1.0, %v214
    %v238 = vsub.f32 1.0, %v216
    %241 = vrot.lane.b32.xlu0 %v235, 96
    %v242 = vpop.permute.xlu0 %241
    %243 = vrot.lane.b32.xlu0 %v236, 96
    %v244 = vpop.permute.xlu0 %243
    %v247 = vmul.f32 %v237, %v242
    %v248 = vmul.f32 %v238, %v244
    %v249 = vmul.f32 %v214, 0.0
    %v250 = vmul.f32 %v216, 0.0
    %v251 = vadd.f32 %v247, %v249
    %v252 = vadd.f32 %v248, %v250
    %v253 = vpack.c.bf16 %v251, %v251
    %v254 = vpack.c.bf16 %v252, %v252
    %v257 = vunpack.c.l.b16 %v253
    %v258 = vunpack.c.l.b16 %v254
    %v259 = vrot.slane %v258, 7
    %vm260 = vcmask 1041409
    %v261 = vsel %vm260, %v259, %v257
    %v262 = vpack.c.b16 %v261, %v261
    %263 = vrot.lane.b32.xlu0 %v262, 96
    %v264 = vpop.permute.xlu0 %263
    %v266 = vsel %vm155, %v264, 0
    %268 = vmatprep.subr.bf16.mxu0 0
    %269 = vmatpush1.bf16.msra.mxu0 %v151
    %270 = vmatprep.subr.bf16.mxu0 0
    %271 = vmatpush1.bf16.msra.mxu0 %v152
    %272 = vmatprep.subr.bf16.mxu0 0
    %273 = vmatpush1.bf16.msra.mxu0 0
    %274 = vmatprep.subr.bf16.mxu0 0
    %275 = vmatpush1.bf16.msra.mxu0 0
    %276 = vmatprep.subr.bf16.mxu0 0
    %277 = vmatpush1.bf16.msra.mxu0 0
    %278 = vmatprep.subr.bf16.mxu0 0
    %279 = vmatpush1.bf16.msra.mxu0 0
    %280 = vmatprep.subr.bf16.mxu0 0
    %281 = vmatpush1.bf16.msra.mxu0 0
    %282 = vmatprep.subr.bf16.mxu0 0
    %283 = vmatpush1.bf16.msra.mxu0 0
    %284 = vmatprep.subr.bf16.mxu0 0
    %285 = vmatpush1.bf16.msra.mxu0 0
    %286 = vmatprep.subr.bf16.mxu0 0
    %287 = vmatpush1.bf16.msra.mxu0 0
    %288 = vmatprep.subr.bf16.mxu0 0
    %289 = vmatpush1.bf16.msra.mxu0 0
    %290 = vmatprep.subr.bf16.mxu0 0
    %291 = vmatpush1.bf16.msra.mxu0 0
    %292 = vmatprep.subr.bf16.mxu0 0
    %293 = vmatpush1.bf16.msra.mxu0 0
    %294 = vmatprep.subr.bf16.mxu0 0
    %295 = vmatpush1.bf16.msra.mxu0 0
    %296 = vmatprep.subr.bf16.mxu0 0
    %297 = vmatpush1.bf16.msra.mxu0 0
    %298 = vmatprep.subr.bf16.mxu0 0
    %299 = vmatpush1.bf16.msra.mxu0 0
    %300 = vmatprep.mubr.bf16.mxu0 0
    %301 = vmatmul.mubr.bf16.gmra.mrb[0].mxu0 %v266
    %v302 = vpop.f32.mrb[0].mxu0
    %v303 = vadd.f32 %v141, %v302
    %v304 = vpop.f32.mrb[0].mxu0
    %v305 = vpop.f32.mrb[0].mxu0
    %v306 = vpop.f32.mrb[0].mxu0
    %307 = vdwg.mxu0
    %v309 = vrot.slane %v303, 7
    %v312 = vadd.f32 %v126, %v309
    %v313 = vadd.f32 %v129, %v303
    %v314 = vxor.u32 %v312, 2147483648
    %v315 = vxor.u32 %v313, 2147483648
    %v316 = vmul.f32 %v314, 1.442695
    %v317 = vpow.pop %v316
    %v318 = vmul.f32 %v315, 1.442695
    %v319 = vpow.pop %v318
    %v320 = vadd.f32 %v317, 1.0
    %v321 = vadd.f32 %v319, 1.0
    %v322 = vrcp.pop %v320
    %v323 = vmul.f32 1.0, %v322
    %v324 = vrcp.pop %v321
    %v325 = vmul.f32 1.0, %v324
    %326 = vrot.lane.b32.xlu0 %v309, 64
    %v327 = vpop.permute.xlu0 %326
    %328 = vrot.lane.b32.xlu0 %v303, 64
    %v329 = vpop.permute.xlu0 %328
    %v332 = vmul.f32 %v323, %v327
    %v333 = vmul.f32 %v325, %v329
    %336 = vrot.lane.b32.xlu0 %v332, 64
    %v337 = vpop.permute.xlu0 %336
    %338 = vrot.lane.b32.xlu0 %v333, 64
    %v339 = vpop.permute.xlu0 %338
    %v342 = vadd.f32 %v126, %v337
    %v343 = vadd.f32 %v129, %v339
    %v344 = vtanh.pop %v342
    %v345 = vtanh.pop %v343
    %v346 = vsub.f32 1.0, %v323
    %v347 = vsub.f32 1.0, %v325
    %350 = vrot.lane.b32.xlu0 %v344, 96
    %v351 = vpop.permute.xlu0 %350
    %352 = vrot.lane.b32.xlu0 %v345, 96
    %v353 = vpop.permute.xlu0 %352
    %v356 = vmul.f32 %v346, %v351
    %v357 = vmul.f32 %v347, %v353
    %v360 = vrot.slane %v251, 7
    %v361 = vrot.slane %v252, 7
    %v364 = vmul.f32 %v323, %v360
    %v365 = vmul.f32 %v325, %v361
    %v366 = vadd.f32 %v356, %v364
    %v367 = vadd.f32 %v357, %v365
    %v368 = vpack.c.bf16 %v366, %v366
    %v369 = vpack.c.bf16 %v367, %v367
    %v372 = vunpack.c.l.b16 %v368
    %v373 = vunpack.c.l.b16 %v369
    %v374 = vrot.slane %v372, 1
    %v375 = vsel %vm260, %v373, %v374
    %v376 = vpack.c.b16 %v375, %v375
    %377 = vrot.lane.b32.xlu0 %v376, 96
    %v378 = vpop.permute.xlu0 %377
    %v380 = vsel %vm155, %v378, 0
    %382 = vmatprep.subr.bf16.mxu0 0
    %383 = vmatpush1.bf16.msra.mxu0 %v151
    %384 = vmatprep.subr.bf16.mxu0 0
    %385 = vmatpush1.bf16.msra.mxu0 %v152
    %386 = vmatprep.subr.bf16.mxu0 0
    %387 = vmatpush1.bf16.msra.mxu0 0
    %388 = vmatprep.subr.bf16.mxu0 0
    %389 = vmatpush1.bf16.msra.mxu0 0
    %390 = vmatprep.subr.bf16.mxu0 0
    %391 = vmatpush1.bf16.msra.mxu0 0
    %392 = vmatprep.subr.bf16.mxu0 0
    %393 = vmatpush1.bf16.msra.mxu0 0
    %394 = vmatprep.subr.bf16.mxu0 0
    %395 = vmatpush1.bf16.msra.mxu0 0
    %396 = vmatprep.subr.bf16.mxu0 0
    %397 = vmatpush1.bf16.msra.mxu0 0
    %398 = vmatprep.subr.bf16.mxu0 0
    %399 = vmatpush1.bf16.msra.mxu0 0
    %400 = vmatprep.subr.bf16.mxu0 0
    %401 = vmatpush1.bf16.msra.mxu0 0
    %402 = vmatprep.subr.bf16.mxu0 0
    %403 = vmatpush1.bf16.msra.mxu0 0
    %404 = vmatprep.subr.bf16.mxu0 0
    %405 = vmatpush1.bf16.msra.mxu0 0
    %406 = vmatprep.subr.bf16.mxu0 0
    %407 = vmatpush1.bf16.msra.mxu0 0
    %408 = vmatprep.subr.bf16.mxu0 0
    %409 = vmatpush1.bf16.msra.mxu0 0
    %410 = vmatprep.subr.bf16.mxu0 0
    %411 = vmatpush1.bf16.msra.mxu0 0
    %412 = vmatprep.subr.bf16.mxu0 0
    %413 = vmatpush1.bf16.msra.mxu0 0
    %414 = vmatprep.mubr.bf16.mxu0 0
    %415 = vmatmul.mubr.bf16.gmra.mrb[0].mxu0 %v380
    %v416 = vpop.f32.mrb[0].mxu0
    %v417 = vadd.f32 %v141, %v416
    %v418 = vpop.f32.mrb[0].mxu0
    %v419 = vpop.f32.mrb[0].mxu0
    %v420 = vpop.f32.mrb[0].mxu0
    %421 = vdwg.mxu0
    %v423 = vrot.slane %v417, 6
    %v424 = vrot.slane %v417, 7
    %v427 = vadd.f32 %v126, %v423
    %v428 = vadd.f32 %v129, %v424
    %v429 = vxor.u32 %v427, 2147483648
    %v430 = vxor.u32 %v428, 2147483648
    %v431 = vmul.f32 %v429, 1.442695
    %v432 = vpow.pop %v431
    %v433 = vmul.f32 %v430, 1.442695
    %v434 = vpow.pop %v433
    %v435 = vadd.f32 %v432, 1.0
    %v436 = vadd.f32 %v434, 1.0
    %v437 = vrcp.pop %v435
    %v438 = vmul.f32 1.0, %v437
    %v439 = vrcp.pop %v436
    %v440 = vmul.f32 1.0, %v439
    %441 = vrot.lane.b32.xlu0 %v423, 64
    %v442 = vpop.permute.xlu0 %441
    %443 = vrot.lane.b32.xlu0 %v424, 64
    %v444 = vpop.permute.xlu0 %443
    %v447 = vmul.f32 %v438, %v442
    %v448 = vmul.f32 %v440, %v444
    %451 = vrot.lane.b32.xlu0 %v447, 64
    %v452 = vpop.permute.xlu0 %451
    %453 = vrot.lane.b32.xlu0 %v448, 64
    %v454 = vpop.permute.xlu0 %453
    %v457 = vadd.f32 %v126, %v452
    %v458 = vadd.f32 %v129, %v454
    %v459 = vtanh.pop %v457
    %v460 = vtanh.pop %v458
    %v461 = vsub.f32 1.0, %v438
    %v462 = vsub.f32 1.0, %v440
    %465 = vrot.lane.b32.xlu0 %v459, 96
    %v466 = vpop.permute.xlu0 %465
    %467 = vrot.lane.b32.xlu0 %v460, 96
    %v468 = vpop.permute.xlu0 %467
    %v471 = vmul.f32 %v461, %v466
    %v472 = vmul.f32 %v462, %v468
    %v475 = vrot.slane %v366, 7
    %v476 = vrot.slane %v367, 7
    %v479 = vmul.f32 %v438, %v475
    %v480 = vmul.f32 %v440, %v476
    %v481 = vadd.f32 %v471, %v479
    %v482 = vadd.f32 %v472, %v480
    %v483 = vpack.c.bf16 %v481, %v481
    %v484 = vpack.c.bf16 %v482, %v482
    %v487 = vunpack.c.l.b16 %v483
    %v488 = vunpack.c.l.b16 %v484
    %v489 = vrot.slane %v487, 2
    %v490 = vrot.slane %v488, 1
    %v491 = vsel %vm260, %v490, %v489
    %v492 = vpack.c.b16 %v491, %v491
    %493 = vrot.lane.b32.xlu0 %v492, 96
    %v494 = vpop.permute.xlu0 %493
    %v496 = vsel %vm155, %v494, 0
    %498 = vmatprep.subr.bf16.mxu0 0
    %499 = vmatpush1.bf16.msra.mxu0 %v151
    %500 = vmatprep.subr.bf16.mxu0 0
    %501 = vmatpush1.bf16.msra.mxu0 %v152
    %502 = vmatprep.subr.bf16.mxu0 0
    %503 = vmatpush1.bf16.msra.mxu0 0
    %504 = vmatprep.subr.bf16.mxu0 0
    %505 = vmatpush1.bf16.msra.mxu0 0
    %506 = vmatprep.subr.bf16.mxu0 0
    %507 = vmatpush1.bf16.msra.mxu0 0
    %508 = vmatprep.subr.bf16.mxu0 0
    %509 = vmatpush1.bf16.msra.mxu0 0
    %510 = vmatprep.subr.bf16.mxu0 0
    %511 = vmatpush1.bf16.msra.mxu0 0
    %512 = vmatprep.subr.bf16.mxu0 0
    %513 = vmatpush1.bf16.msra.mxu0 0
    %514 = vmatprep.subr.bf16.mxu0 0
    %515 = vmatpush1.bf16.msra.mxu0 0
    %516 = vmatprep.subr.bf16.mxu0 0
    %517 = vmatpush1.bf16.msra.mxu0 0
    %518 = vmatprep.subr.bf16.mxu0 0
    %519 = vmatpush1.bf16.msra.mxu0 0
    %520 = vmatprep.subr.bf16.mxu0 0
    %521 = vmatpush1.bf16.msra.mxu0 0
    %522 = vmatprep.subr.bf16.mxu0 0
    %523 = vmatpush1.bf16.msra.mxu0 0
    %524 = vmatprep.subr.bf16.mxu0 0
    %525 = vmatpush1.bf16.msra.mxu0 0
    %526 = vmatprep.subr.bf16.mxu0 0
    %527 = vmatpush1.bf16.msra.mxu0 0
    %528 = vmatprep.subr.bf16.mxu0 0
    %529 = vmatpush1.bf16.msra.mxu0 0
    %530 = vmatprep.mubr.bf16.mxu0 0
    %531 = vmatmul.mubr.bf16.gmra.mrb[0].mxu0 %v496
    %v532 = vpop.f32.mrb[0].mxu0
    %v533 = vadd.f32 %v141, %v532
    %v534 = vpop.f32.mrb[0].mxu0
    %v535 = vpop.f32.mrb[0].mxu0
    %v536 = vpop.f32.mrb[0].mxu0
    %537 = vdwg.mxu0
    %v539 = vrot.slane %v533, 5
    %v540 = vrot.slane %v533, 6
    %v543 = vadd.f32 %v126, %v539
    %v544 = vadd.f32 %v129, %v540
    %v545 = vxor.u32 %v543, 2147483648
    %v546 = vxor.u32 %v544, 2147483648
    %v547 = vmul.f32 %v545, 1.442695
    %v548 = vpow.pop %v547
    %v549 = vmul.f32 %v546, 1.442695
    %v550 = vpow.pop %v549
    %v551 = vadd.f32 %v548, 1.0
    %v552 = vadd.f32 %v550, 1.0
    %v553 = vrcp.pop %v551
    %v554 = vmul.f32 1.0, %v553
    %v555 = vrcp.pop %v552
    %v556 = vmul.f32 1.0, %v555
    %557 = vrot.lane.b32.xlu0 %v539, 64
    %v558 = vpop.permute.xlu0 %557
    %559 = vrot.lane.b32.xlu0 %v540, 64
    %v560 = vpop.permute.xlu0 %559
    %v563 = vmul.f32 %v554, %v558
    %v564 = vmul.f32 %v556, %v560
    %567 = vrot.lane.b32.xlu0 %v563, 64
    %v568 = vpop.permute.xlu0 %567
    %569 = vrot.lane.b32.xlu0 %v564, 64
    %v570 = vpop.permute.xlu0 %569
    %v573 = vadd.f32 %v126, %v568
    %v574 = vadd.f32 %v129, %v570
    %v575 = vtanh.pop %v573
    %v576 = vtanh.pop %v574
    %v577 = vsub.f32 1.0, %v554
    %v578 = vsub.f32 1.0, %v556
    %581 = vrot.lane.b32.xlu0 %v575, 96
    %v582 = vpop.permute.xlu0 %581
    %583 = vrot.lane.b32.xlu0 %v576, 96
    %v584 = vpop.permute.xlu0 %583
    %v587 = vmul.f32 %v577, %v582
    %v588 = vmul.f32 %v578, %v584
    %v591 = vrot.slane %v481, 7
    %v592 = vrot.slane %v482, 7
    %v595 = vmul.f32 %v554, %v591
    %v596 = vmul.f32 %v556, %v592
    %v597 = vadd.f32 %v587, %v595
    %v598 = vadd.f32 %v588, %v596
    %v599 = vpack.c.bf16 %v597, %v597
    %v600 = vpack.c.bf16 %v598, %v598
    %v603 = vunpack.c.l.b16 %v599
    %v604 = vunpack.c.l.b16 %v600
    %v605 = vrot.slane %v603, 3
    %v606 = vrot.slane %v604, 2
    %v607 = vsel %vm260, %v606, %v605
    %v608 = vpack.c.b16 %v607, %v607
    %609 = vrot.lane.b32.xlu0 %v608, 96
    %v610 = vpop.permute.xlu0 %609
    %v612 = vsel %vm155, %v610, 0
    %614 = vmatprep.subr.bf16.mxu0 0
    %615 = vmatpush1.bf16.msra.mxu0 %v151
    %616 = vmatprep.subr.bf16.mxu0 0
    %617 = vmatpush1.bf16.msra.mxu0 %v152
    %618 = vmatprep.subr.bf16.mxu0 0
    %619 = vmatpush1.bf16.msra.mxu0 0
    %620 = vmatprep.subr.bf16.mxu0 0
    %621 = vmatpush1.bf16.msra.mxu0 0
    %622 = vmatprep.subr.bf16.mxu0 0
    %623 = vmatpush1.bf16.msra.mxu0 0
    %624 = vmatprep.subr.bf16.mxu0 0
    %625 = vmatpush1.bf16.msra.mxu0 0
    %626 = vmatprep.subr.bf16.mxu0 0
    %627 = vmatpush1.bf16.msra.mxu0 0
    %628 = vmatprep.subr.bf16.mxu0 0
    %629 = vmatpush1.bf16.msra.mxu0 0
    %630 = vmatprep.subr.bf16.mxu0 0
    %631 = vmatpush1.bf16.msra.mxu0 0
    %632 = vmatprep.subr.bf16.mxu0 0
    %633 = vmatpush1.bf16.msra.mxu0 0
    %634 = vmatprep.subr.bf16.mxu0 0
    %635 = vmatpush1.bf16.msra.mxu0 0
    %636 = vmatprep.subr.bf16.mxu0 0
    %637 = vmatpush1.bf16.msra.mxu0 0
    %638 = vmatprep.subr.bf16.mxu0 0
    %639 = vmatpush1.bf16.msra.mxu0 0
    %640 = vmatprep.subr.bf16.mxu0 0
    %641 = vmatpush1.bf16.msra.mxu0 0
    %642 = vmatprep.subr.bf16.mxu0 0
    %643 = vmatpush1.bf16.msra.mxu0 0
    %644 = vmatprep.subr.bf16.mxu0 0
    %645 = vmatpush1.bf16.msra.mxu0 0
    %646 = vmatprep.mubr.bf16.mxu0 0
    %647 = vmatmul.mubr.bf16.gmra.mrb[0].mxu0 %v612
    %v648 = vpop.f32.mrb[0].mxu0
    %v649 = vadd.f32 %v141, %v648
    %v650 = vpop.f32.mrb[0].mxu0
    %v651 = vpop.f32.mrb[0].mxu0
    %v652 = vpop.f32.mrb[0].mxu0
    %653 = vdwg.mxu0
    %v655 = vrot.slane %v649, 4
    %v656 = vrot.slane %v649, 5
    %v659 = vadd.f32 %v126, %v655
    %v660 = vadd.f32 %v129, %v656
    %v661 = vxor.u32 %v659, 2147483648
    %v662 = vxor.u32 %v660, 2147483648
    %v663 = vmul.f32 %v661, 1.442695
    %v664 = vpow.pop %v663
    %v665 = vmul.f32 %v662, 1.442695
    %v666 = vpow.pop %v665
    %v667 = vadd.f32 %v664, 1.0
    %v668 = vadd.f32 %v666, 1.0
    %v669 = vrcp.pop %v667
    %v670 = vmul.f32 1.0, %v669
    %v671 = vrcp.pop %v668
    %v672 = vmul.f32 1.0, %v671
    %673 = vrot.lane.b32.xlu0 %v655, 64
    %v674 = vpop.permute.xlu0 %673
    %675 = vrot.lane.b32.xlu0 %v656, 64
    %v676 = vpop.permute.xlu0 %675
    %v679 = vmul.f32 %v670, %v674
    %v680 = vmul.f32 %v672, %v676
    %683 = vrot.lane.b32.xlu0 %v679, 64
    %v684 = vpop.permute.xlu0 %683
    %685 = vrot.lane.b32.xlu0 %v680, 64
    %v686 = vpop.permute.xlu0 %685
    %v689 = vadd.f32 %v126, %v684
    %v690 = vadd.f32 %v129, %v686
    %v691 = vtanh.pop %v689
    %v692 = vtanh.pop %v690
    %v693 = vsub.f32 1.0, %v670
    %v694 = vsub.f32 1.0, %v672
    %697 = vrot.lane.b32.xlu0 %v691, 96
    %v698 = vpop.permute.xlu0 %697
    %699 = vrot.lane.b32.xlu0 %v692, 96
    %v700 = vpop.permute.xlu0 %699
    %v703 = vmul.f32 %v693, %v698
    %v704 = vmul.f32 %v694, %v700
    %v707 = vrot.slane %v597, 7
    %v708 = vrot.slane %v598, 7
    %v711 = vmul.f32 %v670, %v707
    %v712 = vmul.f32 %v672, %v708
    %v713 = vadd.f32 %v703, %v711
    %v714 = vadd.f32 %v704, %v712
    %v715 = vpack.c.bf16 %v713, %v713
    %v716 = vpack.c.bf16 %v714, %v714
    %v719 = vunpack.c.l.b16 %v715
    %v720 = vunpack.c.l.b16 %v716
    %v721 = vrot.slane %v719, 4
    %v722 = vrot.slane %v720, 3
    %v723 = vsel %vm260, %v722, %v721
    %v724 = vpack.c.b16 %v723, %v723
    %725 = vrot.lane.b32.xlu0 %v724, 96
    %v726 = vpop.permute.xlu0 %725
    %v728 = vsel %vm155, %v726, 0
    %730 = vmatprep.subr.bf16.mxu0 0
    %731 = vmatpush1.bf16.msra.mxu0 %v151
    %732 = vmatprep.subr.bf16.mxu0 0
    %733 = vmatpush1.bf16.msra.mxu0 %v152
    %734 = vmatprep.subr.bf16.mxu0 0
    %735 = vmatpush1.bf16.msra.mxu0 0
    %736 = vmatprep.subr.bf16.mxu0 0
    %737 = vmatpush1.bf16.msra.mxu0 0
    %738 = vmatprep.subr.bf16.mxu0 0
    %739 = vmatpush1.bf16.msra.mxu0 0
    %740 = vmatprep.subr.bf16.mxu0 0
    %741 = vmatpush1.bf16.msra.mxu0 0
    %742 = vmatprep.subr.bf16.mxu0 0
    %743 = vmatpush1.bf16.msra.mxu0 0
    %744 = vmatprep.subr.bf16.mxu0 0
    %745 = vmatpush1.bf16.msra.mxu0 0
    %746 = vmatprep.subr.bf16.mxu0 0
    %747 = vmatpush1.bf16.msra.mxu0 0
    %748 = vmatprep.subr.bf16.mxu0 0
    %749 = vmatpush1.bf16.msra.mxu0 0
    %750 = vmatprep.subr.bf16.mxu0 0
    %751 = vmatpush1.bf16.msra.mxu0 0
    %752 = vmatprep.subr.bf16.mxu0 0
    %753 = vmatpush1.bf16.msra.mxu0 0
    %754 = vmatprep.subr.bf16.mxu0 0
    %755 = vmatpush1.bf16.msra.mxu0 0
    %756 = vmatprep.subr.bf16.mxu0 0
    %757 = vmatpush1.bf16.msra.mxu0 0
    %758 = vmatprep.subr.bf16.mxu0 0
    %759 = vmatpush1.bf16.msra.mxu0 0
    %760 = vmatprep.subr.bf16.mxu0 0
    %761 = vmatpush1.bf16.msra.mxu0 0
    %762 = vmatprep.mubr.bf16.mxu0 0
    %763 = vmatmul.mubr.bf16.gmra.mrb[0].mxu0 %v728
    %v764 = vpop.f32.mrb[0].mxu0
    %v765 = vadd.f32 %v141, %v764
    %v766 = vpop.f32.mrb[0].mxu0
    %v767 = vpop.f32.mrb[0].mxu0
    %v768 = vpop.f32.mrb[0].mxu0
    %769 = vdwg.mxu0
    %v771 = vrot.slane %v765, 3
    %v772 = vrot.slane %v765, 4
    %v775 = vadd.f32 %v126, %v771
    %v776 = vadd.f32 %v129, %v772
    %v777 = vxor.u32 %v775, 2147483648
    %v778 = vxor.u32 %v776, 2147483648
    %v779 = vmul.f32 %v777, 1.442695
    %v780 = vpow.pop %v779
    %v781 = vmul.f32 %v778, 1.442695
    %v782 = vpow.pop %v781
    %v783 = vadd.f32 %v780, 1.0
    %v784 = vadd.f32 %v782, 1.0
    %v785 = vrcp.pop %v783
    %v786 = vmul.f32 1.0, %v785
    %v787 = vrcp.pop %v784
    %v788 = vmul.f32 1.0, %v787
    %789 = vrot.lane.b32.xlu0 %v771, 64
    %v790 = vpop.permute.xlu0 %789
    %791 = vrot.lane.b32.xlu0 %v772, 64
    %v792 = vpop.permute.xlu0 %791
    %v795 = vmul.f32 %v786, %v790
    %v796 = vmul.f32 %v788, %v792
    %799 = vrot.lane.b32.xlu0 %v795, 64
    %v800 = vpop.permute.xlu0 %799
    %801 = vrot.lane.b32.xlu0 %v796, 64
    %v802 = vpop.permute.xlu0 %801
    %v805 = vadd.f32 %v126, %v800
    %v806 = vadd.f32 %v129, %v802
    %v807 = vtanh.pop %v805
    %v808 = vtanh.pop %v806
    %v809 = vsub.f32 1.0, %v786
    %v810 = vsub.f32 1.0, %v788
    %813 = vrot.lane.b32.xlu0 %v807, 96
    %v814 = vpop.permute.xlu0 %813
    %815 = vrot.lane.b32.xlu0 %v808, 96
    %v816 = vpop.permute.xlu0 %815
    %v819 = vmul.f32 %v809, %v814
    %v820 = vmul.f32 %v810, %v816
    %v823 = vrot.slane %v713, 7
    %v824 = vrot.slane %v714, 7
    %v827 = vmul.f32 %v786, %v823
    %v828 = vmul.f32 %v788, %v824
    %v829 = vadd.f32 %v819, %v827
    %v830 = vadd.f32 %v820, %v828
    %v831 = vpack.c.bf16 %v829, %v829
    %v832 = vpack.c.bf16 %v830, %v830
    %v835 = vunpack.c.l.b16 %v831
    %v836 = vunpack.c.l.b16 %v832
    %v837 = vrot.slane %v835, 5
    %v838 = vrot.slane %v836, 4
    %v839 = vsel %vm260, %v838, %v837
    %v840 = vpack.c.b16 %v839, %v839
    %841 = vrot.lane.b32.xlu0 %v840, 96
    %v842 = vpop.permute.xlu0 %841
    %v844 = vsel %vm155, %v842, 0
    %846 = vmatprep.subr.bf16.mxu0 0
    %847 = vmatpush1.bf16.msra.mxu0 %v151
    %848 = vmatprep.subr.bf16.mxu0 0
    %849 = vmatpush1.bf16.msra.mxu0 %v152
    %850 = vmatprep.subr.bf16.mxu0 0
    %851 = vmatpush1.bf16.msra.mxu0 0
    %852 = vmatprep.subr.bf16.mxu0 0
    %853 = vmatpush1.bf16.msra.mxu0 0
    %854 = vmatprep.subr.bf16.mxu0 0
    %855 = vmatpush1.bf16.msra.mxu0 0
    %856 = vmatprep.subr.bf16.mxu0 0
    %857 = vmatpush1.bf16.msra.mxu0 0
    %858 = vmatprep.subr.bf16.mxu0 0
    %859 = vmatpush1.bf16.msra.mxu0 0
    %860 = vmatprep.subr.bf16.mxu0 0
    %861 = vmatpush1.bf16.msra.mxu0 0
    %862 = vmatprep.subr.bf16.mxu0 0
    %863 = vmatpush1.bf16.msra.mxu0 0
    %864 = vmatprep.subr.bf16.mxu0 0
    %865 = vmatpush1.bf16.msra.mxu0 0
    %866 = vmatprep.subr.bf16.mxu0 0
    %867 = vmatpush1.bf16.msra.mxu0 0
    %868 = vmatprep.subr.bf16.mxu0 0
    %869 = vmatpush1.bf16.msra.mxu0 0
    %870 = vmatprep.subr.bf16.mxu0 0
    %871 = vmatpush1.bf16.msra.mxu0 0
    %872 = vmatprep.subr.bf16.mxu0 0
    %873 = vmatpush1.bf16.msra.mxu0 0
    %874 = vmatprep.subr.bf16.mxu0 0
    %875 = vmatpush1.bf16.msra.mxu0 0
    %876 = vmatprep.subr.bf16.mxu0 0
    %877 = vmatpush1.bf16.msra.mxu0 0
    %878 = vmatprep.mubr.bf16.mxu0 0
    %879 = vmatmul.mubr.bf16.gmra.mrb[0].mxu0 %v844
    %v880 = vpop.f32.mrb[0].mxu0
    %v881 = vadd.f32 %v141, %v880
    %v882 = vpop.f32.mrb[0].mxu0
    %v883 = vpop.f32.mrb[0].mxu0
    %v884 = vpop.f32.mrb[0].mxu0
    %885 = vdwg.mxu0
    %v887 = vrot.slane %v881, 2
    %v888 = vrot.slane %v881, 3
    %v891 = vadd.f32 %v126, %v887
    %v892 = vadd.f32 %v129, %v888
    %v893 = vxor.u32 %v891, 2147483648
    %v894 = vxor.u32 %v892, 2147483648
    %v895 = vmul.f32 %v893, 1.442695
    %v896 = vpow.pop %v895
    %v897 = vmul.f32 %v894, 1.442695
    %v898 = vpow.pop %v897
    %v899 = vadd.f32 %v896, 1.0
    %v900 = vadd.f32 %v898, 1.0
    %v901 = vrcp.pop %v899
    %v902 = vmul.f32 1.0, %v901
    %v903 = vrcp.pop %v900
    %v904 = vmul.f32 1.0, %v903
    %905 = vrot.lane.b32.xlu0 %v887, 64
    %v906 = vpop.permute.xlu0 %905
    %907 = vrot.lane.b32.xlu0 %v888, 64
    %v908 = vpop.permute.xlu0 %907
    %v911 = vmul.f32 %v902, %v906
    %v912 = vmul.f32 %v904, %v908
    %915 = vrot.lane.b32.xlu0 %v911, 64
    %v916 = vpop.permute.xlu0 %915
    %917 = vrot.lane.b32.xlu0 %v912, 64
    %v918 = vpop.permute.xlu0 %917
    %v921 = vadd.f32 %v126, %v916
    %v922 = vadd.f32 %v129, %v918
    %v923 = vtanh.pop %v921
    %v924 = vtanh.pop %v922
    %v925 = vsub.f32 1.0, %v902
    %v926 = vsub.f32 1.0, %v904
    %929 = vrot.lane.b32.xlu0 %v923, 96
    %v930 = vpop.permute.xlu0 %929
    %931 = vrot.lane.b32.xlu0 %v924, 96
    %v932 = vpop.permute.xlu0 %931
    %v935 = vmul.f32 %v925, %v930
    %v936 = vmul.f32 %v926, %v932
    %v939 = vrot.slane %v829, 7
    %v940 = vrot.slane %v830, 7
    %v943 = vmul.f32 %v902, %v939
    %v944 = vmul.f32 %v904, %v940
    %v945 = vadd.f32 %v935, %v943
    %v946 = vadd.f32 %v936, %v944
    %v947 = vpack.c.bf16 %v945, %v945
    %v948 = vpack.c.bf16 %v946, %v946
    %v951 = vunpack.c.l.b16 %v947
    %v952 = vunpack.c.l.b16 %v948
    %v953 = vrot.slane %v951, 6
    %v954 = vrot.slane %v952, 5
    %v955 = vsel %vm260, %v954, %v953
    %v956 = vpack.c.b16 %v955, %v955
    %957 = vrot.lane.b32.xlu0 %v956, 96
    %v958 = vpop.permute.xlu0 %957
    %v960 = vsel %vm155, %v958, 0
    %962 = vmatprep.subr.bf16.mxu0 0
    %963 = vmatpush1.bf16.msra.mxu0 %v151
    %964 = vmatprep.subr.bf16.mxu0 0
    %965 = vmatpush1.bf16.msra.mxu0 %v152
    %966 = vmatprep.subr.bf16.mxu0 0
    %967 = vmatpush1.bf16.msra.mxu0 0
    %968 = vmatprep.subr.bf16.mxu0 0
    %969 = vmatpush1.bf16.msra.mxu0 0
    %970 = vmatprep.subr.bf16.mxu0 0
    %971 = vmatpush1.bf16.msra.mxu0 0
    %972 = vmatprep.subr.bf16.mxu0 0
    %973 = vmatpush1.bf16.msra.mxu0 0
    %974 = vmatprep.subr.bf16.mxu0 0
    %975 = vmatpush1.bf16.msra.mxu0 0
    %976 = vmatprep.subr.bf16.mxu0 0
    %977 = vmatpush1.bf16.msra.mxu0 0
    %978 = vmatprep.subr.bf16.mxu0 0
    %979 = vmatpush1.bf16.msra.mxu0 0
    %980 = vmatprep.subr.bf16.mxu0 0
    %981 = vmatpush1.bf16.msra.mxu0 0
    %982 = vmatprep.subr.bf16.mxu0 0
    %983 = vmatpush1.bf16.msra.mxu0 0
    %984 = vmatprep.subr.bf16.mxu0 0
    %985 = vmatpush1.bf16.msra.mxu0 0
    %986 = vmatprep.subr.bf16.mxu0 0
    %987 = vmatpush1.bf16.msra.mxu0 0
    %988 = vmatprep.subr.bf16.mxu0 0
    %989 = vmatpush1.bf16.msra.mxu0 0
    %990 = vmatprep.subr.bf16.mxu0 0
    %991 = vmatpush1.bf16.msra.mxu0 0
    %992 = vmatprep.subr.bf16.mxu0 0
    %993 = vmatpush1.bf16.msra.mxu0 0
    %994 = vmatprep.mubr.bf16.mxu0 0
    %995 = vmatmul.mubr.bf16.gmra.mrb[0].mxu0 %v960
    %v996 = vpop.f32.mrb[0].mxu0
    %v997 = vadd.f32 %v141, %v996
    %v998 = vpop.f32.mrb[0].mxu0
    %v999 = vpop.f32.mrb[0].mxu0
    %v1000 = vpop.f32.mrb[0].mxu0
    %1001 = vdwg.mxu0
    %v1003 = vrot.slane %v997, 1
    %v1004 = vrot.slane %v997, 2
    %v1007 = vadd.f32 %v126, %v1003
    %v1008 = vadd.f32 %v129, %v1004
    %v1009 = vxor.u32 %v1007, 2147483648
    %v1010 = vxor.u32 %v1008, 2147483648
    %v1011 = vmul.f32 %v1009, 1.442695
    %v1012 = vpow.pop %v1011
    %v1013 = vmul.f32 %v1010, 1.442695
    %v1014 = vpow.pop %v1013
    %v1015 = vadd.f32 %v1012, 1.0
    %v1016 = vadd.f32 %v1014, 1.0
    %v1017 = vrcp.pop %v1015
    %v1018 = vmul.f32 1.0, %v1017
    %v1019 = vrcp.pop %v1016
    %v1020 = vmul.f32 1.0, %v1019
    %1021 = vrot.lane.b32.xlu0 %v1003, 64
    %v1022 = vpop.permute.xlu0 %1021
    %1023 = vrot.lane.b32.xlu0 %v1004, 64
    %v1024 = vpop.permute.xlu0 %1023
    %v1027 = vmul.f32 %v1018, %v1022
    %v1028 = vmul.f32 %v1020, %v1024
    %1031 = vrot.lane.b32.xlu0 %v1027, 64
    %v1032 = vpop.permute.xlu0 %1031
    %1033 = vrot.lane.b32.xlu0 %v1028, 64
    %v1034 = vpop.permute.xlu0 %1033
    %v1037 = vadd.f32 %v126, %v1032
    %v1038 = vadd.f32 %v129, %v1034
    %v1039 = vtanh.pop %v1037
    %v1040 = vtanh.pop %v1038
    %v1041 = vsub.f32 1.0, %v1018
    %v1042 = vsub.f32 1.0, %v1020
    %1045 = vrot.lane.b32.xlu0 %v1039, 96
    %v1046 = vpop.permute.xlu0 %1045
    %1047 = vrot.lane.b32.xlu0 %v1040, 96
    %v1048 = vpop.permute.xlu0 %1047
    %v1051 = vmul.f32 %v1041, %v1046
    %v1052 = vmul.f32 %v1042, %v1048
    %v1055 = vrot.slane %v945, 7
    %v1056 = vrot.slane %v946, 7
    %v1059 = vmul.f32 %v1018, %v1055
    %v1060 = vmul.f32 %v1020, %v1056
    %v1061 = vadd.f32 %v1051, %v1059
    %v1062 = vadd.f32 %v1052, %v1060
    %vm1063 = vcmask 1040384
    %v1064 = vsel %vm1063, %v251, %v366
    %v1065 = vsel %vm1063, %v252, %v367
    %v1066 = vsel %vm87, %v1064, %v481
    %v1067 = vsel %vm87, %v1065, %v482
    %vm1068 = vcmask 1042432
    %v1069 = vsel %vm1068, %v1066, %v597
    %v1070 = vsel %vm1068, %v1067, %v598
    %vm1071 = vcmask 1043456
    %v1072 = vsel %vm1071, %v1069, %v713
    %v1073 = vsel %vm1071, %v1070, %v714
    %vm1074 = vcmask 1044480
    %v1075 = vsel %vm1074, %v1072, %v829
    %v1076 = vsel %vm1074, %v1073, %v830
    %vm1077 = vcmask 1045504
    %v1078 = vsel %vm1077, %v1075, %v945
    %v1079 = vsel %vm1077, %v1076, %v946
    %vm1080 = vcmask 1046528
    %v1081 = vsel %vm1080, %v1078, %v1061
    %v1082 = vsel %vm1080, %v1079, %v1062
    %v1083 = vpack.c.bf16 %v1082, %v1081
    %v1084 = vld [vmem:[%s4] sm:$0xf]
    %v1085 = vld [vmem:[%s4 + $0x4] sm:$0xf]
    %v1086 = vld [vmem:[%s4 + $0x8] sm:$0xf]
    %v1087 = vld [vmem:[%s4 + $0xc] sm:$0xf]
    %1089 = vrot.lane.b32.xlu0 %v1083, 96
    %v1090 = vpop.permute.xlu0 %1089
    %v1095 = vunpack.c.l.b16 %v1084
    %v1096 = vunpack.c.l.b16 %v1085
    %v1097 = vunpack.c.l.b16 %v1086
    %v1098 = vunpack.c.l.b16 %v1087
    %v1099 = vpack.c.b16 %v1096, %v1095
    %v1100 = vpack.c.b16 %v1098, %v1097
    %v1104 = vsel %vm155, %v1090, 0
    %1106 = vmatprep.subr.bf16.mxu0 0
    %1107 = vmatpush1.bf16.msra.mxu0 %v1099
    %1108 = vmatprep.subr.bf16.mxu0 0
    %1109 = vmatpush1.bf16.msra.mxu0 %v1100
    %1110 = vmatprep.subr.bf16.mxu0 0
    %1111 = vmatpush1.bf16.msra.mxu0 0
    %1112 = vmatprep.subr.bf16.mxu0 0
    %1113 = vmatpush1.bf16.msra.mxu0 0
    %1114 = vmatprep.subr.bf16.mxu0 0
    %1115 = vmatpush1.bf16.msra.mxu0 0
    %1116 = vmatprep.subr.bf16.mxu0 0
    %1117 = vmatpush1.bf16.msra.mxu0 0
    %1118 = vmatprep.subr.bf16.mxu0 0
    %1119 = vmatpush1.bf16.msra.mxu0 0
    %1120 = vmatprep.subr.bf16.mxu0 0
    %1121 = vmatpush1.bf16.msra.mxu0 0
    %1122 = vmatprep.subr.bf16.mxu0 0
    %1123 = vmatpush1.bf16.msra.mxu0 0
    %1124 = vmatprep.subr.bf16.mxu0 0
    %1125 = vmatpush1.bf16.msra.mxu0 0
    %1126 = vmatprep.subr.bf16.mxu0 0
    %1127 = vmatpush1.bf16.msra.mxu0 0
    %1128 = vmatprep.subr.bf16.mxu0 0
    %1129 = vmatpush1.bf16.msra.mxu0 0
    %1130 = vmatprep.subr.bf16.mxu0 0
    %1131 = vmatpush1.bf16.msra.mxu0 0
    %1132 = vmatprep.subr.bf16.mxu0 0
    %1133 = vmatpush1.bf16.msra.mxu0 0
    %1134 = vmatprep.subr.bf16.mxu0 0
    %1135 = vmatpush1.bf16.msra.mxu0 0
    %1136 = vmatprep.subr.bf16.mxu0 0
    %1137 = vmatpush1.bf16.msra.mxu0 0
    %1138 = vmatprep.mubr.bf16.mxu0 0
    %1139 = vmatmul.mubr.bf16.gmra.mrb[0].mxu0 %v1104
    %v1140 = vpop.f32.mrb[0].mxu0
    %v1141 = vadd.f32 0.0, %v1140
    %v1142 = vpop.f32.mrb[0].mxu0
    %v1143 = vpop.f32.mrb[0].mxu0
    %v1144 = vadd.f32 0.0, %v1143
    %v1145 = vpop.f32.mrb[0].mxu0
    %1146 = vdwg.mxu0
    %v1147 = vld [vmem:[%s5] sm:$0x1]
    %v1149 = vlaneseq
    %v1150 = vshrl.u32 %v1149, 7
    %v1151 = vsub.s32 0, %v1150
    %v1152 = vrot.slane %v1147, %v1151
    %v1154 = vld [vmem:[%s7] sm:$0x1]
    %v1156 = vlaneseq
    %v1157 = vshrl.u32 %v1156, 7
    %v1158 = vsub.s32 0, %v1157
    %v1159 = vrot.slane %v1154, %v1158
    %v1160 = vld [vmem:[%s10] sm:$0x1]
    %v1162 = vlaneseq
    %v1163 = vshrl.u32 %v1162, 7
    %v1164 = vsub.s32 0, %v1163
    %v1165 = vrot.slane %v1160, %v1164
    %v1167 = vld [vmem:[%s6] sm:$0xf]
    %v1168 = vld [vmem:[%s6 + $0x4] sm:$0xf]
    %v1169 = vld [vmem:[%s6 + $0x8] sm:$0xf]
    %v1170 = vld [vmem:[%s6 + $0xc] sm:$0xf]
    %v1171 = vld [vmem:[%s9] sm:$0xf]
    %v1172 = vld [vmem:[%s9 + $0x4] sm:$0xf]
    %v1173 = vld [vmem:[%s9 + $0x8] sm:$0xf]
    %v1174 = vld [vmem:[%s9 + $0xc] sm:$0xf]
    %v1175 = vld [vmem:[%s8] sm:$0xf]
    %v1176 = vld [vmem:[%s8 + $0x4] sm:$0xf]
    %v1177 = vld [vmem:[%s8 + $0x8] sm:$0xf]
    %v1178 = vld [vmem:[%s8 + $0xc] sm:$0xf]
    %v1179 = vld [vmem:[%s8 + $0x10] sm:$0xf]
    %v1180 = vld [vmem:[%s8 + $0x14] sm:$0xf]
    %v1181 = vld [vmem:[%s8 + $0x18] sm:$0xf]
    %v1182 = vld [vmem:[%s8 + $0x1c] sm:$0xf]
    %v1183 = vld [vmem:[%s8 + $0x20] sm:$0xf]
    %v1184 = vld [vmem:[%s8 + $0x24] sm:$0xf]
    %v1185 = vld [vmem:[%s8 + $0x28] sm:$0xf]
    %v1186 = vld [vmem:[%s8 + $0x2c] sm:$0xf]
    %v1187 = vld [vmem:[%s8 + $0x30] sm:$0xf]
    %v1188 = vld [vmem:[%s8 + $0x34] sm:$0xf]
    %v1189 = vld [vmem:[%s8 + $0x38] sm:$0xf]
    %v1190 = vld [vmem:[%s8 + $0x3c] sm:$0xf]
    %vm1191 = vcmp.lt.s32.totalorder %v45, 24
    %v1193 = vshrl.u32 %v1175, 16
    %v1194 = vpack.i.b16 %v1193, %v1193
    %v1196 = vlaneseq
    %v1197 = vshrl.u32 %v1196, 7
    %v1198 = vsub.s32 0, %v1197
    %v1199 = vrot.slane %v1194, %v1198
    %v1200 = vunpack.c.l.bf16 %v1199
    %v1201 = vpack.c.bf16 %v1061, %v1061
    %v1202 = vpack.c.bf16 %v1062, %v1062
    %v1205 = vunpack.c.l.b16 %v1201
    %v1206 = vunpack.c.l.b16 %v1202
    %v1207 = vrot.slane %v1205, 7
    %v1208 = vrot.slane %v1206, 6
    %v1209 = vsel %vm260, %v1208, %v1207
    %v1210 = vpack.c.b16 %v1209, %v1209
    %1211 = vrot.lane.b32.xlu0 %v1210, 96
    %v1212 = vpop.permute.xlu0 %1211
    %v1217 = vunpack.c.l.b16 %v1167
    %v1218 = vunpack.c.l.b16 %v1168
    %v1219 = vunpack.c.l.b16 %v1169
    %v1220 = vunpack.c.l.b16 %v1170
    %v1221 = vpack.c.b16 %v1218, %v1217
    %v1222 = vpack.c.b16 %v1220, %v1219
    %v1226 = vsel %vm155, %v1212, 0
    %1228 = vmatprep.subr.bf16.mxu0 0
    %1229 = vmatpush1.bf16.msra.mxu0 %v1221
    %1230 = vmatprep.subr.bf16.mxu0 0
    %1231 = vmatpush1.bf16.msra.mxu0 %v1222
    %1232 = vmatprep.subr.bf16.mxu0 0
    %1233 = vmatpush1.bf16.msra.mxu0 0
    %1234 = vmatprep.subr.bf16.mxu0 0
    %1235 = vmatpush1.bf16.msra.mxu0 0
    %1236 = vmatprep.subr.bf16.mxu0 0
    %1237 = vmatpush1.bf16.msra.mxu0 0
    %1238 = vmatprep.subr.bf16.mxu0 0
    %1239 = vmatpush1.bf16.msra.mxu0 0
    %1240 = vmatprep.subr.bf16.mxu0 0
    %1241 = vmatpush1.bf16.msra.mxu0 0
    %1242 = vmatprep.subr.bf16.mxu0 0
    %1243 = vmatpush1.bf16.msra.mxu0 0
    %1244 = vmatprep.subr.bf16.mxu0 0
    %1245 = vmatpush1.bf16.msra.mxu0 0
    %1246 = vmatprep.subr.bf16.mxu0 0
    %1247 = vmatpush1.bf16.msra.mxu0 0
    %1248 = vmatprep.subr.bf16.mxu0 0
    %1249 = vmatpush1.bf16.msra.mxu0 0
    %1250 = vmatprep.subr.bf16.mxu0 0
    %1251 = vmatpush1.bf16.msra.mxu0 0
    %1252 = vmatprep.subr.bf16.mxu0 0
    %1253 = vmatpush1.bf16.msra.mxu0 0
    %1254 = vmatprep.subr.bf16.mxu0 0
    %1255 = vmatpush1.bf16.msra.mxu0 0
    %1256 = vmatprep.subr.bf16.mxu0 0
    %1257 = vmatpush1.bf16.msra.mxu0 0
    %1258 = vmatprep.subr.bf16.mxu0 0
    %1259 = vmatpush1.bf16.msra.mxu0 0
    %1260 = vmatprep.mubr.bf16.mxu0 0
    %1261 = vmatmul.mubr.bf16.gmra.mrb[0].mxu0 %v1226
    %v1262 = vpop.f32.mrb[0].mxu0
    %v1263 = vadd.f32 0.0, %v1262
    %v1264 = vpop.f32.mrb[0].mxu0
    %v1265 = vpop.f32.mrb[0].mxu0
    %v1266 = vpop.f32.mrb[0].mxu0
    %1267 = vdwg.mxu0
    %1268 = vrot.lane.b32.xlu0 %v1159, 32
    %v1269 = vpop.permute.xlu0 %1268
    %v1271 = vadd.f32 %v1263, %v1269
    %v1274 = vunpack.c.l.s4 1966171168
    %v1275 = vunpack.c.0.s8 %v1274
    %v1276 = vlaneseq
    %v1277 = vshrl.u32 %v1276, 7
    %v1278 = vsub.s32 %v1275, %v1277
    %v1279 = vrot.slane %v1263, %v1278
    %v1280 = vcombine.high %v1279, %v1279
    %v1282 = vunpack.c.l.s4 1966171168
    %v1283 = vunpack.c.0.s8 %v1282
    %v1284 = vlaneseq
    %v1285 = vshrl.u32 %v1284, 7
    %v1286 = vsub.s32 %v1283, %v1285
    %v1287 = vrot.slane %v1279, %v1286
    %v1289 = vunpack.c.l.s4 1966171168
    %v1290 = vunpack.c.0.s8 %v1289
    %v1291 = vlaneseq
    %v1292 = vshrl.u32 %v1291, 7
    %v1293 = vsub.s32 %v1290, %v1292
    %v1294 = vrot.slane %v1280, %v1293
    %v1295 = vlaneseq
    %v1296 = vshrl.u32 %v1295, 7
    %v1297 = vsub.s32 0, %v1296
    %v1298 = vrot.slane %v1287, %v1297
    %v1299 = vlaneseq
    %v1300 = vshrl.u32 %v1299, 7
    %v1301 = vsub.s32 0, %v1300
    %v1302 = vrot.slane %v1294, %v1301
    %v1305 = vadd.f32 %v1298, %v1141
    %v1306 = vadd.f32 %v1302, %v1144
    %v1307 = vtanh.pop %v1305
    %v1308 = vtanh.pop %v1306
    %v1309 = vmul.f32 %v1307, %v1152
    %v1310 = vmul.f32 %v1308, %v1152
    %v1311 = vsel %vm155, %v1309, 0.0
    %1312 = vadd.xlane.f32.xlu0 %v1311
    %v1313 = vpop.xlane.xlu0 %1312
    %v1314 = vsel %vm155, %v1310, 0.0
    %1315 = vadd.xlane.f32.xlu0 %v1314
    %v1316 = vpop.xlane.xlu0 %1315
    %v1319 = vlaneseq
    %v1320 = vshrl.u32 %v1319, 7
    %v1321 = vsub.s32 %v45, %v1320
    %v1322 = vrot.slane %v1313, %v1321
    %v1323 = vlaneseq
    %v1324 = vshrl.u32 %v1323, 7
    %v1325 = vsub.s32 %v45, %v1324
    %v1326 = vrot.slane %v1316, %v1325
    %v1327 = vsel %vm260, %v1326, %v1322
    %vm1329 = vcmask 58368
    %v1330 = vsel %vm1329, %v1327, -inf
    %1331 = vmax.xlane.f32.xlu0 %v1330
    %v1332 = vpop.xlane.xlu0 %1331
    %v1334 = vlaneseq
    %v1335 = vshrl.u32 %v1334, 7
    %v1336 = vsub.s32 0, %v1335
    %v1337 = vrot.slane %v1332, %v1336
    %v1338 = vlaneseq
    %v1339 = vshrl.u32 %v1338, 7
    %v1340 = vsub.s32 1, %v1339
    %v1341 = vrot.slane %v1332, %v1340
    %v1344 = vsub.f32 %v1313, %v1337
    %v1345 = vsub.f32 %v1316, %v1341
    %v1346 = vmul.f32 %v1344, 1.442695
    %v1347 = vpow.pop %v1346
    %v1348 = vmul.f32 %v1345, 1.442695
    %v1349 = vpow.pop %v1348
    %1352 = vset.pattern.permute.xlu0 0
    %1353 = vperm.xlu0 %1352, %v1347
    %v1354 = vpop.permute.xlu0 %1353
    %1355 = vset.pattern.permute.xlu0 0
    %1356 = vperm.xlu0 %1355, %v1349
    %v1357 = vpop.permute.xlu0 %1356
    %v1358 = vlaneseq
    %v1359 = vshrl.u32 %v1358, 7
    %v1360 = vsub.s32 %v45, %v1359
    %v1361 = vrot.slane %v1354, %v1360
    %v1362 = vlaneseq
    %v1363 = vshrl.u32 %v1362, 7
    %v1364 = vsub.s32 %v45, %v1363
    %v1365 = vrot.slane %v1357, %v1364
    %v1366 = vsel %vm260, %v1365, %v1361
    %v1368 = vsel %vm1329, %v1366, 0.0
    %1369 = vadd.xlane.f32.xlu0 %v1368
    %v1370 = vpop.xlane.xlu0 %1369
    %v1372 = vlaneseq
    %v1373 = vshrl.u32 %v1372, 7
    %v1374 = vsub.s32 0, %v1373
    %v1375 = vrot.slane %v1370, %v1374
    %v1376 = vlaneseq
    %v1377 = vshrl.u32 %v1376, 7
    %v1378 = vsub.s32 1, %v1377
    %v1379 = vrot.slane %v1370, %v1378
    %v1382 = vrcp.pop %v1375
    %v1383 = vmul.f32 %v1347, %v1382
    %v1384 = vrcp.pop %v1379
    %v1385 = vmul.f32 %v1349, %v1384
    %1387 = vset.pattern.permute.xlu0 0
    %1388 = vperm.xlu0 %1387, %v1383
    %v1389 = vpop.permute.xlu0 %1388
    %1392 = vset.pattern.permute.xlu0 0
    %1393 = vperm.xlu0 %1392, %v1385
    %v1394 = vpop.permute.xlu0 %1393
    %v1396 = vmul.f32 %v1389, %v1141
    %v1397 = vmul.f32 %v1394, %v1144
    %vm1398 = vcmask 1047808
    %v1399 = vsel %vm1398, %v1396, 0.0
    %v1400 = vrot.slane %v1399, 4
    %v1401 = vadd.f32 %v1399, %v1400
    %v1402 = vrot.slane %v1401, 2
    %v1403 = vadd.f32 %v1401, %v1402
    %v1404 = vrot.slane %v1403, 1
    %v1405 = vadd.f32 %v1403, %v1404
    %v1406 = vsel %vm1398, %v1397, 0.0
    %v1407 = vrot.slane %v1406, 4
    %v1408 = vadd.f32 %v1406, %v1407
    %v1409 = vrot.slane %v1408, 2
    %v1410 = vadd.f32 %v1408, %v1409
    %v1411 = vrot.slane %v1410, 1
    %v1412 = vadd.f32 %v1410, %v1411
    %v1415 = vsel %vm260, %v1412, %v1405
    %1416 = vrot.lane.b32.xlu0 %v1415, 96
    %v1417 = vpop.permute.xlu0 %1416
    %v1419 = vadd.f32 %v1200, %v1417
    %1421 = vrot.lane.b32.xlu0 %v1271, 96
    %v1422 = vpop.permute.xlu0 %1421
    %v1424 = vadd.f32 %v1419, %v1422
    %v1425 = vxor.u32 %v1424, 2147483648
    %v1426 = vmul.f32 %v1425, 1.442695
    %v1427 = vpow.pop %v1426
    %v1428 = vadd.f32 %v1427, 1.0
    %v1429 = vrcp.pop %v1428
    %v1430 = vmul.f32 1.0, %v1429
    %1431 = vrot.lane.b32.xlu0 %v1271, 32
    %v1432 = vpop.permute.xlu0 %1431
    %v1434 = vmul.f32 %v1430, %v1432
    %1436 = vrot.lane.b32.xlu0 %v1434, 64
    %v1437 = vpop.permute.xlu0 %1436
    %v1439 = vadd.f32 %v1419, %v1437
    %v1440 = vtanh.pop %v1439
    %v1441 = vsub.f32 1.0, %v1430
    %1443 = vrot.lane.b32.xlu0 %v1440, 96
    %v1444 = vpop.permute.xlu0 %1443
    %v1446 = vmul.f32 %v1441, %v1444
    %v1449 = vrot.slane %v1061, 7
    %v1450 = vrot.slane %v1062, 6
    %v1451 = vsel %vm260, %v1450, %v1449
    %v1453 = vmul.f32 %v1430, %v1451
    %v1454 = vadd.f32 %v1446, %v1453
    %v1455 = vpack.c.bf16 %v1454, %v1454
    %1457 = vrot.lane.b32.xlu0 %v1455, 96
    %v1458 = vpop.permute.xlu0 %1457
    %v1463 = vunpack.c.l.b16 %v1171
    %v1464 = vunpack.c.l.b16 %v1172
    %v1465 = vunpack.c.l.b16 %v1173
    %v1466 = vunpack.c.l.b16 %v1174
    %v1467 = vpack.c.b16 %v1464, %v1463
    %v1468 = vpack.c.b16 %v1466, %v1465
    %v1472 = vsel %vm155, %v1458, 0
    %1474 = vmatprep.subr.bf16.mxu0 0
    %1475 = vmatpush1.bf16.msra.mxu0 %v1467
    %1476 = vmatprep.subr.bf16.mxu0 0
    %1477 = vmatpush1.bf16.msra.mxu0 %v1468
    %1478 = vmatprep.subr.bf16.mxu0 0
    %1479 = vmatpush1.bf16.msra.mxu0 0
    %1480 = vmatprep.subr.bf16.mxu0 0
    %1481 = vmatpush1.bf16.msra.mxu0 0
    %1482 = vmatprep.subr.bf16.mxu0 0
    %1483 = vmatpush1.bf16.msra.mxu0 0
    %1484 = vmatprep.subr.bf16.mxu0 0
    %1485 = vmatpush1.bf16.msra.mxu0 0
    %1486 = vmatprep.subr.bf16.mxu0 0
    %1487 = vmatpush1.bf16.msra.mxu0 0
    %1488 = vmatprep.subr.bf16.mxu0 0
    %1489 = vmatpush1.bf16.msra.mxu0 0
    %1490 = vmatprep.subr.bf16.mxu0 0
    %1491 = vmatpush1.bf16.msra.mxu0 0
    %1492 = vmatprep.subr.bf16.mxu0 0
    %1493 = vmatpush1.bf16.msra.mxu0 0
    %1494 = vmatprep.subr.bf16.mxu0 0
    %1495 = vmatpush1.bf16.msra.mxu0 0
    %1496 = vmatprep.subr.bf16.mxu0 0
    %1497 = vmatpush1.bf16.msra.mxu0 0
    %1498 = vmatprep.subr.bf16.mxu0 0
    %1499 = vmatpush1.bf16.msra.mxu0 0
    %1500 = vmatprep.subr.bf16.mxu0 0
    %1501 = vmatpush1.bf16.msra.mxu0 0
    %1502 = vmatprep.subr.bf16.mxu0 0
    %1503 = vmatpush1.bf16.msra.mxu0 0
    %1504 = vmatprep.subr.bf16.mxu0 0
    %1505 = vmatpush1.bf16.msra.mxu0 0
    %1506 = vmatprep.mubr.bf16.mxu0 0
    %1507 = vmatmul.mubr.bf16.gmra.mrb[0].mxu0 %v1472
    %v1508 = vpop.f32.mrb[0].mxu0
    %v1509 = vadd.f32 %v1165, %v1508
    %v1510 = vpop.f32.mrb[0].mxu0
    %v1511 = vpop.f32.mrb[0].mxu0
    %v1512 = vpop.f32.mrb[0].mxu0
    %1513 = vdwg.mxu0
    %v1514 = vsel %vm1191, %v1509, -1e+30
    %v1515 = vsel %vm87, %v1514, -inf
    %1516 = vmax.xlane.f32.xlu0 %v1515
    %v1517 = vpop.xlane.xlu0 %1516
    %vm1518 = vcmp.eq.f32.partialorder %v1514, %v1517
    %v1519 = vsel %vm1518, %v45, 128
    %v1520 = vsel %vm87, %v1519, 2147483647
    %v1521 = vand.u32 %v1520, 65535
    %v1522 = vshra.s32 %v1520, 16
    %v1523 = vcvt.s32.f32 %v1521
    %v1524 = vcvt.s32.f32 %v1522
    %1525 = vmin.xlane.f32.xlu0 %v1524
    %v1526 = vpop.xlane.xlu0 %1525
    %vm1527 = vcmp.eq.f32.partialorder %v1524, %v1526
    %v1528 = vsel %vm1527, %v1523, inf
    %1529 = vmin.xlane.f32.xlu0 %v1528
    %v1530 = vpop.xlane.xlu0 %1529
    %v1531 = vcvt.f32.s32 %v1530
    %v1532 = vcvt.f32.s32 %v1526
    %v1533 = vshll.u32 %v1532, 16
    %v1534 = vadd.s32 %v1533, %v1531
    %vm1535 = vcmp.eq.s32.totalorder %v45, %v1534
    %v1536 = vsel %vm1535, 1.0, 0.0
    %v1537 = vpack.c.bf16 %v1536, %v1536
    %1538 = vmatprep.subr.bf16.mxu0 0
    %1539 = vmatpush1.bf16.msra.mxu0 %v1221
    %1540 = vmatprep.subr.bf16.mxu0 0
    %1541 = vmatpush1.bf16.msra.mxu0 %v1222
    %1542 = vmatprep.subr.bf16.mxu0 0
    %1543 = vmatpush1.bf16.msra.mxu0 0
    %1544 = vmatprep.subr.bf16.mxu0 0
    %1545 = vmatpush1.bf16.msra.mxu0 0
    %1546 = vmatprep.subr.bf16.mxu0 0
    %1547 = vmatpush1.bf16.msra.mxu0 0
    %1548 = vmatprep.subr.bf16.mxu0 0
    %1549 = vmatpush1.bf16.msra.mxu0 0
    %1550 = vmatprep.subr.bf16.mxu0 0
    %1551 = vmatpush1.bf16.msra.mxu0 0
    %1552 = vmatprep.subr.bf16.mxu0 0
    %1553 = vmatpush1.bf16.msra.mxu0 0
    %1554 = vmatprep.subr.bf16.mxu0 0
    %1555 = vmatpush1.bf16.msra.mxu0 0
    %1556 = vmatprep.subr.bf16.mxu0 0
    %1557 = vmatpush1.bf16.msra.mxu0 0
    %1558 = vmatprep.subr.bf16.mxu0 0
    %1559 = vmatpush1.bf16.msra.mxu0 0
    %1560 = vmatprep.subr.bf16.mxu0 0
    %1561 = vmatpush1.bf16.msra.mxu0 0
    %1562 = vmatprep.subr.bf16.mxu0 0
    %1563 = vmatpush1.bf16.msra.mxu0 0
    %1564 = vmatprep.subr.bf16.mxu0 0
    %1565 = vmatpush1.bf16.msra.mxu0 0
    %1566 = vmatprep.subr.bf16.mxu0 0
    %1567 = vmatpush1.bf16.msra.mxu0 0
    %1568 = vmatprep.subr.bf16.mxu0 0
    %1569 = vmatpush1.bf16.msra.mxu0 0
    %1570 = vmatprep.mubr.bf16.mxu0 0
    %1571 = vmatmul.mubr.bf16.gmra.mrb[0].mxu0 %v1472
    %v1572 = vpop.f32.mrb[0].mxu0
    %v1573 = vadd.f32 0.0, %v1572
    %v1574 = vpop.f32.mrb[0].mxu0
    %v1575 = vpop.f32.mrb[0].mxu0
    %v1576 = vpop.f32.mrb[0].mxu0
    %1577 = vdwg.mxu0
    %v1578 = vadd.f32 %v1573, %v1269
    %v1581 = vunpack.c.l.s4 1966171168
    %v1582 = vunpack.c.0.s8 %v1581
    %v1583 = vlaneseq
    %v1584 = vshrl.u32 %v1583, 7
    %v1585 = vsub.s32 %v1582, %v1584
    %v1586 = vrot.slane %v1573, %v1585
    %v1587 = vcombine.high %v1586, %v1586
    %v1589 = vunpack.c.l.s4 1966171168
    %v1590 = vunpack.c.0.s8 %v1589
    %v1591 = vlaneseq
    %v1592 = vshrl.u32 %v1591, 7
    %v1593 = vsub.s32 %v1590, %v1592
    %v1594 = vrot.slane %v1586, %v1593
    %v1596 = vunpack.c.l.s4 1966171168
    %v1597 = vunpack.c.0.s8 %v1596
    %v1598 = vlaneseq
    %v1599 = vshrl.u32 %v1598, 7
    %v1600 = vsub.s32 %v1597, %v1599
    %v1601 = vrot.slane %v1587, %v1600
    %v1602 = vlaneseq
    %v1603 = vshrl.u32 %v1602, 7
    %v1604 = vsub.s32 0, %v1603
    %v1605 = vrot.slane %v1594, %v1604
    %v1606 = vlaneseq
    %v1607 = vshrl.u32 %v1606, 7
    %v1608 = vsub.s32 0, %v1607
    %v1609 = vrot.slane %v1601, %v1608
    %v1612 = vadd.f32 %v1605, %v1141
    %v1613 = vadd.f32 %v1609, %v1144
    %v1614 = vtanh.pop %v1612
    %v1615 = vtanh.pop %v1613
    %v1616 = vmul.f32 %v1614, %v1152
    %v1617 = vmul.f32 %v1615, %v1152
    %v1618 = vsel %vm155, %v1616, 0.0
    %1619 = vadd.xlane.f32.xlu0 %v1618
    %v1620 = vpop.xlane.xlu0 %1619
    %v1621 = vsel %vm155, %v1617, 0.0
    %1622 = vadd.xlane.f32.xlu0 %v1621
    %v1623 = vpop.xlane.xlu0 %1622
    %v1626 = vlaneseq
    %v1627 = vshrl.u32 %v1626, 7
    %v1628 = vsub.s32 %v45, %v1627
    %v1629 = vrot.slane %v1620, %v1628
    %v1630 = vlaneseq
    %v1631 = vshrl.u32 %v1630, 7
    %v1632 = vsub.s32 %v45, %v1631
    %v1633 = vrot.slane %v1623, %v1632
    %v1634 = vsel %vm260, %v1633, %v1629
    %v1636 = vsel %vm1329, %v1634, -inf
    %1637 = vmax.xlane.f32.xlu0 %v1636
    %v1638 = vpop.xlane.xlu0 %1637
    %v1640 = vlaneseq
    %v1641 = vshrl.u32 %v1640, 7
    %v1642 = vsub.s32 0, %v1641
    %v1643 = vrot.slane %v1638, %v1642
    %v1644 = vlaneseq
    %v1645 = vshrl.u32 %v1644, 7
    %v1646 = vsub.s32 1, %v1645
    %v1647 = vrot.slane %v1638, %v1646
    %v1650 = vsub.f32 %v1620, %v1643
    %v1651 = vsub.f32 %v1623, %v1647
    %v1652 = vmul.f32 %v1650, 1.442695
    %v1653 = vpow.pop %v1652
    %v1654 = vmul.f32 %v1651, 1.442695
    %v1655 = vpow.pop %v1654
    %1658 = vset.pattern.permute.xlu0 0
    %1659 = vperm.xlu0 %1658, %v1653
    %v1660 = vpop.permute.xlu0 %1659
    %1661 = vset.pattern.permute.xlu0 0
    %1662 = vperm.xlu0 %1661, %v1655
    %v1663 = vpop.permute.xlu0 %1662
    %v1664 = vlaneseq
    %v1665 = vshrl.u32 %v1664, 7
    %v1666 = vsub.s32 %v45, %v1665
    %v1667 = vrot.slane %v1660, %v1666
    %v1668 = vlaneseq
    %v1669 = vshrl.u32 %v1668, 7
    %v1670 = vsub.s32 %v45, %v1669
    %v1671 = vrot.slane %v1663, %v1670
    %v1672 = vsel %vm260, %v1671, %v1667
    %v1674 = vsel %vm1329, %v1672, 0.0
    %1675 = vadd.xlane.f32.xlu0 %v1674
    %v1676 = vpop.xlane.xlu0 %1675
    %v1678 = vlaneseq
    %v1679 = vshrl.u32 %v1678, 7
    %v1680 = vsub.s32 0, %v1679
    %v1681 = vrot.slane %v1676, %v1680
    %v1682 = vlaneseq
    %v1683 = vshrl.u32 %v1682, 7
    %v1684 = vsub.s32 1, %v1683
    %v1685 = vrot.slane %v1676, %v1684
    %v1688 = vrcp.pop %v1681
    %v1689 = vmul.f32 %v1653, %v1688
    %v1690 = vrcp.pop %v1685
    %v1691 = vmul.f32 %v1655, %v1690
    %1693 = vset.pattern.permute.xlu0 0
    %1694 = vperm.xlu0 %1693, %v1689
    %v1695 = vpop.permute.xlu0 %1694
    %1698 = vset.pattern.permute.xlu0 0
    %1699 = vperm.xlu0 %1698, %v1691
    %v1700 = vpop.permute.xlu0 %1699
    %v1702 = vmul.f32 %v1695, %v1141
    %v1703 = vmul.f32 %v1700, %v1144
    %v1704 = vsel %vm1398, %v1702, 0.0
    %v1705 = vrot.slane %v1704, 4
    %v1706 = vadd.f32 %v1704, %v1705
    %v1707 = vrot.slane %v1706, 2
    %v1708 = vadd.f32 %v1706, %v1707
    %v1709 = vrot.slane %v1708, 1
    %v1710 = vadd.f32 %v1708, %v1709
    %v1711 = vsel %vm1398, %v1703, 0.0
    %v1712 = vrot.slane %v1711, 4
    %v1713 = vadd.f32 %v1711, %v1712
    %v1714 = vrot.slane %v1713, 2
    %v1715 = vadd.f32 %v1713, %v1714
    %v1716 = vrot.slane %v1715, 1
    %v1717 = vadd.f32 %v1715, %v1716
    %v1734 = vunpack.c.l.b16 %v1175
    %v1735 = vunpack.c.l.b16 %v1176
    %v1736 = vunpack.c.l.b16 %v1177
    %v1737 = vunpack.c.l.b16 %v1178
    %v1738 = vunpack.c.l.b16 %v1179
    %v1739 = vunpack.c.l.b16 %v1180
    %v1740 = vunpack.c.l.b16 %v1181
    %v1741 = vunpack.c.l.b16 %v1182
    %v1742 = vunpack.c.l.b16 %v1183
    %v1743 = vunpack.c.l.b16 %v1184
    %v1744 = vunpack.c.l.b16 %v1185
    %v1745 = vunpack.c.l.b16 %v1186
    %v1746 = vunpack.c.l.b16 %v1187
    %v1747 = vunpack.c.l.b16 %v1188
    %v1748 = vunpack.c.l.b16 %v1189
    %v1749 = vunpack.c.l.b16 %v1190
    %v1750 = vpack.c.b16 %v1735, %v1734
    %v1751 = vpack.c.b16 %v1737, %v1736
    %v1752 = vpack.c.b16 %v1739, %v1738
    %v1753 = vpack.c.b16 %v1741, %v1740
    %v1754 = vpack.c.b16 %v1743, %v1742
    %v1755 = vpack.c.b16 %v1745, %v1744
    %v1756 = vpack.c.b16 %v1747, %v1746
    %v1757 = vpack.c.b16 %v1749, %v1748
    %v1768 = vsel %vm260, %v1717, %v1710
    %1769 = vrot.lane.b32.xlu0 %v1768, 96
    %v1770 = vpop.permute.xlu0 %1769
    %1772 = vmatprep.subr.bf16.mxu0 0
    %1773 = vmatpush1.bf16.msra.mxu0 %v1750
    %1774 = vmatprep.subr.bf16.mxu0 0
    %1775 = vmatpush1.bf16.msra.mxu0 %v1751
    %1776 = vmatprep.subr.bf16.mxu0 0
    %1777 = vmatpush1.bf16.msra.mxu0 %v1752
    %1778 = vmatprep.subr.bf16.mxu0 0
    %1779 = vmatpush1.bf16.msra.mxu0 %v1753
    %1780 = vmatprep.subr.bf16.mxu0 0
    %1781 = vmatpush1.bf16.msra.mxu0 %v1754
    %1782 = vmatprep.subr.bf16.mxu0 0
    %1783 = vmatpush1.bf16.msra.mxu0 %v1755
    %1784 = vmatprep.subr.bf16.mxu0 0
    %1785 = vmatpush1.bf16.msra.mxu0 %v1756
    %1786 = vmatprep.subr.bf16.mxu0 0
    %1787 = vmatpush1.bf16.msra.mxu0 %v1757
    %1788 = vmatprep.subr.bf16.mxu0 0
    %1789 = vmatpush1.bf16.msra.mxu0 0
    %1790 = vmatprep.subr.bf16.mxu0 0
    %1791 = vmatpush1.bf16.msra.mxu0 0
    %1792 = vmatprep.subr.bf16.mxu0 0
    %1793 = vmatpush1.bf16.msra.mxu0 0
    %1794 = vmatprep.subr.bf16.mxu0 0
    %1795 = vmatpush1.bf16.msra.mxu0 0
    %1796 = vmatprep.subr.bf16.mxu0 0
    %1797 = vmatpush1.bf16.msra.mxu0 0
    %1798 = vmatprep.subr.bf16.mxu0 0
    %1799 = vmatpush1.bf16.msra.mxu0 0
    %1800 = vmatprep.subr.bf16.mxu0 0
    %1801 = vmatpush1.bf16.msra.mxu0 0
    %1802 = vmatprep.subr.bf16.mxu0 0
    %1803 = vmatpush1.bf16.msra.mxu0 0
    %1804 = vmatprep.mubr.bf16.mxu0 0
    %1805 = vmatmul.mubr.bf16.gmra.mrb[0].mxu0 %v1537
    %v1806 = vpop.f32.mrb[0].mxu0
    %v1807 = vadd.f32 %v1770, %v1806
    %v1808 = vpop.f32.mrb[0].mxu0
    %v1809 = vpop.f32.mrb[0].mxu0
    %v1810 = vpop.f32.mrb[0].mxu0
    %1811 = vdwg.mxu0
    %1813 = vrot.lane.b32.xlu0 %v1578, 96
    %v1814 = vpop.permute.xlu0 %1813
    %v1816 = vadd.f32 %v1807, %v1814
    %v1817 = vxor.u32 %v1816, 2147483648
    %v1818 = vmul.f32 %v1817, 1.442695
    %v1819 = vpow.pop %v1818
    %v1820 = vadd.f32 %v1819, 1.0
    %v1821 = vrcp.pop %v1820
    %v1822 = vmul.f32 1.0, %v1821
    %1823 = vrot.lane.b32.xlu0 %v1578, 32
    %v1824 = vpop.permute.xlu0 %1823
    %v1826 = vmul.f32 %v1822, %v1824
    %1828 = vrot.lane.b32.xlu0 %v1826, 64
    %v1829 = vpop.permute.xlu0 %1828
    %v1831 = vadd.f32 %v1807, %v1829
    %v1832 = vtanh.pop %v1831
    %v1833 = vsub.f32 1.0, %v1822
    %1835 = vrot.lane.b32.xlu0 %v1832, 96
    %v1836 = vpop.permute.xlu0 %1835
    %v1838 = vmul.f32 %v1833, %v1836
    %v1839 = vmul.f32 %v1822, %v1454
    %v1840 = vadd.f32 %v1838, %v1839
    %v1841 = vpack.c.bf16 %v1840, %v1840
    %1843 = vrot.lane.b32.xlu0 %v1841, 96
    %v1844 = vpop.permute.xlu0 %1843
    %v1846 = vsel %vm155, %v1844, 0
    %1848 = vmatprep.subr.bf16.mxu0 0
    %1849 = vmatpush1.bf16.msra.mxu0 %v1467
    %1850 = vmatprep.subr.bf16.mxu0 0
    %1851 = vmatpush1.bf16.msra.mxu0 %v1468
    %1852 = vmatprep.subr.bf16.mxu0 0
    %1853 = vmatpush1.bf16.msra.mxu0 0
    %1854 = vmatprep.subr.bf16.mxu0 0
    %1855 = vmatpush1.bf16.msra.mxu0 0
    %1856 = vmatprep.subr.bf16.mxu0 0
    %1857 = vmatpush1.bf16.msra.mxu0 0
    %1858 = vmatprep.subr.bf16.mxu0 0
    %1859 = vmatpush1.bf16.msra.mxu0 0
    %1860 = vmatprep.subr.bf16.mxu0 0
    %1861 = vmatpush1.bf16.msra.mxu0 0
    %1862 = vmatprep.subr.bf16.mxu0 0
    %1863 = vmatpush1.bf16.msra.mxu0 0
    %1864 = vmatprep.subr.bf16.mxu0 0
    %1865 = vmatpush1.bf16.msra.mxu0 0
    %1866 = vmatprep.subr.bf16.mxu0 0
    %1867 = vmatpush1.bf16.msra.mxu0 0
    %1868 = vmatprep.subr.bf16.mxu0 0
    %1869 = vmatpush1.bf16.msra.mxu0 0
    %1870 = vmatprep.subr.bf16.mxu0 0
    %1871 = vmatpush1.bf16.msra.mxu0 0
    %1872 = vmatprep.subr.bf16.mxu0 0
    %1873 = vmatpush1.bf16.msra.mxu0 0
    %1874 = vmatprep.subr.bf16.mxu0 0
    %1875 = vmatpush1.bf16.msra.mxu0 0
    %1876 = vmatprep.subr.bf16.mxu0 0
    %1877 = vmatpush1.bf16.msra.mxu0 0
    %1878 = vmatprep.subr.bf16.mxu0 0
    %1879 = vmatpush1.bf16.msra.mxu0 0
    %1880 = vmatprep.mubr.bf16.mxu0 0
    %1881 = vmatmul.mubr.bf16.gmra.mrb[0].mxu0 %v1846
    %v1882 = vpop.f32.mrb[0].mxu0
    %v1883 = vadd.f32 %v1165, %v1882
    %v1884 = vpop.f32.mrb[0].mxu0
    %v1885 = vpop.f32.mrb[0].mxu0
    %v1886 = vpop.f32.mrb[0].mxu0
    %1887 = vdwg.mxu0
    %v1888 = vsel %vm1191, %v1883, -1e+30
    %v1889 = vsel %vm87, %v1888, -inf
    %1890 = vmax.xlane.f32.xlu0 %v1889
    %v1891 = vpop.xlane.xlu0 %1890
    %vm1892 = vcmp.eq.f32.partialorder %v1888, %v1891
    %v1893 = vsel %vm1892, %v45, 128
    %v1894 = vsel %vm87, %v1893, 2147483647
    %v1895 = vand.u32 %v1894, 65535
    %v1896 = vshra.s32 %v1894, 16
    %v1897 = vcvt.s32.f32 %v1895
    %v1898 = vcvt.s32.f32 %v1896
    %1899 = vmin.xlane.f32.xlu0 %v1898
    %v1900 = vpop.xlane.xlu0 %1899
    %vm1901 = vcmp.eq.f32.partialorder %v1898, %v1900
    %v1902 = vsel %vm1901, %v1897, inf
    %1903 = vmin.xlane.f32.xlu0 %v1902
    %v1904 = vpop.xlane.xlu0 %1903
    %v1905 = vcvt.f32.s32 %v1904
    %v1906 = vcvt.f32.s32 %v1900
    %v1907 = vshll.u32 %v1906, 16
    %v1908 = vadd.s32 %v1907, %v1905
    %vm1909 = vcmp.eq.s32.totalorder %v45, %v1908
    %v1910 = vsel %vm1909, 1.0, 0.0
    %v1911 = vpack.c.bf16 %v1910, %v1910
    %1912 = vmatprep.subr.bf16.mxu0 0
    %1913 = vmatpush1.bf16.msra.mxu0 %v1221
    %1914 = vmatprep.subr.bf16.mxu0 0
    %1915 = vmatpush1.bf16.msra.mxu0 %v1222
    %1916 = vmatprep.subr.bf16.mxu0 0
    %1917 = vmatpush1.bf16.msra.mxu0 0
    %1918 = vmatprep.subr.bf16.mxu0 0
    %1919 = vmatpush1.bf16.msra.mxu0 0
    %1920 = vmatprep.subr.bf16.mxu0 0
    %1921 = vmatpush1.bf16.msra.mxu0 0
    %1922 = vmatprep.subr.bf16.mxu0 0
    %1923 = vmatpush1.bf16.msra.mxu0 0
    %1924 = vmatprep.subr.bf16.mxu0 0
    %1925 = vmatpush1.bf16.msra.mxu0 0
    %1926 = vmatprep.subr.bf16.mxu0 0
    %1927 = vmatpush1.bf16.msra.mxu0 0
    %1928 = vmatprep.subr.bf16.mxu0 0
    %1929 = vmatpush1.bf16.msra.mxu0 0
    %1930 = vmatprep.subr.bf16.mxu0 0
    %1931 = vmatpush1.bf16.msra.mxu0 0
    %1932 = vmatprep.subr.bf16.mxu0 0
    %1933 = vmatpush1.bf16.msra.mxu0 0
    %1934 = vmatprep.subr.bf16.mxu0 0
    %1935 = vmatpush1.bf16.msra.mxu0 0
    %1936 = vmatprep.subr.bf16.mxu0 0
    %1937 = vmatpush1.bf16.msra.mxu0 0
    %1938 = vmatprep.subr.bf16.mxu0 0
    %1939 = vmatpush1.bf16.msra.mxu0 0
    %1940 = vmatprep.subr.bf16.mxu0 0
    %1941 = vmatpush1.bf16.msra.mxu0 0
    %1942 = vmatprep.subr.bf16.mxu0 0
    %1943 = vmatpush1.bf16.msra.mxu0 0
    %1944 = vmatprep.mubr.bf16.mxu0 0
    %1945 = vmatmul.mubr.bf16.gmra.mrb[0].mxu0 %v1846
    %v1946 = vpop.f32.mrb[0].mxu0
    %v1947 = vadd.f32 0.0, %v1946
    %v1948 = vpop.f32.mrb[0].mxu0
    %v1949 = vpop.f32.mrb[0].mxu0
    %v1950 = vpop.f32.mrb[0].mxu0
    %1951 = vdwg.mxu0
    %v1952 = vadd.f32 %v1947, %v1269
    %v1955 = vunpack.c.l.s4 1966171168
    %v1956 = vunpack.c.0.s8 %v1955
    %v1957 = vlaneseq
    %v1958 = vshrl.u32 %v1957, 7
    %v1959 = vsub.s32 %v1956, %v1958
    %v1960 = vrot.slane %v1947, %v1959
    %v1961 = vcombine.high %v1960, %v1960
    %v1963 = vunpack.c.l.s4 1966171168
    %v1964 = vunpack.c.0.s8 %v1963
    %v1965 = vlaneseq
    %v1966 = vshrl.u32 %v1965, 7
    %v1967 = vsub.s32 %v1964, %v1966
    %v1968 = vrot.slane %v1960, %v1967
    %v1970 = vunpack.c.l.s4 1966171168
    %v1971 = vunpack.c.0.s8 %v1970
    %v1972 = vlaneseq
    %v1973 = vshrl.u32 %v1972, 7
    %v1974 = vsub.s32 %v1971, %v1973
    %v1975 = vrot.slane %v1961, %v1974
    %v1976 = vlaneseq
    %v1977 = vshrl.u32 %v1976, 7
    %v1978 = vsub.s32 0, %v1977
    %v1979 = vrot.slane %v1968, %v1978
    %v1980 = vlaneseq
    %v1981 = vshrl.u32 %v1980, 7
    %v1982 = vsub.s32 0, %v1981
    %v1983 = vrot.slane %v1975, %v1982
    %v1986 = vadd.f32 %v1979, %v1141
    %v1987 = vadd.f32 %v1983, %v1144
    %v1988 = vtanh.pop %v1986
    %v1989 = vtanh.pop %v1987
    %v1990 = vmul.f32 %v1988, %v1152
    %v1991 = vmul.f32 %v1989, %v1152
    %v1992 = vsel %vm155, %v1990, 0.0
    %1993 = vadd.xlane.f32.xlu0 %v1992
    %v1994 = vpop.xlane.xlu0 %1993
    %v1995 = vsel %vm155, %v1991, 0.0
    %1996 = vadd.xlane.f32.xlu0 %v1995
    %v1997 = vpop.xlane.xlu0 %1996
    %v2000 = vlaneseq
    %v2001 = vshrl.u32 %v2000, 7
    %v2002 = vsub.s32 %v45, %v2001
    %v2003 = vrot.slane %v1994, %v2002
    %v2004 = vlaneseq
    %v2005 = vshrl.u32 %v2004, 7
    %v2006 = vsub.s32 %v45, %v2005
    %v2007 = vrot.slane %v1997, %v2006
    %v2008 = vsel %vm260, %v2007, %v2003
    %v2010 = vsel %vm1329, %v2008, -inf
    %2011 = vmax.xlane.f32.xlu0 %v2010
    %v2012 = vpop.xlane.xlu0 %2011
    %v2014 = vlaneseq
    %v2015 = vshrl.u32 %v2014, 7
    %v2016 = vsub.s32 0, %v2015
    %v2017 = vrot.slane %v2012, %v2016
    %v2018 = vlaneseq
    %v2019 = vshrl.u32 %v2018, 7
    %v2020 = vsub.s32 1, %v2019
    %v2021 = vrot.slane %v2012, %v2020
    %v2024 = vsub.f32 %v1994, %v2017
    %v2025 = vsub.f32 %v1997, %v2021
    %v2026 = vmul.f32 %v2024, 1.442695
    %v2027 = vpow.pop %v2026
    %v2028 = vmul.f32 %v2025, 1.442695
    %v2029 = vpow.pop %v2028
    %2032 = vset.pattern.permute.xlu0 0
    %2033 = vperm.xlu0 %2032, %v2027
    %v2034 = vpop.permute.xlu0 %2033
    %2035 = vset.pattern.permute.xlu0 0
    %2036 = vperm.xlu0 %2035, %v2029
    %v2037 = vpop.permute.xlu0 %2036
    %v2038 = vlaneseq
    %v2039 = vshrl.u32 %v2038, 7
    %v2040 = vsub.s32 %v45, %v2039
    %v2041 = vrot.slane %v2034, %v2040
    %v2042 = vlaneseq
    %v2043 = vshrl.u32 %v2042, 7
    %v2044 = vsub.s32 %v45, %v2043
    %v2045 = vrot.slane %v2037, %v2044
    %v2046 = vsel %vm260, %v2045, %v2041
    %v2048 = vsel %vm1329, %v2046, 0.0
    %2049 = vadd.xlane.f32.xlu0 %v2048
    %v2050 = vpop.xlane.xlu0 %2049
    %v2052 = vlaneseq
    %v2053 = vshrl.u32 %v2052, 7
    %v2054 = vsub.s32 0, %v2053
    %v2055 = vrot.slane %v2050, %v2054
    %v2056 = vlaneseq
    %v2057 = vshrl.u32 %v2056, 7
    %v2058 = vsub.s32 1, %v2057
    %v2059 = vrot.slane %v2050, %v2058
    %v2062 = vrcp.pop %v2055
    %v2063 = vmul.f32 %v2027, %v2062
    %v2064 = vrcp.pop %v2059
    %v2065 = vmul.f32 %v2029, %v2064
    %2067 = vset.pattern.permute.xlu0 0
    %2068 = vperm.xlu0 %2067, %v2063
    %v2069 = vpop.permute.xlu0 %2068
    %2072 = vset.pattern.permute.xlu0 0
    %2073 = vperm.xlu0 %2072, %v2065
    %v2074 = vpop.permute.xlu0 %2073
    %v2076 = vmul.f32 %v2069, %v1141
    %v2077 = vmul.f32 %v2074, %v1144
    %v2078 = vsel %vm1398, %v2076, 0.0
    %v2079 = vrot.slane %v2078, 4
    %v2080 = vadd.f32 %v2078, %v2079
    %v2081 = vrot.slane %v2080, 2
    %v2082 = vadd.f32 %v2080, %v2081
    %v2083 = vrot.slane %v2082, 1
    %v2084 = vadd.f32 %v2082, %v2083
    %v2085 = vsel %vm1398, %v2077, 0.0
    %v2086 = vrot.slane %v2085, 4
    %v2087 = vadd.f32 %v2085, %v2086
    %v2088 = vrot.slane %v2087, 2
    %v2089 = vadd.f32 %v2087, %v2088
    %v2090 = vrot.slane %v2089, 1
    %v2091 = vadd.f32 %v2089, %v2090
    %v2094 = vsel %vm260, %v2091, %v2084
    %2095 = vrot.lane.b32.xlu0 %v2094, 96
    %v2096 = vpop.permute.xlu0 %2095
    %2098 = vmatprep.subr.bf16.mxu0 0
    %2099 = vmatpush1.bf16.msra.mxu0 %v1750
    %2100 = vmatprep.subr.bf16.mxu0 0
    %2101 = vmatpush1.bf16.msra.mxu0 %v1751
    %2102 = vmatprep.subr.bf16.mxu0 0
    %2103 = vmatpush1.bf16.msra.mxu0 %v1752
    %2104 = vmatprep.subr.bf16.mxu0 0
    %2105 = vmatpush1.bf16.msra.mxu0 %v1753
    %2106 = vmatprep.subr.bf16.mxu0 0
    %2107 = vmatpush1.bf16.msra.mxu0 %v1754
    %2108 = vmatprep.subr.bf16.mxu0 0
    %2109 = vmatpush1.bf16.msra.mxu0 %v1755
    %2110 = vmatprep.subr.bf16.mxu0 0
    %2111 = vmatpush1.bf16.msra.mxu0 %v1756
    %2112 = vmatprep.subr.bf16.mxu0 0
    %2113 = vmatpush1.bf16.msra.mxu0 %v1757
    %2114 = vmatprep.subr.bf16.mxu0 0
    %2115 = vmatpush1.bf16.msra.mxu0 0
    %2116 = vmatprep.subr.bf16.mxu0 0
    %2117 = vmatpush1.bf16.msra.mxu0 0
    %2118 = vmatprep.subr.bf16.mxu0 0
    %2119 = vmatpush1.bf16.msra.mxu0 0
    %2120 = vmatprep.subr.bf16.mxu0 0
    %2121 = vmatpush1.bf16.msra.mxu0 0
    %2122 = vmatprep.subr.bf16.mxu0 0
    %2123 = vmatpush1.bf16.msra.mxu0 0
    %2124 = vmatprep.subr.bf16.mxu0 0
    %2125 = vmatpush1.bf16.msra.mxu0 0
    %2126 = vmatprep.subr.bf16.mxu0 0
    %2127 = vmatpush1.bf16.msra.mxu0 0
    %2128 = vmatprep.subr.bf16.mxu0 0
    %2129 = vmatpush1.bf16.msra.mxu0 0
    %2130 = vmatprep.mubr.bf16.mxu0 0
    %2131 = vmatmul.mubr.bf16.gmra.mrb[0].mxu0 %v1911
    %v2132 = vpop.f32.mrb[0].mxu0
    %v2133 = vadd.f32 %v2096, %v2132
    %v2134 = vpop.f32.mrb[0].mxu0
    %v2135 = vpop.f32.mrb[0].mxu0
    %v2136 = vpop.f32.mrb[0].mxu0
    %2137 = vdwg.mxu0
    %2139 = vrot.lane.b32.xlu0 %v1952, 96
    %v2140 = vpop.permute.xlu0 %2139
    %v2142 = vadd.f32 %v2133, %v2140
    %v2143 = vxor.u32 %v2142, 2147483648
    %v2144 = vmul.f32 %v2143, 1.442695
    %v2145 = vpow.pop %v2144
    %v2146 = vadd.f32 %v2145, 1.0
    %v2147 = vrcp.pop %v2146
    %v2148 = vmul.f32 1.0, %v2147
    %2149 = vrot.lane.b32.xlu0 %v1952, 32
    %v2150 = vpop.permute.xlu0 %2149
    %v2152 = vmul.f32 %v2148, %v2150
    %2154 = vrot.lane.b32.xlu0 %v2152, 64
    %v2155 = vpop.permute.xlu0 %2154
    %v2157 = vadd.f32 %v2133, %v2155
    %v2158 = vtanh.pop %v2157
    %v2159 = vsub.f32 1.0, %v2148
    %2161 = vrot.lane.b32.xlu0 %v2158, 96
    %v2162 = vpop.permute.xlu0 %2161
    %v2164 = vmul.f32 %v2159, %v2162
    %v2165 = vmul.f32 %v2148, %v1840
    %v2166 = vadd.f32 %v2164, %v2165
    %v2167 = vpack.c.bf16 %v2166, %v2166
    %2169 = vrot.lane.b32.xlu0 %v2167, 96
    %v2170 = vpop.permute.xlu0 %2169
    %v2172 = vsel %vm155, %v2170, 0
    %2174 = vmatprep.subr.bf16.mxu0 0
    %2175 = vmatpush1.bf16.msra.mxu0 %v1467
    %2176 = vmatprep.subr.bf16.mxu0 0
    %2177 = vmatpush1.bf16.msra.mxu0 %v1468
    %2178 = vmatprep.subr.bf16.mxu0 0
    %2179 = vmatpush1.bf16.msra.mxu0 0
    %2180 = vmatprep.subr.bf16.mxu0 0
    %2181 = vmatpush1.bf16.msra.mxu0 0
    %2182 = vmatprep.subr.bf16.mxu0 0
    %2183 = vmatpush1.bf16.msra.mxu0 0
    %2184 = vmatprep.subr.bf16.mxu0 0
    %2185 = vmatpush1.bf16.msra.mxu0 0
    %2186 = vmatprep.subr.bf16.mxu0 0
    %2187 = vmatpush1.bf16.msra.mxu0 0
    %2188 = vmatprep.subr.bf16.mxu0 0
    %2189 = vmatpush1.bf16.msra.mxu0 0
    %2190 = vmatprep.subr.bf16.mxu0 0
    %2191 = vmatpush1.bf16.msra.mxu0 0
    %2192 = vmatprep.subr.bf16.mxu0 0
    %2193 = vmatpush1.bf16.msra.mxu0 0
    %2194 = vmatprep.subr.bf16.mxu0 0
    %2195 = vmatpush1.bf16.msra.mxu0 0
    %2196 = vmatprep.subr.bf16.mxu0 0
    %2197 = vmatpush1.bf16.msra.mxu0 0
    %2198 = vmatprep.subr.bf16.mxu0 0
    %2199 = vmatpush1.bf16.msra.mxu0 0
    %2200 = vmatprep.subr.bf16.mxu0 0
    %2201 = vmatpush1.bf16.msra.mxu0 0
    %2202 = vmatprep.subr.bf16.mxu0 0
    %2203 = vmatpush1.bf16.msra.mxu0 0
    %2204 = vmatprep.subr.bf16.mxu0 0
    %2205 = vmatpush1.bf16.msra.mxu0 0
    %2206 = vmatprep.mubr.bf16.mxu0 0
    %2207 = vmatmul.mubr.bf16.gmra.mrb[0].mxu0 %v2172
    %v2208 = vpop.f32.mrb[0].mxu0
    %v2209 = vadd.f32 %v1165, %v2208
    %v2210 = vpop.f32.mrb[0].mxu0
    %v2211 = vpop.f32.mrb[0].mxu0
    %v2212 = vpop.f32.mrb[0].mxu0
    %2213 = vdwg.mxu0
    %v2214 = vsel %vm1191, %v2209, -1e+30
    %v2215 = vsel %vm87, %v2214, -inf
    %2216 = vmax.xlane.f32.xlu0 %v2215
    %v2217 = vpop.xlane.xlu0 %2216
    %vm2218 = vcmp.eq.f32.partialorder %v2214, %v2217
    %v2219 = vsel %vm2218, %v45, 128
    %v2220 = vsel %vm87, %v2219, 2147483647
    %v2221 = vand.u32 %v2220, 65535
    %v2222 = vshra.s32 %v2220, 16
    %v2223 = vcvt.s32.f32 %v2221
    %v2224 = vcvt.s32.f32 %v2222
    %2225 = vmin.xlane.f32.xlu0 %v2224
    %v2226 = vpop.xlane.xlu0 %2225
    %vm2227 = vcmp.eq.f32.partialorder %v2224, %v2226
    %v2228 = vsel %vm2227, %v2223, inf
    %2229 = vmin.xlane.f32.xlu0 %v2228
    %v2230 = vpop.xlane.xlu0 %2229
    %v2231 = vcvt.f32.s32 %v2230
    %v2232 = vcvt.f32.s32 %v2226
    %v2233 = vshll.u32 %v2232, 16
    %v2234 = vadd.s32 %v2233, %v2231
    %vm2235 = vcmp.eq.s32.totalorder %v45, %v2234
    %v2236 = vsel %vm2235, 1.0, 0.0
    %v2237 = vpack.c.bf16 %v2236, %v2236
    %2238 = vmatprep.subr.bf16.mxu0 0
    %2239 = vmatpush1.bf16.msra.mxu0 %v1221
    %2240 = vmatprep.subr.bf16.mxu0 0
    %2241 = vmatpush1.bf16.msra.mxu0 %v1222
    %2242 = vmatprep.subr.bf16.mxu0 0
    %2243 = vmatpush1.bf16.msra.mxu0 0
    %2244 = vmatprep.subr.bf16.mxu0 0
    %2245 = vmatpush1.bf16.msra.mxu0 0
    %2246 = vmatprep.subr.bf16.mxu0 0
    %2247 = vmatpush1.bf16.msra.mxu0 0
    %2248 = vmatprep.subr.bf16.mxu0 0
    %2249 = vmatpush1.bf16.msra.mxu0 0
    %2250 = vmatprep.subr.bf16.mxu0 0
    %2251 = vmatpush1.bf16.msra.mxu0 0
    %2252 = vmatprep.subr.bf16.mxu0 0
    %2253 = vmatpush1.bf16.msra.mxu0 0
    %2254 = vmatprep.subr.bf16.mxu0 0
    %2255 = vmatpush1.bf16.msra.mxu0 0
    %2256 = vmatprep.subr.bf16.mxu0 0
    %2257 = vmatpush1.bf16.msra.mxu0 0
    %2258 = vmatprep.subr.bf16.mxu0 0
    %2259 = vmatpush1.bf16.msra.mxu0 0
    %2260 = vmatprep.subr.bf16.mxu0 0
    %2261 = vmatpush1.bf16.msra.mxu0 0
    %2262 = vmatprep.subr.bf16.mxu0 0
    %2263 = vmatpush1.bf16.msra.mxu0 0
    %2264 = vmatprep.subr.bf16.mxu0 0
    %2265 = vmatpush1.bf16.msra.mxu0 0
    %2266 = vmatprep.subr.bf16.mxu0 0
    %2267 = vmatpush1.bf16.msra.mxu0 0
    %2268 = vmatprep.subr.bf16.mxu0 0
    %2269 = vmatpush1.bf16.msra.mxu0 0
    %2270 = vmatprep.mubr.bf16.mxu0 0
    %2271 = vmatmul.mubr.bf16.gmra.mrb[0].mxu0 %v2172
    %v2272 = vpop.f32.mrb[0].mxu0
    %v2273 = vadd.f32 0.0, %v2272
    %v2274 = vpop.f32.mrb[0].mxu0
    %v2275 = vpop.f32.mrb[0].mxu0
    %v2276 = vpop.f32.mrb[0].mxu0
    %2277 = vdwg.mxu0
    %v2278 = vadd.f32 %v2273, %v1269
    %v2281 = vunpack.c.l.s4 1966171168
    %v2282 = vunpack.c.0.s8 %v2281
    %v2283 = vlaneseq
    %v2284 = vshrl.u32 %v2283, 7
    %v2285 = vsub.s32 %v2282, %v2284
    %v2286 = vrot.slane %v2273, %v2285
    %v2287 = vcombine.high %v2286, %v2286
    %v2289 = vunpack.c.l.s4 1966171168
    %v2290 = vunpack.c.0.s8 %v2289
    %v2291 = vlaneseq
    %v2292 = vshrl.u32 %v2291, 7
    %v2293 = vsub.s32 %v2290, %v2292
    %v2294 = vrot.slane %v2286, %v2293
    %v2296 = vunpack.c.l.s4 1966171168
    %v2297 = vunpack.c.0.s8 %v2296
    %v2298 = vlaneseq
    %v2299 = vshrl.u32 %v2298, 7
    %v2300 = vsub.s32 %v2297, %v2299
    %v2301 = vrot.slane %v2287, %v2300
    %v2302 = vlaneseq
    %v2303 = vshrl.u32 %v2302, 7
    %v2304 = vsub.s32 0, %v2303
    %v2305 = vrot.slane %v2294, %v2304
    %v2306 = vlaneseq
    %v2307 = vshrl.u32 %v2306, 7
    %v2308 = vsub.s32 0, %v2307
    %v2309 = vrot.slane %v2301, %v2308
    %v2312 = vadd.f32 %v2305, %v1141
    %v2313 = vadd.f32 %v2309, %v1144
    %v2314 = vtanh.pop %v2312
    %v2315 = vtanh.pop %v2313
    %v2316 = vmul.f32 %v2314, %v1152
    %v2317 = vmul.f32 %v2315, %v1152
    %v2318 = vsel %vm155, %v2316, 0.0
    %2319 = vadd.xlane.f32.xlu0 %v2318
    %v2320 = vpop.xlane.xlu0 %2319
    %v2321 = vsel %vm155, %v2317, 0.0
    %2322 = vadd.xlane.f32.xlu0 %v2321
    %v2323 = vpop.xlane.xlu0 %2322
    %v2326 = vlaneseq
    %v2327 = vshrl.u32 %v2326, 7
    %v2328 = vsub.s32 %v45, %v2327
    %v2329 = vrot.slane %v2320, %v2328
    %v2330 = vlaneseq
    %v2331 = vshrl.u32 %v2330, 7
    %v2332 = vsub.s32 %v45, %v2331
    %v2333 = vrot.slane %v2323, %v2332
    %v2334 = vsel %vm260, %v2333, %v2329
    %v2336 = vsel %vm1329, %v2334, -inf
    %2337 = vmax.xlane.f32.xlu0 %v2336
    %v2338 = vpop.xlane.xlu0 %2337
    %v2340 = vlaneseq
    %v2341 = vshrl.u32 %v2340, 7
    %v2342 = vsub.s32 0, %v2341
    %v2343 = vrot.slane %v2338, %v2342
    %v2344 = vlaneseq
    %v2345 = vshrl.u32 %v2344, 7
    %v2346 = vsub.s32 1, %v2345
    %v2347 = vrot.slane %v2338, %v2346
    %v2350 = vsub.f32 %v2320, %v2343
    %v2351 = vsub.f32 %v2323, %v2347
    %v2352 = vmul.f32 %v2350, 1.442695
    %v2353 = vpow.pop %v2352
    %v2354 = vmul.f32 %v2351, 1.442695
    %v2355 = vpow.pop %v2354
    %2358 = vset.pattern.permute.xlu0 0
    %2359 = vperm.xlu0 %2358, %v2353
    %v2360 = vpop.permute.xlu0 %2359
    %2361 = vset.pattern.permute.xlu0 0
    %2362 = vperm.xlu0 %2361, %v2355
    %v2363 = vpop.permute.xlu0 %2362
    %v2364 = vlaneseq
    %v2365 = vshrl.u32 %v2364, 7
    %v2366 = vsub.s32 %v45, %v2365
    %v2367 = vrot.slane %v2360, %v2366
    %v2368 = vlaneseq
    %v2369 = vshrl.u32 %v2368, 7
    %v2370 = vsub.s32 %v45, %v2369
    %v2371 = vrot.slane %v2363, %v2370
    %v2372 = vsel %vm260, %v2371, %v2367
    %v2374 = vsel %vm1329, %v2372, 0.0
    %2375 = vadd.xlane.f32.xlu0 %v2374
    %v2376 = vpop.xlane.xlu0 %2375
    %v2378 = vlaneseq
    %v2379 = vshrl.u32 %v2378, 7
    %v2380 = vsub.s32 0, %v2379
    %v2381 = vrot.slane %v2376, %v2380
    %v2382 = vlaneseq
    %v2383 = vshrl.u32 %v2382, 7
    %v2384 = vsub.s32 1, %v2383
    %v2385 = vrot.slane %v2376, %v2384
    %v2388 = vrcp.pop %v2381
    %v2389 = vmul.f32 %v2353, %v2388
    %v2390 = vrcp.pop %v2385
    %v2391 = vmul.f32 %v2355, %v2390
    %2393 = vset.pattern.permute.xlu0 0
    %2394 = vperm.xlu0 %2393, %v2389
    %v2395 = vpop.permute.xlu0 %2394
    %2398 = vset.pattern.permute.xlu0 0
    %2399 = vperm.xlu0 %2398, %v2391
    %v2400 = vpop.permute.xlu0 %2399
    %v2402 = vmul.f32 %v2395, %v1141
    %v2403 = vmul.f32 %v2400, %v1144
    %v2404 = vsel %vm1398, %v2402, 0.0
    %v2405 = vrot.slane %v2404, 4
    %v2406 = vadd.f32 %v2404, %v2405
    %v2407 = vrot.slane %v2406, 2
    %v2408 = vadd.f32 %v2406, %v2407
    %v2409 = vrot.slane %v2408, 1
    %v2410 = vadd.f32 %v2408, %v2409
    %v2411 = vsel %vm1398, %v2403, 0.0
    %v2412 = vrot.slane %v2411, 4
    %v2413 = vadd.f32 %v2411, %v2412
    %v2414 = vrot.slane %v2413, 2
    %v2415 = vadd.f32 %v2413, %v2414
    %v2416 = vrot.slane %v2415, 1
    %v2417 = vadd.f32 %v2415, %v2416
    %v2420 = vsel %vm260, %v2417, %v2410
    %2421 = vrot.lane.b32.xlu0 %v2420, 96
    %v2422 = vpop.permute.xlu0 %2421
    %2424 = vmatprep.subr.bf16.mxu0 0
    %2425 = vmatpush1.bf16.msra.mxu0 %v1750
    %2426 = vmatprep.subr.bf16.mxu0 0
    %2427 = vmatpush1.bf16.msra.mxu0 %v1751
    %2428 = vmatprep.subr.bf16.mxu0 0
    %2429 = vmatpush1.bf16.msra.mxu0 %v1752
    %2430 = vmatprep.subr.bf16.mxu0 0
    %2431 = vmatpush1.bf16.msra.mxu0 %v1753
    %2432 = vmatprep.subr.bf16.mxu0 0
    %2433 = vmatpush1.bf16.msra.mxu0 %v1754
    %2434 = vmatprep.subr.bf16.mxu0 0
    %2435 = vmatpush1.bf16.msra.mxu0 %v1755
    %2436 = vmatprep.subr.bf16.mxu0 0
    %2437 = vmatpush1.bf16.msra.mxu0 %v1756
    %2438 = vmatprep.subr.bf16.mxu0 0
    %2439 = vmatpush1.bf16.msra.mxu0 %v1757
    %2440 = vmatprep.subr.bf16.mxu0 0
    %2441 = vmatpush1.bf16.msra.mxu0 0
    %2442 = vmatprep.subr.bf16.mxu0 0
    %2443 = vmatpush1.bf16.msra.mxu0 0
    %2444 = vmatprep.subr.bf16.mxu0 0
    %2445 = vmatpush1.bf16.msra.mxu0 0
    %2446 = vmatprep.subr.bf16.mxu0 0
    %2447 = vmatpush1.bf16.msra.mxu0 0
    %2448 = vmatprep.subr.bf16.mxu0 0
    %2449 = vmatpush1.bf16.msra.mxu0 0
    %2450 = vmatprep.subr.bf16.mxu0 0
    %2451 = vmatpush1.bf16.msra.mxu0 0
    %2452 = vmatprep.subr.bf16.mxu0 0
    %2453 = vmatpush1.bf16.msra.mxu0 0
    %2454 = vmatprep.subr.bf16.mxu0 0
    %2455 = vmatpush1.bf16.msra.mxu0 0
    %2456 = vmatprep.mubr.bf16.mxu0 0
    %2457 = vmatmul.mubr.bf16.gmra.mrb[0].mxu0 %v2237
    %v2458 = vpop.f32.mrb[0].mxu0
    %v2459 = vadd.f32 %v2422, %v2458
    %v2460 = vpop.f32.mrb[0].mxu0
    %v2461 = vpop.f32.mrb[0].mxu0
    %v2462 = vpop.f32.mrb[0].mxu0
    %2463 = vdwg.mxu0
    %2465 = vrot.lane.b32.xlu0 %v2278, 96
    %v2466 = vpop.permute.xlu0 %2465
    %v2468 = vadd.f32 %v2459, %v2466
    %v2469 = vxor.u32 %v2468, 2147483648
    %v2470 = vmul.f32 %v2469, 1.442695
    %v2471 = vpow.pop %v2470
    %v2472 = vadd.f32 %v2471, 1.0
    %v2473 = vrcp.pop %v2472
    %v2474 = vmul.f32 1.0, %v2473
    %2475 = vrot.lane.b32.xlu0 %v2278, 32
    %v2476 = vpop.permute.xlu0 %2475
    %v2478 = vmul.f32 %v2474, %v2476
    %2480 = vrot.lane.b32.xlu0 %v2478, 64
    %v2481 = vpop.permute.xlu0 %2480
    %v2483 = vadd.f32 %v2459, %v2481
    %v2484 = vtanh.pop %v2483
    %v2485 = vsub.f32 1.0, %v2474
    %2487 = vrot.lane.b32.xlu0 %v2484, 96
    %v2488 = vpop.permute.xlu0 %2487
    %v2490 = vmul.f32 %v2485, %v2488
    %v2491 = vmul.f32 %v2474, %v2166
    %v2492 = vadd.f32 %v2490, %v2491
    %v2493 = vpack.c.bf16 %v2492, %v2492
    %2495 = vrot.lane.b32.xlu0 %v2493, 96
    %v2496 = vpop.permute.xlu0 %2495
    %v2498 = vsel %vm155, %v2496, 0
    %2500 = vmatprep.subr.bf16.mxu0 0
    %2501 = vmatpush1.bf16.msra.mxu0 %v1467
    %2502 = vmatprep.subr.bf16.mxu0 0
    %2503 = vmatpush1.bf16.msra.mxu0 %v1468
    %2504 = vmatprep.subr.bf16.mxu0 0
    %2505 = vmatpush1.bf16.msra.mxu0 0
    %2506 = vmatprep.subr.bf16.mxu0 0
    %2507 = vmatpush1.bf16.msra.mxu0 0
    %2508 = vmatprep.subr.bf16.mxu0 0
    %2509 = vmatpush1.bf16.msra.mxu0 0
    %2510 = vmatprep.subr.bf16.mxu0 0
    %2511 = vmatpush1.bf16.msra.mxu0 0
    %2512 = vmatprep.subr.bf16.mxu0 0
    %2513 = vmatpush1.bf16.msra.mxu0 0
    %2514 = vmatprep.subr.bf16.mxu0 0
    %2515 = vmatpush1.bf16.msra.mxu0 0
    %2516 = vmatprep.subr.bf16.mxu0 0
    %2517 = vmatpush1.bf16.msra.mxu0 0
    %2518 = vmatprep.subr.bf16.mxu0 0
    %2519 = vmatpush1.bf16.msra.mxu0 0
    %2520 = vmatprep.subr.bf16.mxu0 0
    %2521 = vmatpush1.bf16.msra.mxu0 0
    %2522 = vmatprep.subr.bf16.mxu0 0
    %2523 = vmatpush1.bf16.msra.mxu0 0
    %2524 = vmatprep.subr.bf16.mxu0 0
    %2525 = vmatpush1.bf16.msra.mxu0 0
    %2526 = vmatprep.subr.bf16.mxu0 0
    %2527 = vmatpush1.bf16.msra.mxu0 0
    %2528 = vmatprep.subr.bf16.mxu0 0
    %2529 = vmatpush1.bf16.msra.mxu0 0
    %2530 = vmatprep.subr.bf16.mxu0 0
    %2531 = vmatpush1.bf16.msra.mxu0 0
    %2532 = vmatprep.mubr.bf16.mxu0 0
    %2533 = vmatmul.mubr.bf16.gmra.mrb[0].mxu0 %v2498
    %v2534 = vpop.f32.mrb[0].mxu0
    %v2535 = vadd.f32 %v1165, %v2534
    %v2536 = vpop.f32.mrb[0].mxu0
    %v2537 = vpop.f32.mrb[0].mxu0
    %v2538 = vpop.f32.mrb[0].mxu0
    %2539 = vdwg.mxu0
    %v2540 = vsel %vm1191, %v2535, -1e+30
    %v2541 = vsel %vm87, %v2540, -inf
    %2542 = vmax.xlane.f32.xlu0 %v2541
    %v2543 = vpop.xlane.xlu0 %2542
    %vm2544 = vcmp.eq.f32.partialorder %v2540, %v2543
    %v2545 = vsel %vm2544, %v45, 128
    %v2546 = vsel %vm87, %v2545, 2147483647
    %v2547 = vand.u32 %v2546, 65535
    %v2548 = vshra.s32 %v2546, 16
    %v2549 = vcvt.s32.f32 %v2547
    %v2550 = vcvt.s32.f32 %v2548
    %2551 = vmin.xlane.f32.xlu0 %v2550
    %v2552 = vpop.xlane.xlu0 %2551
    %vm2553 = vcmp.eq.f32.partialorder %v2550, %v2552
    %v2554 = vsel %vm2553, %v2549, inf
    %2555 = vmin.xlane.f32.xlu0 %v2554
    %v2556 = vpop.xlane.xlu0 %2555
    %v2557 = vcvt.f32.s32 %v2556
    %v2558 = vcvt.f32.s32 %v2552
    %v2559 = vshll.u32 %v2558, 16
    %v2560 = vadd.s32 %v2559, %v2557
    %vm2561 = vcmp.eq.s32.totalorder %v45, %v2560
    %v2562 = vsel %vm2561, 1.0, 0.0
    %v2563 = vpack.c.bf16 %v2562, %v2562
    %2564 = vmatprep.subr.bf16.mxu0 0
    %2565 = vmatpush1.bf16.msra.mxu0 %v1221
    %2566 = vmatprep.subr.bf16.mxu0 0
    %2567 = vmatpush1.bf16.msra.mxu0 %v1222
    %2568 = vmatprep.subr.bf16.mxu0 0
    %2569 = vmatpush1.bf16.msra.mxu0 0
    %2570 = vmatprep.subr.bf16.mxu0 0
    %2571 = vmatpush1.bf16.msra.mxu0 0
    %2572 = vmatprep.subr.bf16.mxu0 0
    %2573 = vmatpush1.bf16.msra.mxu0 0
    %2574 = vmatprep.subr.bf16.mxu0 0
    %2575 = vmatpush1.bf16.msra.mxu0 0
    %2576 = vmatprep.subr.bf16.mxu0 0
    %2577 = vmatpush1.bf16.msra.mxu0 0
    %2578 = vmatprep.subr.bf16.mxu0 0
    %2579 = vmatpush1.bf16.msra.mxu0 0
    %2580 = vmatprep.subr.bf16.mxu0 0
    %2581 = vmatpush1.bf16.msra.mxu0 0
    %2582 = vmatprep.subr.bf16.mxu0 0
    %2583 = vmatpush1.bf16.msra.mxu0 0
    %2584 = vmatprep.subr.bf16.mxu0 0
    %2585 = vmatpush1.bf16.msra.mxu0 0
    %2586 = vmatprep.subr.bf16.mxu0 0
    %2587 = vmatpush1.bf16.msra.mxu0 0
    %2588 = vmatprep.subr.bf16.mxu0 0
    %2589 = vmatpush1.bf16.msra.mxu0 0
    %2590 = vmatprep.subr.bf16.mxu0 0
    %2591 = vmatpush1.bf16.msra.mxu0 0
    %2592 = vmatprep.subr.bf16.mxu0 0
    %2593 = vmatpush1.bf16.msra.mxu0 0
    %2594 = vmatprep.subr.bf16.mxu0 0
    %2595 = vmatpush1.bf16.msra.mxu0 0
    %2596 = vmatprep.mubr.bf16.mxu0 0
    %2597 = vmatmul.mubr.bf16.gmra.mrb[0].mxu0 %v2498
    %v2598 = vpop.f32.mrb[0].mxu0
    %v2599 = vadd.f32 0.0, %v2598
    %v2600 = vpop.f32.mrb[0].mxu0
    %v2601 = vpop.f32.mrb[0].mxu0
    %v2602 = vpop.f32.mrb[0].mxu0
    %2603 = vdwg.mxu0
    %v2604 = vadd.f32 %v2599, %v1269
    %v2607 = vunpack.c.l.s4 1966171168
    %v2608 = vunpack.c.0.s8 %v2607
    %v2609 = vlaneseq
    %v2610 = vshrl.u32 %v2609, 7
    %v2611 = vsub.s32 %v2608, %v2610
    %v2612 = vrot.slane %v2599, %v2611
    %v2613 = vcombine.high %v2612, %v2612
    %v2615 = vunpack.c.l.s4 1966171168
    %v2616 = vunpack.c.0.s8 %v2615
    %v2617 = vlaneseq
    %v2618 = vshrl.u32 %v2617, 7
    %v2619 = vsub.s32 %v2616, %v2618
    %v2620 = vrot.slane %v2612, %v2619
    %v2622 = vunpack.c.l.s4 1966171168
    %v2623 = vunpack.c.0.s8 %v2622
    %v2624 = vlaneseq
    %v2625 = vshrl.u32 %v2624, 7
    %v2626 = vsub.s32 %v2623, %v2625
    %v2627 = vrot.slane %v2613, %v2626
    %v2628 = vlaneseq
    %v2629 = vshrl.u32 %v2628, 7
    %v2630 = vsub.s32 0, %v2629
    %v2631 = vrot.slane %v2620, %v2630
    %v2632 = vlaneseq
    %v2633 = vshrl.u32 %v2632, 7
    %v2634 = vsub.s32 0, %v2633
    %v2635 = vrot.slane %v2627, %v2634
    %v2638 = vadd.f32 %v2631, %v1141
    %v2639 = vadd.f32 %v2635, %v1144
    %v2640 = vtanh.pop %v2638
    %v2641 = vtanh.pop %v2639
    %v2642 = vmul.f32 %v2640, %v1152
    %v2643 = vmul.f32 %v2641, %v1152
    %v2644 = vsel %vm155, %v2642, 0.0
    %2645 = vadd.xlane.f32.xlu0 %v2644
    %v2646 = vpop.xlane.xlu0 %2645
    %v2647 = vsel %vm155, %v2643, 0.0
    %2648 = vadd.xlane.f32.xlu0 %v2647
    %v2649 = vpop.xlane.xlu0 %2648
    %v2652 = vlaneseq
    %v2653 = vshrl.u32 %v2652, 7
    %v2654 = vsub.s32 %v45, %v2653
    %v2655 = vrot.slane %v2646, %v2654
    %v2656 = vlaneseq
    %v2657 = vshrl.u32 %v2656, 7
    %v2658 = vsub.s32 %v45, %v2657
    %v2659 = vrot.slane %v2649, %v2658
    %v2660 = vsel %vm260, %v2659, %v2655
    %v2662 = vsel %vm1329, %v2660, -inf
    %2663 = vmax.xlane.f32.xlu0 %v2662
    %v2664 = vpop.xlane.xlu0 %2663
    %v2666 = vlaneseq
    %v2667 = vshrl.u32 %v2666, 7
    %v2668 = vsub.s32 0, %v2667
    %v2669 = vrot.slane %v2664, %v2668
    %v2670 = vlaneseq
    %v2671 = vshrl.u32 %v2670, 7
    %v2672 = vsub.s32 1, %v2671
    %v2673 = vrot.slane %v2664, %v2672
    %v2676 = vsub.f32 %v2646, %v2669
    %v2677 = vsub.f32 %v2649, %v2673
    %v2678 = vmul.f32 %v2676, 1.442695
    %v2679 = vpow.pop %v2678
    %v2680 = vmul.f32 %v2677, 1.442695
    %v2681 = vpow.pop %v2680
    %2684 = vset.pattern.permute.xlu0 0
    %2685 = vperm.xlu0 %2684, %v2679
    %v2686 = vpop.permute.xlu0 %2685
    %2687 = vset.pattern.permute.xlu0 0
    %2688 = vperm.xlu0 %2687, %v2681
    %v2689 = vpop.permute.xlu0 %2688
    %v2690 = vlaneseq
    %v2691 = vshrl.u32 %v2690, 7
    %v2692 = vsub.s32 %v45, %v2691
    %v2693 = vrot.slane %v2686, %v2692
    %v2694 = vlaneseq
    %v2695 = vshrl.u32 %v2694, 7
    %v2696 = vsub.s32 %v45, %v2695
    %v2697 = vrot.slane %v2689, %v2696
    %v2698 = vsel %vm260, %v2697, %v2693
    %v2700 = vsel %vm1329, %v2698, 0.0
    %2701 = vadd.xlane.f32.xlu0 %v2700
    %v2702 = vpop.xlane.xlu0 %2701
    %v2704 = vlaneseq
    %v2705 = vshrl.u32 %v2704, 7
    %v2706 = vsub.s32 0, %v2705
    %v2707 = vrot.slane %v2702, %v2706
    %v2708 = vlaneseq
    %v2709 = vshrl.u32 %v2708, 7
    %v2710 = vsub.s32 1, %v2709
    %v2711 = vrot.slane %v2702, %v2710
    %v2714 = vrcp.pop %v2707
    %v2715 = vmul.f32 %v2679, %v2714
    %v2716 = vrcp.pop %v2711
    %v2717 = vmul.f32 %v2681, %v2716
    %2719 = vset.pattern.permute.xlu0 0
    %2720 = vperm.xlu0 %2719, %v2715
    %v2721 = vpop.permute.xlu0 %2720
    %2724 = vset.pattern.permute.xlu0 0
    %2725 = vperm.xlu0 %2724, %v2717
    %v2726 = vpop.permute.xlu0 %2725
    %v2728 = vmul.f32 %v2721, %v1141
    %v2729 = vmul.f32 %v2726, %v1144
    %v2730 = vsel %vm1398, %v2728, 0.0
    %v2731 = vrot.slane %v2730, 4
    %v2732 = vadd.f32 %v2730, %v2731
    %v2733 = vrot.slane %v2732, 2
    %v2734 = vadd.f32 %v2732, %v2733
    %v2735 = vrot.slane %v2734, 1
    %v2736 = vadd.f32 %v2734, %v2735
    %v2737 = vsel %vm1398, %v2729, 0.0
    %v2738 = vrot.slane %v2737, 4
    %v2739 = vadd.f32 %v2737, %v2738
    %v2740 = vrot.slane %v2739, 2
    %v2741 = vadd.f32 %v2739, %v2740
    %v2742 = vrot.slane %v2741, 1
    %v2743 = vadd.f32 %v2741, %v2742
    %v2746 = vsel %vm260, %v2743, %v2736
    %2747 = vrot.lane.b32.xlu0 %v2746, 96
    %v2748 = vpop.permute.xlu0 %2747
    %2750 = vmatprep.subr.bf16.mxu0 0
    %2751 = vmatpush1.bf16.msra.mxu0 %v1750
    %2752 = vmatprep.subr.bf16.mxu0 0
    %2753 = vmatpush1.bf16.msra.mxu0 %v1751
    %2754 = vmatprep.subr.bf16.mxu0 0
    %2755 = vmatpush1.bf16.msra.mxu0 %v1752
    %2756 = vmatprep.subr.bf16.mxu0 0
    %2757 = vmatpush1.bf16.msra.mxu0 %v1753
    %2758 = vmatprep.subr.bf16.mxu0 0
    %2759 = vmatpush1.bf16.msra.mxu0 %v1754
    %2760 = vmatprep.subr.bf16.mxu0 0
    %2761 = vmatpush1.bf16.msra.mxu0 %v1755
    %2762 = vmatprep.subr.bf16.mxu0 0
    %2763 = vmatpush1.bf16.msra.mxu0 %v1756
    %2764 = vmatprep.subr.bf16.mxu0 0
    %2765 = vmatpush1.bf16.msra.mxu0 %v1757
    %2766 = vmatprep.subr.bf16.mxu0 0
    %2767 = vmatpush1.bf16.msra.mxu0 0
    %2768 = vmatprep.subr.bf16.mxu0 0
    %2769 = vmatpush1.bf16.msra.mxu0 0
    %2770 = vmatprep.subr.bf16.mxu0 0
    %2771 = vmatpush1.bf16.msra.mxu0 0
    %2772 = vmatprep.subr.bf16.mxu0 0
    %2773 = vmatpush1.bf16.msra.mxu0 0
    %2774 = vmatprep.subr.bf16.mxu0 0
    %2775 = vmatpush1.bf16.msra.mxu0 0
    %2776 = vmatprep.subr.bf16.mxu0 0
    %2777 = vmatpush1.bf16.msra.mxu0 0
    %2778 = vmatprep.subr.bf16.mxu0 0
    %2779 = vmatpush1.bf16.msra.mxu0 0
    %2780 = vmatprep.subr.bf16.mxu0 0
    %2781 = vmatpush1.bf16.msra.mxu0 0
    %2782 = vmatprep.mubr.bf16.mxu0 0
    %2783 = vmatmul.mubr.bf16.gmra.mrb[0].mxu0 %v2563
    %v2784 = vpop.f32.mrb[0].mxu0
    %v2785 = vadd.f32 %v2748, %v2784
    %v2786 = vpop.f32.mrb[0].mxu0
    %v2787 = vpop.f32.mrb[0].mxu0
    %v2788 = vpop.f32.mrb[0].mxu0
    %2789 = vdwg.mxu0
    %2791 = vrot.lane.b32.xlu0 %v2604, 96
    %v2792 = vpop.permute.xlu0 %2791
    %v2794 = vadd.f32 %v2785, %v2792
    %v2795 = vxor.u32 %v2794, 2147483648
    %v2796 = vmul.f32 %v2795, 1.442695
    %v2797 = vpow.pop %v2796
    %v2798 = vadd.f32 %v2797, 1.0
    %v2799 = vrcp.pop %v2798
    %v2800 = vmul.f32 1.0, %v2799
    %2801 = vrot.lane.b32.xlu0 %v2604, 32
    %v2802 = vpop.permute.xlu0 %2801
    %v2804 = vmul.f32 %v2800, %v2802
    %2806 = vrot.lane.b32.xlu0 %v2804, 64
    %v2807 = vpop.permute.xlu0 %2806
    %v2809 = vadd.f32 %v2785, %v2807
    %v2810 = vtanh.pop %v2809
    %v2811 = vsub.f32 1.0, %v2800
    %2813 = vrot.lane.b32.xlu0 %v2810, 96
    %v2814 = vpop.permute.xlu0 %2813
    %v2816 = vmul.f32 %v2811, %v2814
    %v2817 = vmul.f32 %v2800, %v2492
    %v2818 = vadd.f32 %v2816, %v2817
    %v2819 = vpack.c.bf16 %v2818, %v2818
    %2821 = vrot.lane.b32.xlu0 %v2819, 96
    %v2822 = vpop.permute.xlu0 %2821
    %v2824 = vsel %vm155, %v2822, 0
    %2826 = vmatprep.subr.bf16.mxu0 0
    %2827 = vmatpush1.bf16.msra.mxu0 %v1467
    %2828 = vmatprep.subr.bf16.mxu0 0
    %2829 = vmatpush1.bf16.msra.mxu0 %v1468
    %2830 = vmatprep.subr.bf16.mxu0 0
    %2831 = vmatpush1.bf16.msra.mxu0 0
    %2832 = vmatprep.subr.bf16.mxu0 0
    %2833 = vmatpush1.bf16.msra.mxu0 0
    %2834 = vmatprep.subr.bf16.mxu0 0
    %2835 = vmatpush1.bf16.msra.mxu0 0
    %2836 = vmatprep.subr.bf16.mxu0 0
    %2837 = vmatpush1.bf16.msra.mxu0 0
    %2838 = vmatprep.subr.bf16.mxu0 0
    %2839 = vmatpush1.bf16.msra.mxu0 0
    %2840 = vmatprep.subr.bf16.mxu0 0
    %2841 = vmatpush1.bf16.msra.mxu0 0
    %2842 = vmatprep.subr.bf16.mxu0 0
    %2843 = vmatpush1.bf16.msra.mxu0 0
    %2844 = vmatprep.subr.bf16.mxu0 0
    %2845 = vmatpush1.bf16.msra.mxu0 0
    %2846 = vmatprep.subr.bf16.mxu0 0
    %2847 = vmatpush1.bf16.msra.mxu0 0
    %2848 = vmatprep.subr.bf16.mxu0 0
    %2849 = vmatpush1.bf16.msra.mxu0 0
    %2850 = vmatprep.subr.bf16.mxu0 0
    %2851 = vmatpush1.bf16.msra.mxu0 0
    %2852 = vmatprep.subr.bf16.mxu0 0
    %2853 = vmatpush1.bf16.msra.mxu0 0
    %2854 = vmatprep.subr.bf16.mxu0 0
    %2855 = vmatpush1.bf16.msra.mxu0 0
    %2856 = vmatprep.subr.bf16.mxu0 0
    %2857 = vmatpush1.bf16.msra.mxu0 0
    %2858 = vmatprep.mubr.bf16.mxu0 0
    %2859 = vmatmul.mubr.bf16.gmra.mrb[0].mxu0 %v2824
    %v2860 = vpop.f32.mrb[0].mxu0
    %v2861 = vadd.f32 %v1165, %v2860
    %v2862 = vpop.f32.mrb[0].mxu0
    %v2863 = vpop.f32.mrb[0].mxu0
    %v2864 = vpop.f32.mrb[0].mxu0
    %2865 = vdwg.mxu0
    %v2866 = vsel %vm1191, %v2861, -1e+30
    %v2867 = vsel %vm87, %v2866, -inf
    %2868 = vmax.xlane.f32.xlu0 %v2867
    %v2869 = vpop.xlane.xlu0 %2868
    %vm2870 = vcmp.eq.f32.partialorder %v2866, %v2869
    %v2871 = vsel %vm2870, %v45, 128
    %v2872 = vsel %vm87, %v2871, 2147483647
    %v2873 = vand.u32 %v2872, 65535
    %v2874 = vshra.s32 %v2872, 16
    %v2875 = vcvt.s32.f32 %v2873
    %v2876 = vcvt.s32.f32 %v2874
    %2877 = vmin.xlane.f32.xlu0 %v2876
    %v2878 = vpop.xlane.xlu0 %2877
    %vm2879 = vcmp.eq.f32.partialorder %v2876, %v2878
    %v2880 = vsel %vm2879, %v2875, inf
    %2881 = vmin.xlane.f32.xlu0 %v2880
    %v2882 = vpop.xlane.xlu0 %2881
    %v2883 = vcvt.f32.s32 %v2882
    %v2884 = vcvt.f32.s32 %v2878
    %v2885 = vshll.u32 %v2884, 16
    %v2886 = vadd.s32 %v2885, %v2883
    %vm2887 = vcmp.eq.s32.totalorder %v45, %v2886
    %v2888 = vsel %vm2887, 1.0, 0.0
    %v2889 = vpack.c.bf16 %v2888, %v2888
    %2890 = vmatprep.subr.bf16.mxu0 0
    %2891 = vmatpush1.bf16.msra.mxu0 %v1221
    %2892 = vmatprep.subr.bf16.mxu0 0
    %2893 = vmatpush1.bf16.msra.mxu0 %v1222
    %2894 = vmatprep.subr.bf16.mxu0 0
    %2895 = vmatpush1.bf16.msra.mxu0 0
    %2896 = vmatprep.subr.bf16.mxu0 0
    %2897 = vmatpush1.bf16.msra.mxu0 0
    %2898 = vmatprep.subr.bf16.mxu0 0
    %2899 = vmatpush1.bf16.msra.mxu0 0
    %2900 = vmatprep.subr.bf16.mxu0 0
    %2901 = vmatpush1.bf16.msra.mxu0 0
    %2902 = vmatprep.subr.bf16.mxu0 0
    %2903 = vmatpush1.bf16.msra.mxu0 0
    %2904 = vmatprep.subr.bf16.mxu0 0
    %2905 = vmatpush1.bf16.msra.mxu0 0
    %2906 = vmatprep.subr.bf16.mxu0 0
    %2907 = vmatpush1.bf16.msra.mxu0 0
    %2908 = vmatprep.subr.bf16.mxu0 0
    %2909 = vmatpush1.bf16.msra.mxu0 0
    %2910 = vmatprep.subr.bf16.mxu0 0
    %2911 = vmatpush1.bf16.msra.mxu0 0
    %2912 = vmatprep.subr.bf16.mxu0 0
    %2913 = vmatpush1.bf16.msra.mxu0 0
    %2914 = vmatprep.subr.bf16.mxu0 0
    %2915 = vmatpush1.bf16.msra.mxu0 0
    %2916 = vmatprep.subr.bf16.mxu0 0
    %2917 = vmatpush1.bf16.msra.mxu0 0
    %2918 = vmatprep.subr.bf16.mxu0 0
    %2919 = vmatpush1.bf16.msra.mxu0 0
    %2920 = vmatprep.subr.bf16.mxu0 0
    %2921 = vmatpush1.bf16.msra.mxu0 0
    %2922 = vmatprep.mubr.bf16.mxu0 0
    %2923 = vmatmul.mubr.bf16.gmra.mrb[0].mxu0 %v2824
    %v2924 = vpop.f32.mrb[0].mxu0
    %v2925 = vadd.f32 0.0, %v2924
    %v2926 = vpop.f32.mrb[0].mxu0
    %v2927 = vpop.f32.mrb[0].mxu0
    %v2928 = vpop.f32.mrb[0].mxu0
    %2929 = vdwg.mxu0
    %v2930 = vadd.f32 %v2925, %v1269
    %v2933 = vunpack.c.l.s4 1966171168
    %v2934 = vunpack.c.0.s8 %v2933
    %v2935 = vlaneseq
    %v2936 = vshrl.u32 %v2935, 7
    %v2937 = vsub.s32 %v2934, %v2936
    %v2938 = vrot.slane %v2925, %v2937
    %v2939 = vcombine.high %v2938, %v2938
    %v2941 = vunpack.c.l.s4 1966171168
    %v2942 = vunpack.c.0.s8 %v2941
    %v2943 = vlaneseq
    %v2944 = vshrl.u32 %v2943, 7
    %v2945 = vsub.s32 %v2942, %v2944
    %v2946 = vrot.slane %v2938, %v2945
    %v2948 = vunpack.c.l.s4 1966171168
    %v2949 = vunpack.c.0.s8 %v2948
    %v2950 = vlaneseq
    %v2951 = vshrl.u32 %v2950, 7
    %v2952 = vsub.s32 %v2949, %v2951
    %v2953 = vrot.slane %v2939, %v2952
    %v2954 = vlaneseq
    %v2955 = vshrl.u32 %v2954, 7
    %v2956 = vsub.s32 0, %v2955
    %v2957 = vrot.slane %v2946, %v2956
    %v2958 = vlaneseq
    %v2959 = vshrl.u32 %v2958, 7
    %v2960 = vsub.s32 0, %v2959
    %v2961 = vrot.slane %v2953, %v2960
    %v2964 = vadd.f32 %v2957, %v1141
    %v2965 = vadd.f32 %v2961, %v1144
    %v2966 = vtanh.pop %v2964
    %v2967 = vtanh.pop %v2965
    %v2968 = vmul.f32 %v2966, %v1152
    %v2969 = vmul.f32 %v2967, %v1152
    %v2970 = vsel %vm155, %v2968, 0.0
    %2971 = vadd.xlane.f32.xlu0 %v2970
    %v2972 = vpop.xlane.xlu0 %2971
    %v2973 = vsel %vm155, %v2969, 0.0
    %2974 = vadd.xlane.f32.xlu0 %v2973
    %v2975 = vpop.xlane.xlu0 %2974
    %v2978 = vlaneseq
    %v2979 = vshrl.u32 %v2978, 7
    %v2980 = vsub.s32 %v45, %v2979
    %v2981 = vrot.slane %v2972, %v2980
    %v2982 = vlaneseq
    %v2983 = vshrl.u32 %v2982, 7
    %v2984 = vsub.s32 %v45, %v2983
    %v2985 = vrot.slane %v2975, %v2984
    %v2986 = vsel %vm260, %v2985, %v2981
    %v2988 = vsel %vm1329, %v2986, -inf
    %2989 = vmax.xlane.f32.xlu0 %v2988
    %v2990 = vpop.xlane.xlu0 %2989
    %v2992 = vlaneseq
    %v2993 = vshrl.u32 %v2992, 7
    %v2994 = vsub.s32 0, %v2993
    %v2995 = vrot.slane %v2990, %v2994
    %v2996 = vlaneseq
    %v2997 = vshrl.u32 %v2996, 7
    %v2998 = vsub.s32 1, %v2997
    %v2999 = vrot.slane %v2990, %v2998
    %v3002 = vsub.f32 %v2972, %v2995
    %v3003 = vsub.f32 %v2975, %v2999
    %v3004 = vmul.f32 %v3002, 1.442695
    %v3005 = vpow.pop %v3004
    %v3006 = vmul.f32 %v3003, 1.442695
    %v3007 = vpow.pop %v3006
    %3010 = vset.pattern.permute.xlu0 0
    %3011 = vperm.xlu0 %3010, %v3005
    %v3012 = vpop.permute.xlu0 %3011
    %3013 = vset.pattern.permute.xlu0 0
    %3014 = vperm.xlu0 %3013, %v3007
    %v3015 = vpop.permute.xlu0 %3014
    %v3016 = vlaneseq
    %v3017 = vshrl.u32 %v3016, 7
    %v3018 = vsub.s32 %v45, %v3017
    %v3019 = vrot.slane %v3012, %v3018
    %v3020 = vlaneseq
    %v3021 = vshrl.u32 %v3020, 7
    %v3022 = vsub.s32 %v45, %v3021
    %v3023 = vrot.slane %v3015, %v3022
    %v3024 = vsel %vm260, %v3023, %v3019
    %v3026 = vsel %vm1329, %v3024, 0.0
    %3027 = vadd.xlane.f32.xlu0 %v3026
    %v3028 = vpop.xlane.xlu0 %3027
    %v3030 = vlaneseq
    %v3031 = vshrl.u32 %v3030, 7
    %v3032 = vsub.s32 0, %v3031
    %v3033 = vrot.slane %v3028, %v3032
    %v3034 = vlaneseq
    %v3035 = vshrl.u32 %v3034, 7
    %v3036 = vsub.s32 1, %v3035
    %v3037 = vrot.slane %v3028, %v3036
    %v3040 = vrcp.pop %v3033
    %v3041 = vmul.f32 %v3005, %v3040
    %v3042 = vrcp.pop %v3037
    %v3043 = vmul.f32 %v3007, %v3042
    %3045 = vset.pattern.permute.xlu0 0
    %3046 = vperm.xlu0 %3045, %v3041
    %v3047 = vpop.permute.xlu0 %3046
    %3050 = vset.pattern.permute.xlu0 0
    %3051 = vperm.xlu0 %3050, %v3043
    %v3052 = vpop.permute.xlu0 %3051
    %v3054 = vmul.f32 %v3047, %v1141
    %v3055 = vmul.f32 %v3052, %v1144
    %v3056 = vsel %vm1398, %v3054, 0.0
    %v3057 = vrot.slane %v3056, 4
    %v3058 = vadd.f32 %v3056, %v3057
    %v3059 = vrot.slane %v3058, 2
    %v3060 = vadd.f32 %v3058, %v3059
    %v3061 = vrot.slane %v3060, 1
    %v3062 = vadd.f32 %v3060, %v3061
    %v3063 = vsel %vm1398, %v3055, 0.0
    %v3064 = vrot.slane %v3063, 4
    %v3065 = vadd.f32 %v3063, %v3064
    %v3066 = vrot.slane %v3065, 2
    %v3067 = vadd.f32 %v3065, %v3066
    %v3068 = vrot.slane %v3067, 1
    %v3069 = vadd.f32 %v3067, %v3068
    %v3072 = vsel %vm260, %v3069, %v3062
    %3073 = vrot.lane.b32.xlu0 %v3072, 96
    %v3074 = vpop.permute.xlu0 %3073
    %3076 = vmatprep.subr.bf16.mxu0 0
    %3077 = vmatpush1.bf16.msra.mxu0 %v1750
    %3078 = vmatprep.subr.bf16.mxu0 0
    %3079 = vmatpush1.bf16.msra.mxu0 %v1751
    %3080 = vmatprep.subr.bf16.mxu0 0
    %3081 = vmatpush1.bf16.msra.mxu0 %v1752
    %3082 = vmatprep.subr.bf16.mxu0 0
    %3083 = vmatpush1.bf16.msra.mxu0 %v1753
    %3084 = vmatprep.subr.bf16.mxu0 0
    %3085 = vmatpush1.bf16.msra.mxu0 %v1754
    %3086 = vmatprep.subr.bf16.mxu0 0
    %3087 = vmatpush1.bf16.msra.mxu0 %v1755
    %3088 = vmatprep.subr.bf16.mxu0 0
    %3089 = vmatpush1.bf16.msra.mxu0 %v1756
    %3090 = vmatprep.subr.bf16.mxu0 0
    %3091 = vmatpush1.bf16.msra.mxu0 %v1757
    %3092 = vmatprep.subr.bf16.mxu0 0
    %3093 = vmatpush1.bf16.msra.mxu0 0
    %3094 = vmatprep.subr.bf16.mxu0 0
    %3095 = vmatpush1.bf16.msra.mxu0 0
    %3096 = vmatprep.subr.bf16.mxu0 0
    %3097 = vmatpush1.bf16.msra.mxu0 0
    %3098 = vmatprep.subr.bf16.mxu0 0
    %3099 = vmatpush1.bf16.msra.mxu0 0
    %3100 = vmatprep.subr.bf16.mxu0 0
    %3101 = vmatpush1.bf16.msra.mxu0 0
    %3102 = vmatprep.subr.bf16.mxu0 0
    %3103 = vmatpush1.bf16.msra.mxu0 0
    %3104 = vmatprep.subr.bf16.mxu0 0
    %3105 = vmatpush1.bf16.msra.mxu0 0
    %3106 = vmatprep.subr.bf16.mxu0 0
    %3107 = vmatpush1.bf16.msra.mxu0 0
    %3108 = vmatprep.mubr.bf16.mxu0 0
    %3109 = vmatmul.mubr.bf16.gmra.mrb[0].mxu0 %v2889
    %v3110 = vpop.f32.mrb[0].mxu0
    %v3111 = vadd.f32 %v3074, %v3110
    %v3112 = vpop.f32.mrb[0].mxu0
    %v3113 = vpop.f32.mrb[0].mxu0
    %v3114 = vpop.f32.mrb[0].mxu0
    %3115 = vdwg.mxu0
    %3117 = vrot.lane.b32.xlu0 %v2930, 96
    %v3118 = vpop.permute.xlu0 %3117
    %v3120 = vadd.f32 %v3111, %v3118
    %v3121 = vxor.u32 %v3120, 2147483648
    %v3122 = vmul.f32 %v3121, 1.442695
    %v3123 = vpow.pop %v3122
    %v3124 = vadd.f32 %v3123, 1.0
    %v3125 = vrcp.pop %v3124
    %v3126 = vmul.f32 1.0, %v3125
    %3127 = vrot.lane.b32.xlu0 %v2930, 32
    %v3128 = vpop.permute.xlu0 %3127
    %v3130 = vmul.f32 %v3126, %v3128
    %3132 = vrot.lane.b32.xlu0 %v3130, 64
    %v3133 = vpop.permute.xlu0 %3132
    %v3135 = vadd.f32 %v3111, %v3133
    %v3136 = vtanh.pop %v3135
    %v3137 = vsub.f32 1.0, %v3126
    %3139 = vrot.lane.b32.xlu0 %v3136, 96
    %v3140 = vpop.permute.xlu0 %3139
    %v3142 = vmul.f32 %v3137, %v3140
    %v3143 = vmul.f32 %v3126, %v2818
    %v3144 = vadd.f32 %v3142, %v3143
    %v3145 = vpack.c.bf16 %v3144, %v3144
    %3147 = vrot.lane.b32.xlu0 %v3145, 96
    %v3148 = vpop.permute.xlu0 %3147
    %v3150 = vsel %vm155, %v3148, 0
    %3152 = vmatprep.subr.bf16.mxu0 0
    %3153 = vmatpush1.bf16.msra.mxu0 %v1467
    %3154 = vmatprep.subr.bf16.mxu0 0
    %3155 = vmatpush1.bf16.msra.mxu0 %v1468
    %3156 = vmatprep.subr.bf16.mxu0 0
    %3157 = vmatpush1.bf16.msra.mxu0 0
    %3158 = vmatprep.subr.bf16.mxu0 0
    %3159 = vmatpush1.bf16.msra.mxu0 0
    %3160 = vmatprep.subr.bf16.mxu0 0
    %3161 = vmatpush1.bf16.msra.mxu0 0
    %3162 = vmatprep.subr.bf16.mxu0 0
    %3163 = vmatpush1.bf16.msra.mxu0 0
    %3164 = vmatprep.subr.bf16.mxu0 0
    %3165 = vmatpush1.bf16.msra.mxu0 0
    %3166 = vmatprep.subr.bf16.mxu0 0
    %3167 = vmatpush1.bf16.msra.mxu0 0
    %3168 = vmatprep.subr.bf16.mxu0 0
    %3169 = vmatpush1.bf16.msra.mxu0 0
    %3170 = vmatprep.subr.bf16.mxu0 0
    %3171 = vmatpush1.bf16.msra.mxu0 0
    %3172 = vmatprep.subr.bf16.mxu0 0
    %3173 = vmatpush1.bf16.msra.mxu0 0
    %3174 = vmatprep.subr.bf16.mxu0 0
    %3175 = vmatpush1.bf16.msra.mxu0 0
    %3176 = vmatprep.subr.bf16.mxu0 0
    %3177 = vmatpush1.bf16.msra.mxu0 0
    %3178 = vmatprep.subr.bf16.mxu0 0
    %3179 = vmatpush1.bf16.msra.mxu0 0
    %3180 = vmatprep.subr.bf16.mxu0 0
    %3181 = vmatpush1.bf16.msra.mxu0 0
    %3182 = vmatprep.subr.bf16.mxu0 0
    %3183 = vmatpush1.bf16.msra.mxu0 0
    %3184 = vmatprep.mubr.bf16.mxu0 0
    %3185 = vmatmul.mubr.bf16.gmra.mrb[0].mxu0 %v3150
    %v3186 = vpop.f32.mrb[0].mxu0
    %v3187 = vadd.f32 %v1165, %v3186
    %v3188 = vpop.f32.mrb[0].mxu0
    %v3189 = vpop.f32.mrb[0].mxu0
    %v3190 = vpop.f32.mrb[0].mxu0
    %3191 = vdwg.mxu0
    %v3192 = vsel %vm1191, %v3187, -1e+30
    %v3193 = vsel %vm87, %v3192, -inf
    %3194 = vmax.xlane.f32.xlu0 %v3193
    %v3195 = vpop.xlane.xlu0 %3194
    %vm3196 = vcmp.eq.f32.partialorder %v3192, %v3195
    %v3197 = vsel %vm3196, %v45, 128
    %v3198 = vsel %vm87, %v3197, 2147483647
    %v3199 = vand.u32 %v3198, 65535
    %v3200 = vshra.s32 %v3198, 16
    %v3201 = vcvt.s32.f32 %v3199
    %v3202 = vcvt.s32.f32 %v3200
    %3203 = vmin.xlane.f32.xlu0 %v3202
    %v3204 = vpop.xlane.xlu0 %3203
    %vm3205 = vcmp.eq.f32.partialorder %v3202, %v3204
    %v3206 = vsel %vm3205, %v3201, inf
    %3207 = vmin.xlane.f32.xlu0 %v3206
    %v3208 = vpop.xlane.xlu0 %3207
    %v3209 = vcvt.f32.s32 %v3208
    %v3210 = vcvt.f32.s32 %v3204
    %v3211 = vshll.u32 %v3210, 16
    %v3212 = vadd.s32 %v3211, %v3209
    %vm3213 = vcmp.eq.s32.totalorder %v45, %v3212
    %v3214 = vsel %vm3213, 1.0, 0.0
    %v3215 = vpack.c.bf16 %v3214, %v3214
    %3216 = vmatprep.subr.bf16.mxu0 0
    %3217 = vmatpush1.bf16.msra.mxu0 %v1221
    %3218 = vmatprep.subr.bf16.mxu0 0
    %3219 = vmatpush1.bf16.msra.mxu0 %v1222
    %3220 = vmatprep.subr.bf16.mxu0 0
    %3221 = vmatpush1.bf16.msra.mxu0 0
    %3222 = vmatprep.subr.bf16.mxu0 0
    %3223 = vmatpush1.bf16.msra.mxu0 0
    %3224 = vmatprep.subr.bf16.mxu0 0
    %3225 = vmatpush1.bf16.msra.mxu0 0
    %3226 = vmatprep.subr.bf16.mxu0 0
    %3227 = vmatpush1.bf16.msra.mxu0 0
    %3228 = vmatprep.subr.bf16.mxu0 0
    %3229 = vmatpush1.bf16.msra.mxu0 0
    %3230 = vmatprep.subr.bf16.mxu0 0
    %3231 = vmatpush1.bf16.msra.mxu0 0
    %3232 = vmatprep.subr.bf16.mxu0 0
    %3233 = vmatpush1.bf16.msra.mxu0 0
    %3234 = vmatprep.subr.bf16.mxu0 0
    %3235 = vmatpush1.bf16.msra.mxu0 0
    %3236 = vmatprep.subr.bf16.mxu0 0
    %3237 = vmatpush1.bf16.msra.mxu0 0
    %3238 = vmatprep.subr.bf16.mxu0 0
    %3239 = vmatpush1.bf16.msra.mxu0 0
    %3240 = vmatprep.subr.bf16.mxu0 0
    %3241 = vmatpush1.bf16.msra.mxu0 0
    %3242 = vmatprep.subr.bf16.mxu0 0
    %3243 = vmatpush1.bf16.msra.mxu0 0
    %3244 = vmatprep.subr.bf16.mxu0 0
    %3245 = vmatpush1.bf16.msra.mxu0 0
    %3246 = vmatprep.subr.bf16.mxu0 0
    %3247 = vmatpush1.bf16.msra.mxu0 0
    %3248 = vmatprep.mubr.bf16.mxu0 0
    %3249 = vmatmul.mubr.bf16.gmra.mrb[0].mxu0 %v3150
    %v3250 = vpop.f32.mrb[0].mxu0
    %v3251 = vadd.f32 0.0, %v3250
    %v3252 = vpop.f32.mrb[0].mxu0
    %v3253 = vpop.f32.mrb[0].mxu0
    %v3254 = vpop.f32.mrb[0].mxu0
    %3255 = vdwg.mxu0
    %v3256 = vadd.f32 %v3251, %v1269
    %v3259 = vunpack.c.l.s4 1966171168
    %v3260 = vunpack.c.0.s8 %v3259
    %v3261 = vlaneseq
    %v3262 = vshrl.u32 %v3261, 7
    %v3263 = vsub.s32 %v3260, %v3262
    %v3264 = vrot.slane %v3251, %v3263
    %v3265 = vcombine.high %v3264, %v3264
    %v3267 = vunpack.c.l.s4 1966171168
    %v3268 = vunpack.c.0.s8 %v3267
    %v3269 = vlaneseq
    %v3270 = vshrl.u32 %v3269, 7
    %v3271 = vsub.s32 %v3268, %v3270
    %v3272 = vrot.slane %v3264, %v3271
    %v3274 = vunpack.c.l.s4 1966171168
    %v3275 = vunpack.c.0.s8 %v3274
    %v3276 = vlaneseq
    %v3277 = vshrl.u32 %v3276, 7
    %v3278 = vsub.s32 %v3275, %v3277
    %v3279 = vrot.slane %v3265, %v3278
    %v3280 = vlaneseq
    %v3281 = vshrl.u32 %v3280, 7
    %v3282 = vsub.s32 0, %v3281
    %v3283 = vrot.slane %v3272, %v3282
    %v3284 = vlaneseq
    %v3285 = vshrl.u32 %v3284, 7
    %v3286 = vsub.s32 0, %v3285
    %v3287 = vrot.slane %v3279, %v3286
    %v3290 = vadd.f32 %v3283, %v1141
    %v3291 = vadd.f32 %v3287, %v1144
    %v3292 = vtanh.pop %v3290
    %v3293 = vtanh.pop %v3291
    %v3294 = vmul.f32 %v3292, %v1152
    %v3295 = vmul.f32 %v3293, %v1152
    %v3296 = vsel %vm155, %v3294, 0.0
    %3297 = vadd.xlane.f32.xlu0 %v3296
    %v3298 = vpop.xlane.xlu0 %3297
    %v3299 = vsel %vm155, %v3295, 0.0
    %3300 = vadd.xlane.f32.xlu0 %v3299
    %v3301 = vpop.xlane.xlu0 %3300
    %v3304 = vlaneseq
    %v3305 = vshrl.u32 %v3304, 7
    %v3306 = vsub.s32 %v45, %v3305
    %v3307 = vrot.slane %v3298, %v3306
    %v3308 = vlaneseq
    %v3309 = vshrl.u32 %v3308, 7
    %v3310 = vsub.s32 %v45, %v3309
    %v3311 = vrot.slane %v3301, %v3310
    %v3312 = vsel %vm260, %v3311, %v3307
    %v3314 = vsel %vm1329, %v3312, -inf
    %3315 = vmax.xlane.f32.xlu0 %v3314
    %v3316 = vpop.xlane.xlu0 %3315
    %v3318 = vlaneseq
    %v3319 = vshrl.u32 %v3318, 7
    %v3320 = vsub.s32 0, %v3319
    %v3321 = vrot.slane %v3316, %v3320
    %v3322 = vlaneseq
    %v3323 = vshrl.u32 %v3322, 7
    %v3324 = vsub.s32 1, %v3323
    %v3325 = vrot.slane %v3316, %v3324
    %v3328 = vsub.f32 %v3298, %v3321
    %v3329 = vsub.f32 %v3301, %v3325
    %v3330 = vmul.f32 %v3328, 1.442695
    %v3331 = vpow.pop %v3330
    %v3332 = vmul.f32 %v3329, 1.442695
    %v3333 = vpow.pop %v3332
    %3336 = vset.pattern.permute.xlu0 0
    %3337 = vperm.xlu0 %3336, %v3331
    %v3338 = vpop.permute.xlu0 %3337
    %3339 = vset.pattern.permute.xlu0 0
    %3340 = vperm.xlu0 %3339, %v3333
    %v3341 = vpop.permute.xlu0 %3340
    %v3342 = vlaneseq
    %v3343 = vshrl.u32 %v3342, 7
    %v3344 = vsub.s32 %v45, %v3343
    %v3345 = vrot.slane %v3338, %v3344
    %v3346 = vlaneseq
    %v3347 = vshrl.u32 %v3346, 7
    %v3348 = vsub.s32 %v45, %v3347
    %v3349 = vrot.slane %v3341, %v3348
    %v3350 = vsel %vm260, %v3349, %v3345
    %v3352 = vsel %vm1329, %v3350, 0.0
    %3353 = vadd.xlane.f32.xlu0 %v3352
    %v3354 = vpop.xlane.xlu0 %3353
    %v3356 = vlaneseq
    %v3357 = vshrl.u32 %v3356, 7
    %v3358 = vsub.s32 0, %v3357
    %v3359 = vrot.slane %v3354, %v3358
    %v3360 = vlaneseq
    %v3361 = vshrl.u32 %v3360, 7
    %v3362 = vsub.s32 1, %v3361
    %v3363 = vrot.slane %v3354, %v3362
    %v3366 = vrcp.pop %v3359
    %v3367 = vmul.f32 %v3331, %v3366
    %v3368 = vrcp.pop %v3363
    %v3369 = vmul.f32 %v3333, %v3368
    %3371 = vset.pattern.permute.xlu0 0
    %3372 = vperm.xlu0 %3371, %v3367
    %v3373 = vpop.permute.xlu0 %3372
    %3376 = vset.pattern.permute.xlu0 0
    %3377 = vperm.xlu0 %3376, %v3369
    %v3378 = vpop.permute.xlu0 %3377
    %v3380 = vmul.f32 %v3373, %v1141
    %v3381 = vmul.f32 %v3378, %v1144
    %v3382 = vsel %vm1398, %v3380, 0.0
    %v3383 = vrot.slane %v3382, 4
    %v3384 = vadd.f32 %v3382, %v3383
    %v3385 = vrot.slane %v3384, 2
    %v3386 = vadd.f32 %v3384, %v3385
    %v3387 = vrot.slane %v3386, 1
    %v3388 = vadd.f32 %v3386, %v3387
    %v3389 = vsel %vm1398, %v3381, 0.0
    %v3390 = vrot.slane %v3389, 4
    %v3391 = vadd.f32 %v3389, %v3390
    %v3392 = vrot.slane %v3391, 2
    %v3393 = vadd.f32 %v3391, %v3392
    %v3394 = vrot.slane %v3393, 1
    %v3395 = vadd.f32 %v3393, %v3394
    %v3398 = vsel %vm260, %v3395, %v3388
    %3399 = vrot.lane.b32.xlu0 %v3398, 96
    %v3400 = vpop.permute.xlu0 %3399
    %3402 = vmatprep.subr.bf16.mxu0 0
    %3403 = vmatpush1.bf16.msra.mxu0 %v1750
    %3404 = vmatprep.subr.bf16.mxu0 0
    %3405 = vmatpush1.bf16.msra.mxu0 %v1751
    %3406 = vmatprep.subr.bf16.mxu0 0
    %3407 = vmatpush1.bf16.msra.mxu0 %v1752
    %3408 = vmatprep.subr.bf16.mxu0 0
    %3409 = vmatpush1.bf16.msra.mxu0 %v1753
    %3410 = vmatprep.subr.bf16.mxu0 0
    %3411 = vmatpush1.bf16.msra.mxu0 %v1754
    %3412 = vmatprep.subr.bf16.mxu0 0
    %3413 = vmatpush1.bf16.msra.mxu0 %v1755
    %3414 = vmatprep.subr.bf16.mxu0 0
    %3415 = vmatpush1.bf16.msra.mxu0 %v1756
    %3416 = vmatprep.subr.bf16.mxu0 0
    %3417 = vmatpush1.bf16.msra.mxu0 %v1757
    %3418 = vmatprep.subr.bf16.mxu0 0
    %3419 = vmatpush1.bf16.msra.mxu0 0
    %3420 = vmatprep.subr.bf16.mxu0 0
    %3421 = vmatpush1.bf16.msra.mxu0 0
    %3422 = vmatprep.subr.bf16.mxu0 0
    %3423 = vmatpush1.bf16.msra.mxu0 0
    %3424 = vmatprep.subr.bf16.mxu0 0
    %3425 = vmatpush1.bf16.msra.mxu0 0
    %3426 = vmatprep.subr.bf16.mxu0 0
    %3427 = vmatpush1.bf16.msra.mxu0 0
    %3428 = vmatprep.subr.bf16.mxu0 0
    %3429 = vmatpush1.bf16.msra.mxu0 0
    %3430 = vmatprep.subr.bf16.mxu0 0
    %3431 = vmatpush1.bf16.msra.mxu0 0
    %3432 = vmatprep.subr.bf16.mxu0 0
    %3433 = vmatpush1.bf16.msra.mxu0 0
    %3434 = vmatprep.mubr.bf16.mxu0 0
    %3435 = vmatmul.mubr.bf16.gmra.mrb[0].mxu0 %v3215
    %v3436 = vpop.f32.mrb[0].mxu0
    %v3437 = vadd.f32 %v3400, %v3436
    %v3438 = vpop.f32.mrb[0].mxu0
    %v3439 = vpop.f32.mrb[0].mxu0
    %v3440 = vpop.f32.mrb[0].mxu0
    %3441 = vdwg.mxu0
    %3443 = vrot.lane.b32.xlu0 %v3256, 96
    %v3444 = vpop.permute.xlu0 %3443
    %v3446 = vadd.f32 %v3437, %v3444
    %v3447 = vxor.u32 %v3446, 2147483648
    %v3448 = vmul.f32 %v3447, 1.442695
    %v3449 = vpow.pop %v3448
    %v3450 = vadd.f32 %v3449, 1.0
    %v3451 = vrcp.pop %v3450
    %v3452 = vmul.f32 1.0, %v3451
    %3453 = vrot.lane.b32.xlu0 %v3256, 32
    %v3454 = vpop.permute.xlu0 %3453
    %v3456 = vmul.f32 %v3452, %v3454
    %3458 = vrot.lane.b32.xlu0 %v3456, 64
    %v3459 = vpop.permute.xlu0 %3458
    %v3461 = vadd.f32 %v3437, %v3459
    %v3462 = vtanh.pop %v3461
    %v3463 = vsub.f32 1.0, %v3452
    %3465 = vrot.lane.b32.xlu0 %v3462, 96
    %v3466 = vpop.permute.xlu0 %3465
    %v3468 = vmul.f32 %v3463, %v3466
    %v3469 = vmul.f32 %v3452, %v3144
    %v3470 = vadd.f32 %v3468, %v3469
    %v3471 = vpack.c.bf16 %v3470, %v3470
    %3473 = vrot.lane.b32.xlu0 %v3471, 96
    %v3474 = vpop.permute.xlu0 %3473
    %v3476 = vsel %vm155, %v3474, 0
    %3478 = vmatprep.subr.bf16.mxu0 0
    %3479 = vmatpush1.bf16.msra.mxu0 %v1467
    %3480 = vmatprep.subr.bf16.mxu0 0
    %3481 = vmatpush1.bf16.msra.mxu0 %v1468
    %3482 = vmatprep.subr.bf16.mxu0 0
    %3483 = vmatpush1.bf16.msra.mxu0 0
    %3484 = vmatprep.subr.bf16.mxu0 0
    %3485 = vmatpush1.bf16.msra.mxu0 0
    %3486 = vmatprep.subr.bf16.mxu0 0
    %3487 = vmatpush1.bf16.msra.mxu0 0
    %3488 = vmatprep.subr.bf16.mxu0 0
    %3489 = vmatpush1.bf16.msra.mxu0 0
    %3490 = vmatprep.subr.bf16.mxu0 0
    %3491 = vmatpush1.bf16.msra.mxu0 0
    %3492 = vmatprep.subr.bf16.mxu0 0
    %3493 = vmatpush1.bf16.msra.mxu0 0
    %3494 = vmatprep.subr.bf16.mxu0 0
    %3495 = vmatpush1.bf16.msra.mxu0 0
    %3496 = vmatprep.subr.bf16.mxu0 0
    %3497 = vmatpush1.bf16.msra.mxu0 0
    %3498 = vmatprep.subr.bf16.mxu0 0
    %3499 = vmatpush1.bf16.msra.mxu0 0
    %3500 = vmatprep.subr.bf16.mxu0 0
    %3501 = vmatpush1.bf16.msra.mxu0 0
    %3502 = vmatprep.subr.bf16.mxu0 0
    %3503 = vmatpush1.bf16.msra.mxu0 0
    %3504 = vmatprep.subr.bf16.mxu0 0
    %3505 = vmatpush1.bf16.msra.mxu0 0
    %3506 = vmatprep.subr.bf16.mxu0 0
    %3507 = vmatpush1.bf16.msra.mxu0 0
    %3508 = vmatprep.subr.bf16.mxu0 0
    %3509 = vmatpush1.bf16.msra.mxu0 0
    %3510 = vmatprep.mubr.bf16.mxu0 0
    %3511 = vmatmul.mubr.bf16.gmra.mrb[0].mxu0 %v3476
    %v3512 = vpop.f32.mrb[0].mxu0
    %v3513 = vadd.f32 %v1165, %v3512
    %v3514 = vpop.f32.mrb[0].mxu0
    %v3515 = vpop.f32.mrb[0].mxu0
    %v3516 = vpop.f32.mrb[0].mxu0
    %3517 = vdwg.mxu0
    %v3518 = vsel %vm1191, %v3513, -1e+30
    %v3519 = vsel %vm87, %v3518, -inf
    %3520 = vmax.xlane.f32.xlu0 %v3519
    %v3521 = vpop.xlane.xlu0 %3520
    %vm3522 = vcmp.eq.f32.partialorder %v3518, %v3521
    %v3523 = vsel %vm3522, %v45, 128
    %v3524 = vsel %vm87, %v3523, 2147483647
    %v3525 = vand.u32 %v3524, 65535
    %v3526 = vshra.s32 %v3524, 16
    %v3527 = vcvt.s32.f32 %v3525
    %v3528 = vcvt.s32.f32 %v3526
    %3529 = vmin.xlane.f32.xlu0 %v3528
    %v3530 = vpop.xlane.xlu0 %3529
    %vm3531 = vcmp.eq.f32.partialorder %v3528, %v3530
    %v3532 = vsel %vm3531, %v3527, inf
    %3533 = vmin.xlane.f32.xlu0 %v3532
    %v3534 = vpop.xlane.xlu0 %3533
    %v3535 = vcvt.f32.s32 %v3534
    %v3536 = vcvt.f32.s32 %v3530
    %v3537 = vshll.u32 %v3536, 16
    %v3538 = vadd.s32 %v3537, %v3535
    %vm3539 = vcmp.eq.s32.totalorder %v45, %v3538
    %v3540 = vsel %vm3539, 1.0, 0.0
    %v3541 = vpack.c.bf16 %v3540, %v3540
    %3542 = vmatprep.subr.bf16.mxu0 0
    %3543 = vmatpush1.bf16.msra.mxu0 %v1221
    %3544 = vmatprep.subr.bf16.mxu0 0
    %3545 = vmatpush1.bf16.msra.mxu0 %v1222
    %3546 = vmatprep.subr.bf16.mxu0 0
    %3547 = vmatpush1.bf16.msra.mxu0 0
    %3548 = vmatprep.subr.bf16.mxu0 0
    %3549 = vmatpush1.bf16.msra.mxu0 0
    %3550 = vmatprep.subr.bf16.mxu0 0
    %3551 = vmatpush1.bf16.msra.mxu0 0
    %3552 = vmatprep.subr.bf16.mxu0 0
    %3553 = vmatpush1.bf16.msra.mxu0 0
    %3554 = vmatprep.subr.bf16.mxu0 0
    %3555 = vmatpush1.bf16.msra.mxu0 0
    %3556 = vmatprep.subr.bf16.mxu0 0
    %3557 = vmatpush1.bf16.msra.mxu0 0
    %3558 = vmatprep.subr.bf16.mxu0 0
    %3559 = vmatpush1.bf16.msra.mxu0 0
    %3560 = vmatprep.subr.bf16.mxu0 0
    %3561 = vmatpush1.bf16.msra.mxu0 0
    %3562 = vmatprep.subr.bf16.mxu0 0
    %3563 = vmatpush1.bf16.msra.mxu0 0
    %3564 = vmatprep.subr.bf16.mxu0 0
    %3565 = vmatpush1.bf16.msra.mxu0 0
    %3566 = vmatprep.subr.bf16.mxu0 0
    %3567 = vmatpush1.bf16.msra.mxu0 0
    %3568 = vmatprep.subr.bf16.mxu0 0
    %3569 = vmatpush1.bf16.msra.mxu0 0
    %3570 = vmatprep.subr.bf16.mxu0 0
    %3571 = vmatpush1.bf16.msra.mxu0 0
    %3572 = vmatprep.subr.bf16.mxu0 0
    %3573 = vmatpush1.bf16.msra.mxu0 0
    %3574 = vmatprep.mubr.bf16.mxu0 0
    %3575 = vmatmul.mubr.bf16.gmra.mrb[0].mxu0 %v3476
    %v3576 = vpop.f32.mrb[0].mxu0
    %v3577 = vadd.f32 0.0, %v3576
    %v3578 = vpop.f32.mrb[0].mxu0
    %v3579 = vpop.f32.mrb[0].mxu0
    %v3580 = vpop.f32.mrb[0].mxu0
    %3581 = vdwg.mxu0
    %v3582 = vadd.f32 %v3577, %v1269
    %v3585 = vunpack.c.l.s4 1966171168
    %v3586 = vunpack.c.0.s8 %v3585
    %v3587 = vlaneseq
    %v3588 = vshrl.u32 %v3587, 7
    %v3589 = vsub.s32 %v3586, %v3588
    %v3590 = vrot.slane %v3577, %v3589
    %v3591 = vcombine.high %v3590, %v3590
    %v3593 = vunpack.c.l.s4 1966171168
    %v3594 = vunpack.c.0.s8 %v3593
    %v3595 = vlaneseq
    %v3596 = vshrl.u32 %v3595, 7
    %v3597 = vsub.s32 %v3594, %v3596
    %v3598 = vrot.slane %v3590, %v3597
    %v3600 = vunpack.c.l.s4 1966171168
    %v3601 = vunpack.c.0.s8 %v3600
    %v3602 = vlaneseq
    %v3603 = vshrl.u32 %v3602, 7
    %v3604 = vsub.s32 %v3601, %v3603
    %v3605 = vrot.slane %v3591, %v3604
    %v3606 = vlaneseq
    %v3607 = vshrl.u32 %v3606, 7
    %v3608 = vsub.s32 0, %v3607
    %v3609 = vrot.slane %v3598, %v3608
    %v3610 = vlaneseq
    %v3611 = vshrl.u32 %v3610, 7
    %v3612 = vsub.s32 0, %v3611
    %v3613 = vrot.slane %v3605, %v3612
    %v3616 = vadd.f32 %v3609, %v1141
    %v3617 = vadd.f32 %v3613, %v1144
    %v3618 = vtanh.pop %v3616
    %v3619 = vtanh.pop %v3617
    %v3620 = vmul.f32 %v3618, %v1152
    %v3621 = vmul.f32 %v3619, %v1152
    %v3622 = vsel %vm155, %v3620, 0.0
    %3623 = vadd.xlane.f32.xlu0 %v3622
    %v3624 = vpop.xlane.xlu0 %3623
    %v3625 = vsel %vm155, %v3621, 0.0
    %3626 = vadd.xlane.f32.xlu0 %v3625
    %v3627 = vpop.xlane.xlu0 %3626
    %v3630 = vlaneseq
    %v3631 = vshrl.u32 %v3630, 7
    %v3632 = vsub.s32 %v45, %v3631
    %v3633 = vrot.slane %v3624, %v3632
    %v3634 = vlaneseq
    %v3635 = vshrl.u32 %v3634, 7
    %v3636 = vsub.s32 %v45, %v3635
    %v3637 = vrot.slane %v3627, %v3636
    %v3638 = vsel %vm260, %v3637, %v3633
    %v3640 = vsel %vm1329, %v3638, -inf
    %3641 = vmax.xlane.f32.xlu0 %v3640
    %v3642 = vpop.xlane.xlu0 %3641
    %v3644 = vlaneseq
    %v3645 = vshrl.u32 %v3644, 7
    %v3646 = vsub.s32 0, %v3645
    %v3647 = vrot.slane %v3642, %v3646
    %v3648 = vlaneseq
    %v3649 = vshrl.u32 %v3648, 7
    %v3650 = vsub.s32 1, %v3649
    %v3651 = vrot.slane %v3642, %v3650
    %v3654 = vsub.f32 %v3624, %v3647
    %v3655 = vsub.f32 %v3627, %v3651
    %v3656 = vmul.f32 %v3654, 1.442695
    %v3657 = vpow.pop %v3656
    %v3658 = vmul.f32 %v3655, 1.442695
    %v3659 = vpow.pop %v3658
    %3662 = vset.pattern.permute.xlu0 0
    %3663 = vperm.xlu0 %3662, %v3657
    %v3664 = vpop.permute.xlu0 %3663
    %3665 = vset.pattern.permute.xlu0 0
    %3666 = vperm.xlu0 %3665, %v3659
    %v3667 = vpop.permute.xlu0 %3666
    %v3668 = vlaneseq
    %v3669 = vshrl.u32 %v3668, 7
    %v3670 = vsub.s32 %v45, %v3669
    %v3671 = vrot.slane %v3664, %v3670
    %v3672 = vlaneseq
    %v3673 = vshrl.u32 %v3672, 7
    %v3674 = vsub.s32 %v45, %v3673
    %v3675 = vrot.slane %v3667, %v3674
    %v3676 = vsel %vm260, %v3675, %v3671
    %v3678 = vsel %vm1329, %v3676, 0.0
    %3679 = vadd.xlane.f32.xlu0 %v3678
    %v3680 = vpop.xlane.xlu0 %3679
    %v3682 = vlaneseq
    %v3683 = vshrl.u32 %v3682, 7
    %v3684 = vsub.s32 0, %v3683
    %v3685 = vrot.slane %v3680, %v3684
    %v3686 = vlaneseq
    %v3687 = vshrl.u32 %v3686, 7
    %v3688 = vsub.s32 1, %v3687
    %v3689 = vrot.slane %v3680, %v3688
    %v3692 = vrcp.pop %v3685
    %v3693 = vmul.f32 %v3657, %v3692
    %v3694 = vrcp.pop %v3689
    %v3695 = vmul.f32 %v3659, %v3694
    %3697 = vset.pattern.permute.xlu0 0
    %3698 = vperm.xlu0 %3697, %v3693
    %v3699 = vpop.permute.xlu0 %3698
    %3702 = vset.pattern.permute.xlu0 0
    %3703 = vperm.xlu0 %3702, %v3695
    %v3704 = vpop.permute.xlu0 %3703
    %v3706 = vmul.f32 %v3699, %v1141
    %v3707 = vmul.f32 %v3704, %v1144
    %v3708 = vsel %vm1398, %v3706, 0.0
    %v3709 = vrot.slane %v3708, 4
    %v3710 = vadd.f32 %v3708, %v3709
    %v3711 = vrot.slane %v3710, 2
    %v3712 = vadd.f32 %v3710, %v3711
    %v3713 = vrot.slane %v3712, 1
    %v3714 = vadd.f32 %v3712, %v3713
    %v3715 = vsel %vm1398, %v3707, 0.0
    %v3716 = vrot.slane %v3715, 4
    %v3717 = vadd.f32 %v3715, %v3716
    %v3718 = vrot.slane %v3717, 2
    %v3719 = vadd.f32 %v3717, %v3718
    %v3720 = vrot.slane %v3719, 1
    %v3721 = vadd.f32 %v3719, %v3720
    %v3724 = vsel %vm260, %v3721, %v3714
    %3725 = vrot.lane.b32.xlu0 %v3724, 96
    %v3726 = vpop.permute.xlu0 %3725
    %3728 = vmatprep.subr.bf16.mxu0 0
    %3729 = vmatpush1.bf16.msra.mxu0 %v1750
    %3730 = vmatprep.subr.bf16.mxu0 0
    %3731 = vmatpush1.bf16.msra.mxu0 %v1751
    %3732 = vmatprep.subr.bf16.mxu0 0
    %3733 = vmatpush1.bf16.msra.mxu0 %v1752
    %3734 = vmatprep.subr.bf16.mxu0 0
    %3735 = vmatpush1.bf16.msra.mxu0 %v1753
    %3736 = vmatprep.subr.bf16.mxu0 0
    %3737 = vmatpush1.bf16.msra.mxu0 %v1754
    %3738 = vmatprep.subr.bf16.mxu0 0
    %3739 = vmatpush1.bf16.msra.mxu0 %v1755
    %3740 = vmatprep.subr.bf16.mxu0 0
    %3741 = vmatpush1.bf16.msra.mxu0 %v1756
    %3742 = vmatprep.subr.bf16.mxu0 0
    %3743 = vmatpush1.bf16.msra.mxu0 %v1757
    %3744 = vmatprep.subr.bf16.mxu0 0
    %3745 = vmatpush1.bf16.msra.mxu0 0
    %3746 = vmatprep.subr.bf16.mxu0 0
    %3747 = vmatpush1.bf16.msra.mxu0 0
    %3748 = vmatprep.subr.bf16.mxu0 0
    %3749 = vmatpush1.bf16.msra.mxu0 0
    %3750 = vmatprep.subr.bf16.mxu0 0
    %3751 = vmatpush1.bf16.msra.mxu0 0
    %3752 = vmatprep.subr.bf16.mxu0 0
    %3753 = vmatpush1.bf16.msra.mxu0 0
    %3754 = vmatprep.subr.bf16.mxu0 0
    %3755 = vmatpush1.bf16.msra.mxu0 0
    %3756 = vmatprep.subr.bf16.mxu0 0
    %3757 = vmatpush1.bf16.msra.mxu0 0
    %3758 = vmatprep.subr.bf16.mxu0 0
    %3759 = vmatpush1.bf16.msra.mxu0 0
    %3760 = vmatprep.mubr.bf16.mxu0 0
    %3761 = vmatmul.mubr.bf16.gmra.mrb[0].mxu0 %v3541
    %v3762 = vpop.f32.mrb[0].mxu0
    %v3763 = vadd.f32 %v3726, %v3762
    %v3764 = vpop.f32.mrb[0].mxu0
    %v3765 = vpop.f32.mrb[0].mxu0
    %v3766 = vpop.f32.mrb[0].mxu0
    %3767 = vdwg.mxu0
    %3769 = vrot.lane.b32.xlu0 %v3582, 96
    %v3770 = vpop.permute.xlu0 %3769
    %v3772 = vadd.f32 %v3763, %v3770
    %v3773 = vxor.u32 %v3772, 2147483648
    %v3774 = vmul.f32 %v3773, 1.442695
    %v3775 = vpow.pop %v3774
    %v3776 = vadd.f32 %v3775, 1.0
    %v3777 = vrcp.pop %v3776
    %v3778 = vmul.f32 1.0, %v3777
    %3779 = vrot.lane.b32.xlu0 %v3582, 32
    %v3780 = vpop.permute.xlu0 %3779
    %v3782 = vmul.f32 %v3778, %v3780
    %3784 = vrot.lane.b32.xlu0 %v3782, 64
    %v3785 = vpop.permute.xlu0 %3784
    %v3787 = vadd.f32 %v3763, %v3785
    %v3788 = vtanh.pop %v3787
    %v3789 = vsub.f32 1.0, %v3778
    %3791 = vrot.lane.b32.xlu0 %v3788, 96
    %v3792 = vpop.permute.xlu0 %3791
    %v3794 = vmul.f32 %v3789, %v3792
    %v3795 = vmul.f32 %v3778, %v3470
    %v3796 = vadd.f32 %v3794, %v3795
    %v3797 = vpack.c.bf16 %v3796, %v3796
    %3799 = vrot.lane.b32.xlu0 %v3797, 96
    %v3800 = vpop.permute.xlu0 %3799
    %v3802 = vsel %vm155, %v3800, 0
    %3804 = vmatprep.subr.bf16.mxu0 0
    %3805 = vmatpush1.bf16.msra.mxu0 %v1467
    %3806 = vmatprep.subr.bf16.mxu0 0
    %3807 = vmatpush1.bf16.msra.mxu0 %v1468
    %3808 = vmatprep.subr.bf16.mxu0 0
    %3809 = vmatpush1.bf16.msra.mxu0 0
    %3810 = vmatprep.subr.bf16.mxu0 0
    %3811 = vmatpush1.bf16.msra.mxu0 0
    %3812 = vmatprep.subr.bf16.mxu0 0
    %3813 = vmatpush1.bf16.msra.mxu0 0
    %3814 = vmatprep.subr.bf16.mxu0 0
    %3815 = vmatpush1.bf16.msra.mxu0 0
    %3816 = vmatprep.subr.bf16.mxu0 0
    %3817 = vmatpush1.bf16.msra.mxu0 0
    %3818 = vmatprep.subr.bf16.mxu0 0
    %3819 = vmatpush1.bf16.msra.mxu0 0
    %3820 = vmatprep.subr.bf16.mxu0 0
    %3821 = vmatpush1.bf16.msra.mxu0 0
    %3822 = vmatprep.subr.bf16.mxu0 0
    %3823 = vmatpush1.bf16.msra.mxu0 0
    %3824 = vmatprep.subr.bf16.mxu0 0
    %3825 = vmatpush1.bf16.msra.mxu0 0
    %3826 = vmatprep.subr.bf16.mxu0 0
    %3827 = vmatpush1.bf16.msra.mxu0 0
    %3828 = vmatprep.subr.bf16.mxu0 0
    %3829 = vmatpush1.bf16.msra.mxu0 0
    %3830 = vmatprep.subr.bf16.mxu0 0
    %3831 = vmatpush1.bf16.msra.mxu0 0
    %3832 = vmatprep.subr.bf16.mxu0 0
    %3833 = vmatpush1.bf16.msra.mxu0 0
    %3834 = vmatprep.subr.bf16.mxu0 0
    %3835 = vmatpush1.bf16.msra.mxu0 0
    %3836 = vmatprep.mubr.bf16.mxu0 0
    %3837 = vmatmul.mubr.bf16.gmra.mrb[0].mxu0 %v3802
    %v3838 = vpop.f32.mrb[0].mxu0
    %v3839 = vadd.f32 %v1165, %v3838
    %v3840 = vpop.f32.mrb[0].mxu0
    %v3841 = vpop.f32.mrb[0].mxu0
    %v3842 = vpop.f32.mrb[0].mxu0
    %3843 = vdwg.mxu0
    %v3846 = vunpack.c.l.s4 1966171168
    %v3847 = vunpack.c.0.s8 %v3846
    %v3848 = vlaneseq
    %v3849 = vshrl.u32 %v3848, 7
    %v3850 = vsub.s32 %v3847, %v3849
    %v3851 = vrot.slane %v1509, %v3850
    %v3852 = vcombine.high %v3851, %v3851
    %v3854 = vunpack.c.l.s4 1966171168
    %v3855 = vunpack.c.0.s8 %v3854
    %v3856 = vlaneseq
    %v3857 = vshrl.u32 %v3856, 7
    %v3858 = vsub.s32 %v3855, %v3857
    %v3859 = vrot.slane %v3851, %v3858
    %v3861 = vunpack.c.l.s4 1966171168
    %v3862 = vunpack.c.0.s8 %v3861
    %v3863 = vlaneseq
    %v3864 = vshrl.u32 %v3863, 7
    %v3865 = vsub.s32 %v3862, %v3864
    %v3866 = vrot.slane %v3852, %v3865
    %v3871 = vunpack.c.l.s4 1966171168
    %v3872 = vunpack.c.0.s8 %v3871
    %v3873 = vlaneseq
    %v3874 = vshrl.u32 %v3873, 7
    %v3875 = vsub.s32 %v3872, %v3874
    %v3876 = vrot.slane %v1883, %v3875
    %v3877 = vcombine.high %v3876, %v3876
    %v3879 = vunpack.c.l.s4 1966171168
    %v3880 = vunpack.c.0.s8 %v3879
    %v3881 = vlaneseq
    %v3882 = vshrl.u32 %v3881, 7
    %v3883 = vsub.s32 %v3880, %v3882
    %v3884 = vrot.slane %v3876, %v3883
    %v3886 = vunpack.c.l.s4 1966171168
    %v3887 = vunpack.c.0.s8 %v3886
    %v3888 = vlaneseq
    %v3889 = vshrl.u32 %v3888, 7
    %v3890 = vsub.s32 %v3887, %v3889
    %v3891 = vrot.slane %v3877, %v3890
    %v3894 = vunpack.c.l.s4 1966171168
    %v3895 = vunpack.c.0.s8 %v3894
    %v3896 = vlaneseq
    %v3897 = vshrl.u32 %v3896, 7
    %v3898 = vsub.s32 %v3895, %v3897
    %v3899 = vrot.slane %v2209, %v3898
    %v3900 = vcombine.high %v3899, %v3899
    %v3902 = vunpack.c.l.s4 1966171168
    %v3903 = vunpack.c.0.s8 %v3902
    %v3904 = vlaneseq
    %v3905 = vshrl.u32 %v3904, 7
    %v3906 = vsub.s32 %v3903, %v3905
    %v3907 = vrot.slane %v3899, %v3906
    %v3909 = vunpack.c.l.s4 1966171168
    %v3910 = vunpack.c.0.s8 %v3909
    %v3911 = vlaneseq
    %v3912 = vshrl.u32 %v3911, 7
    %v3913 = vsub.s32 %v3910, %v3912
    %v3914 = vrot.slane %v3900, %v3913
    %v3917 = vunpack.c.l.s4 1966171168
    %v3918 = vunpack.c.0.s8 %v3917
    %v3919 = vlaneseq
    %v3920 = vshrl.u32 %v3919, 7
    %v3921 = vsub.s32 %v3918, %v3920
    %v3922 = vrot.slane %v2535, %v3921
    %v3923 = vcombine.high %v3922, %v3922
    %v3925 = vunpack.c.l.s4 1966171168
    %v3926 = vunpack.c.0.s8 %v3925
    %v3927 = vlaneseq
    %v3928 = vshrl.u32 %v3927, 7
    %v3929 = vsub.s32 %v3926, %v3928
    %v3930 = vrot.slane %v3922, %v3929
    %v3932 = vunpack.c.l.s4 1966171168
    %v3933 = vunpack.c.0.s8 %v3932
    %v3934 = vlaneseq
    %v3935 = vshrl.u32 %v3934, 7
    %v3936 = vsub.s32 %v3933, %v3935
    %v3937 = vrot.slane %v3923, %v3936
    %v3940 = vunpack.c.l.s4 1966171168
    %v3941 = vunpack.c.0.s8 %v3940
    %v3942 = vlaneseq
    %v3943 = vshrl.u32 %v3942, 7
    %v3944 = vsub.s32 %v3941, %v3943
    %v3945 = vrot.slane %v2861, %v3944
    %v3946 = vcombine.high %v3945, %v3945
    %v3948 = vunpack.c.l.s4 1966171168
    %v3949 = vunpack.c.0.s8 %v3948
    %v3950 = vlaneseq
    %v3951 = vshrl.u32 %v3950, 7
    %v3952 = vsub.s32 %v3949, %v3951
    %v3953 = vrot.slane %v3945, %v3952
    %v3955 = vunpack.c.l.s4 1966171168
    %v3956 = vunpack.c.0.s8 %v3955
    %v3957 = vlaneseq
    %v3958 = vshrl.u32 %v3957, 7
    %v3959 = vsub.s32 %v3956, %v3958
    %v3960 = vrot.slane %v3946, %v3959
    %v3963 = vunpack.c.l.s4 1966171168
    %v3964 = vunpack.c.0.s8 %v3963
    %v3965 = vlaneseq
    %v3966 = vshrl.u32 %v3965, 7
    %v3967 = vsub.s32 %v3964, %v3966
    %v3968 = vrot.slane %v3187, %v3967
    %v3969 = vcombine.high %v3968, %v3968
    %v3971 = vunpack.c.l.s4 1966171168
    %v3972 = vunpack.c.0.s8 %v3971
    %v3973 = vlaneseq
    %v3974 = vshrl.u32 %v3973, 7
    %v3975 = vsub.s32 %v3972, %v3974
    %v3976 = vrot.slane %v3968, %v3975
    %v3978 = vunpack.c.l.s4 1966171168
    %v3979 = vunpack.c.0.s8 %v3978
    %v3980 = vlaneseq
    %v3981 = vshrl.u32 %v3980, 7
    %v3982 = vsub.s32 %v3979, %v3981
    %v3983 = vrot.slane %v3969, %v3982
    %v3986 = vunpack.c.l.s4 1966171168
    %v3987 = vunpack.c.0.s8 %v3986
    %v3988 = vlaneseq
    %v3989 = vshrl.u32 %v3988, 7
    %v3990 = vsub.s32 %v3987, %v3989
    %v3991 = vrot.slane %v3513, %v3990
    %v3992 = vcombine.high %v3991, %v3991
    %v3994 = vunpack.c.l.s4 1966171168
    %v3995 = vunpack.c.0.s8 %v3994
    %v3996 = vlaneseq
    %v3997 = vshrl.u32 %v3996, 7
    %v3998 = vsub.s32 %v3995, %v3997
    %v3999 = vrot.slane %v3991, %v3998
    %v4001 = vunpack.c.l.s4 1966171168
    %v4002 = vunpack.c.0.s8 %v4001
    %v4003 = vlaneseq
    %v4004 = vshrl.u32 %v4003, 7
    %v4005 = vsub.s32 %v4002, %v4004
    %v4006 = vrot.slane %v3992, %v4005
    %v4009 = vunpack.c.l.s4 1966171168
    %v4010 = vunpack.c.0.s8 %v4009
    %v4011 = vlaneseq
    %v4012 = vshrl.u32 %v4011, 7
    %v4013 = vsub.s32 %v4010, %v4012
    %v4014 = vrot.slane %v3839, %v4013
    %v4015 = vcombine.high %v4014, %v4014
    %v4017 = vunpack.c.l.s4 1966171168
    %v4018 = vunpack.c.0.s8 %v4017
    %v4019 = vlaneseq
    %v4020 = vshrl.u32 %v4019, 7
    %v4021 = vsub.s32 %v4018, %v4020
    %v4022 = vrot.slane %v4014, %v4021
    %v4024 = vunpack.c.l.s4 1966171168
    %v4025 = vunpack.c.0.s8 %v4024
    %v4026 = vlaneseq
    %v4027 = vshrl.u32 %v4026, 7
    %v4028 = vsub.s32 %v4025, %v4027
    %v4029 = vrot.slane %v4015, %v4028
    %v4030 = vlaneseq
    %v4031 = vshrl.u32 %v4030, 7
    %v4032 = vsub.s32 0, %v4031
    %v4033 = vrot.slane %v3884, %v4032
    %v4034 = vlaneseq
    %v4035 = vshrl.u32 %v4034, 7
    %v4036 = vsub.s32 0, %v4035
    %v4037 = vrot.slane %v3891, %v4036
    %v4040 = vlaneseq
    %v4041 = vshrl.u32 %v4040, 7
    %v4042 = vsub.s32 0, %v4041
    %v4043 = vrot.slane %v3907, %v4042
    %v4044 = vlaneseq
    %v4045 = vshrl.u32 %v4044, 7
    %v4046 = vsub.s32 0, %v4045
    %v4047 = vrot.slane %v3914, %v4046
    %v4050 = vlaneseq
    %v4051 = vshrl.u32 %v4050, 7
    %v4052 = vsub.s32 0, %v4051
    %v4053 = vrot.slane %v3930, %v4052
    %v4054 = vlaneseq
    %v4055 = vshrl.u32 %v4054, 7
    %v4056 = vsub.s32 0, %v4055
    %v4057 = vrot.slane %v3937, %v4056
    %v4060 = vlaneseq
    %v4061 = vshrl.u32 %v4060, 7
    %v4062 = vsub.s32 0, %v4061
    %v4063 = vrot.slane %v3953, %v4062
    %v4064 = vlaneseq
    %v4065 = vshrl.u32 %v4064, 7
    %v4066 = vsub.s32 0, %v4065
    %v4067 = vrot.slane %v3960, %v4066
    %v4070 = vlaneseq
    %v4071 = vshrl.u32 %v4070, 7
    %v4072 = vsub.s32 0, %v4071
    %v4073 = vrot.slane %v3976, %v4072
    %v4074 = vlaneseq
    %v4075 = vshrl.u32 %v4074, 7
    %v4076 = vsub.s32 0, %v4075
    %v4077 = vrot.slane %v3983, %v4076
    %v4080 = vlaneseq
    %v4081 = vshrl.u32 %v4080, 7
    %v4082 = vsub.s32 0, %v4081
    %v4083 = vrot.slane %v3999, %v4082
    %v4084 = vlaneseq
    %v4085 = vshrl.u32 %v4084, 7
    %v4086 = vsub.s32 0, %v4085
    %v4087 = vrot.slane %v4006, %v4086
    %v4090 = vlaneseq
    %v4091 = vshrl.u32 %v4090, 7
    %v4092 = vsub.s32 0, %v4091
    %v4093 = vrot.slane %v4022, %v4092
    %v4094 = vlaneseq
    %v4095 = vshrl.u32 %v4094, 7
    %v4096 = vsub.s32 0, %v4095
    %v4097 = vrot.slane %v4029, %v4096
    %v4100 = vsel %vm1063, %v3859, %v4033
    %v4101 = vsel %vm1063, %v3866, %v4037
    %v4102 = vsel %vm87, %v4100, %v4043
    %v4103 = vsel %vm87, %v4101, %v4047
    %v4104 = vsel %vm1068, %v4102, %v4053
    %v4105 = vsel %vm1068, %v4103, %v4057
    %v4106 = vsel %vm1071, %v4104, %v4063
    %v4107 = vsel %vm1071, %v4105, %v4067
    %v4108 = vsel %vm1074, %v4106, %v4073
    %v4109 = vsel %vm1074, %v4107, %v4077
    %v4110 = vsel %vm1077, %v4108, %v4083
    %v4111 = vsel %vm1077, %v4109, %v4087
    %v4112 = vsel %vm1080, %v4110, %v4093
    %v4113 = vsel %vm1080, %v4111, %v4097
    %4114 = vst [vmem:[#allocation2] sm:$0xff] %v4112
    %4115 = vst [vmem:[#allocation2 + $0x8] sm:$0xff] %v4113
    %v4116 = vlaneseq
    %v4117 = vshrl.u32 %v4116, 7
    %v4118 = vsub.s32 %v45, %v4117
    %v4119 = vrot.slane %v1389, %v4118
    %v4120 = vlaneseq
    %v4121 = vshrl.u32 %v4120, 7
    %v4122 = vsub.s32 %v45, %v4121
    %v4123 = vrot.slane %v1394, %v4122
    %v4126 = vlaneseq
    %v4127 = vshrl.u32 %v4126, 7
    %v4128 = vsub.s32 %v45, %v4127
    %v4129 = vrot.slane %v1695, %v4128
    %v4130 = vlaneseq
    %v4131 = vshrl.u32 %v4130, 7
    %v4132 = vsub.s32 %v45, %v4131
    %v4133 = vrot.slane %v1700, %v4132
    %v4136 = vlaneseq
    %v4137 = vshrl.u32 %v4136, 7
    %v4138 = vsub.s32 %v45, %v4137
    %v4139 = vrot.slane %v2069, %v4138
    %v4140 = vlaneseq
    %v4141 = vshrl.u32 %v4140, 7
    %v4142 = vsub.s32 %v45, %v4141
    %v4143 = vrot.slane %v2074, %v4142
    %v4146 = vlaneseq
    %v4147 = vshrl.u32 %v4146, 7
    %v4148 = vsub.s32 %v45, %v4147
    %v4149 = vrot.slane %v2395, %v4148
    %v4150 = vlaneseq
    %v4151 = vshrl.u32 %v4150, 7
    %v4152 = vsub.s32 %v45, %v4151
    %v4153 = vrot.slane %v2400, %v4152
    %v4156 = vlaneseq
    %v4157 = vshrl.u32 %v4156, 7
    %v4158 = vsub.s32 %v45, %v4157
    %v4159 = vrot.slane %v2721, %v4158
    %v4160 = vlaneseq
    %v4161 = vshrl.u32 %v4160, 7
    %v4162 = vsub.s32 %v45, %v4161
    %v4163 = vrot.slane %v2726, %v4162
    %v4166 = vlaneseq
    %v4167 = vshrl.u32 %v4166, 7
    %v4168 = vsub.s32 %v45, %v4167
    %v4169 = vrot.slane %v3047, %v4168
    %v4170 = vlaneseq
    %v4171 = vshrl.u32 %v4170, 7
    %v4172 = vsub.s32 %v45, %v4171
    %v4173 = vrot.slane %v3052, %v4172
    %v4176 = vlaneseq
    %v4177 = vshrl.u32 %v4176, 7
    %v4178 = vsub.s32 %v45, %v4177
    %v4179 = vrot.slane %v3373, %v4178
    %v4180 = vlaneseq
    %v4181 = vshrl.u32 %v4180, 7
    %v4182 = vsub.s32 %v45, %v4181
    %v4183 = vrot.slane %v3378, %v4182
    %v4186 = vlaneseq
    %v4187 = vshrl.u32 %v4186, 7
    %v4188 = vsub.s32 %v45, %v4187
    %v4189 = vrot.slane %v3699, %v4188
    %v4190 = vlaneseq
    %v4191 = vshrl.u32 %v4190, 7
    %v4192 = vsub.s32 %v45, %v4191
    %v4193 = vrot.slane %v3704, %v4192
    %v4196 = vsel %vm1063, %v4119, %v4129
    %v4197 = vsel %vm1063, %v4123, %v4133
    %v4198 = vsel %vm87, %v4196, %v4139
    %v4199 = vsel %vm87, %v4197, %v4143
    %v4200 = vsel %vm1068, %v4198, %v4149
    %v4201 = vsel %vm1068, %v4199, %v4153
    %v4202 = vsel %vm1071, %v4200, %v4159
    %v4203 = vsel %vm1071, %v4201, %v4163
    %v4204 = vsel %vm1074, %v4202, %v4169
    %v4205 = vsel %vm1074, %v4203, %v4173
    %v4206 = vsel %vm1077, %v4204, %v4179
    %v4207 = vsel %vm1077, %v4205, %v4183
    %v4208 = vsel %vm1080, %v4206, %v4189
    %v4209 = vsel %vm1080, %v4207, %v4193
    %vm4210 = vcmask 64512
    %4211 = vst.msk [vmem:[#allocation4] sm:$0xff] %vm4210, %v4208
    %4212 = vst.msk [vmem:[#allocation4 + $0x8] sm:$0xff] %vm4210, %v4209
    // Predicated region
    $region46: #{attention_network_forward.1} parent=1 // pred_check
      _
    $region47: #{attention_network_forward.1} parent=1 // pred_check_branch
      %4214 = sbr.rel (0) target = $region49
    $region48: #{attention_network_forward.1} parent=1 // pred_region
      %s4216 = ssub.s32 256, 256
      %4217 = vsyncadd [#allocation3], %s4216
      %s4218 = sshll.u32 [#allocation2], 4
      %s4219 = int_to_ptr.vmem [resolvable:$true] %s4218
      %4224 = dma.vmem_to_hbm [thread:$0]  %s4219, 256, %s11, [#allocation3], 128, 128, 8
    $region49: #{attention_network_forward.1} parent=1 // pred_fallthru
      _
    // Predicated region
    $region50: #{attention_network_forward.1} parent=1 // pred_check
      _
    $region51: #{attention_network_forward.1} parent=1 // pred_check_branch
      %4226 = sbr.rel (0) target = $region53
    $region52: #{attention_network_forward.1} parent=1 // pred_region
      %s4228 = ssub.s32 256, 256
      %4229 = vsyncadd [#allocation5], %s4228
      %s4230 = sshll.u32 [#allocation4], 4
      %s4231 = int_to_ptr.vmem [resolvable:$true] %s4230
      %4236 = dma.vmem_to_hbm [thread:$0]  %s4231, 256, %s12, [#allocation5], 128, 128, 8
    $region53: #{attention_network_forward.1} parent=1 // pred_fallthru
      _
    // Predicated region
    $region54: #{attention_network_forward.1} parent=1 // pred_check
      _
    $region55: #{attention_network_forward.1} parent=1 // pred_check_branch
      %4238 = sbr.rel (0) target = $region57
    $region56: #{attention_network_forward.1} parent=1 // pred_region
      %4239 = dma.done [#allocation3], 256
    $region57: #{attention_network_forward.1} parent=1 // pred_fallthru
      _
    // Predicated region
    $region58: #{attention_network_forward.1} parent=1 // pred_check
      _
    $region59: #{attention_network_forward.1} parent=1 // pred_check_branch
      %4241 = sbr.rel (0) target = $region61
    $region60: #{attention_network_forward.1} parent=1 // pred_region
      %4242 = dma.done [#allocation5], 256
    $region61: #{attention_network_forward.1} parent=1 // pred_fallthru
      _
    %4243 = vsyncpa [#allocation3], 1
    %4244 = vsyncpa [#allocation5], 1

</llo_original>
